<compile_context>
chip_gen: v7x
topology: tpu7x:2x2x1
jax: 0.10.0
libtpu: 0.0.40
codegen_flags: <defaults>
</compile_context>

<pallas_src>
import jax
import jax.numpy as jnp
from jax.experimental import pallas as pl
from jax.experimental.pallas import tpu as pltpu


# ------------------------------------------------------------------ glue helpers
def _interp_matrix(in_size, out_size):
    """(in_size, out_size) bilinear weights, PyTorch align_corners=False semantics."""
    scale = in_size / out_size
    dst = jnp.arange(out_size, dtype=jnp.float32)
    src = (dst + 0.5) * scale - 0.5
    src = jnp.maximum(src, 0.0)
    i0 = jnp.minimum(jnp.floor(src), in_size - 1).astype(jnp.int32)
    i1 = jnp.minimum(i0 + 1, in_size - 1)
    frac = src - i0.astype(jnp.float32)
    rows = jnp.arange(in_size, dtype=jnp.int32)[:, None]          # (in, 1)
    m = ((rows == i0[None, :]).astype(jnp.float32) * (1.0 - frac)[None, :]
         + (rows == i1[None, :]).astype(jnp.float32) * frac[None, :])
    return m                                                       # (in, out)


def _pick_ct_tile(ct, h, w, target_bytes=2 << 20):
    """Largest divisor of C*T whose (tile, H, W) f32 block stays under ~2 MiB."""
    cap = max(1, target_bytes // (h * w * 4))
    tile = 1
    for d in range(1, ct + 1):
        if ct % d == 0 and d <= cap:
            tile = d
    return tile


# ------------------------------------------------------------------ kernel 1: separable downsample
def _downsample_kernel(x_ref, mw_ref, mht_ref, o_ref):
    # x_ref: (1, ct, H, W) f32   mw_ref: (W, nW)   mht_ref: (nH, H)   o_ref: (1, ct, nH, nW)
    _, ct, H, W = x_ref.shape
    nW = mw_ref.shape[1]
    nH = mht_ref.shape[0]
    xb = x_ref[0]                                                  # (ct, H, W)
    # Contract W on the MXU: plain 2-D matmul (free reshape when H % 8 == 0).
    t1 = jnp.dot(xb.reshape(ct * H, W), mw_ref[...],
                 preferred_element_type=jnp.float32)               # (ct*H, nW)
    t1 = t1.reshape(ct, H, nW)
    # Contract H: batched matmul with ct as the batch dim ('bqk,bkd->bqd' pattern).
    mht = jnp.broadcast_to(mht_ref[...][None, :, :], (ct, nH, H))  # (ct, nH, H)
    y = jnp.einsum("bnh,bhw->bnw", mht, t1,
                   preferred_element_type=jnp.float32)             # (ct, nH, nW)
    o_ref[0] = y.astype(o_ref.dtype)


def _downsample(x4, mw, mht, ct_tile):
    B, CT, H, W = x4.shape
    nW = mw.shape[1]
    nH = mht.shape[0]
    flops = 2 * B * CT * H * W * nW + 2 * B * CT * H * nW * nH
    bytes_accessed = 4 * (B * CT * H * W + B * CT * nH * nW + W * nW + nH * H)
    return pl.pallas_call(
        _downsample_kernel,
        out_shape=jax.ShapeDtypeStruct((B, CT, nH, nW), jnp.float32),
        grid_spec=pltpu.PrefetchScalarGridSpec(
            num_scalar_prefetch=0,
            grid=(B, CT // ct_tile),
            in_specs=[
                pl.BlockSpec((1, ct_tile, H, W), lambda b, c: (b, c, 0, 0)),
                pl.BlockSpec((W, nW), lambda b, c: (0, 0)),
                pl.BlockSpec((nH, H), lambda b, c: (0, 0)),
            ],
            out_specs=pl.BlockSpec((1, ct_tile, nH, nW), lambda b, c: (b, c, 0, 0)),
        ),
        compiler_params=pltpu.CompilerParams(
            dimension_semantics=("parallel", "parallel")),
        cost_estimate=pl.CostEstimate(
            flops=int(flops), transcendentals=0, bytes_accessed=int(bytes_accessed)),
    )(x4, mw, mht)


# ------------------------------------------------------------------ kernel 2: histogram entropy
def _entropy_kernel(emd_ref, o_ref, *, nbins=30, max_ent=1.0):
    # emd_ref: (1, nV, L) — all range(0, T, 4) slices of one batch, each ravelled.
    # o_ref:   (1, nV, 1) — per-slice entropy (mean + /10 done in the wrapper).
    x = emd_ref[0]                                         # (nV, L)
    nv, L = x.shape

    dmin = jnp.min(x, axis=-1, keepdims=True)              # (nV, 1)
    dmax = jnp.max(x, axis=-1, keepdims=True)
    degenerate = dmax == dmin                              # np.histogram range fallback
    lo = jnp.where(degenerate, dmin - 0.5, dmin)
    hi = jnp.where(degenerate, dmax + 0.5, dmax)
    scale = nbins / (hi - lo)                              # exact: feeds bin placement

    idx = jnp.floor((x - lo) * scale).astype(jnp.int32)    # (nV, L)
    idx = jnp.clip(idx, 0, nbins - 1)                      # numpy: last bin is closed
    bins = jax.lax.broadcasted_iota(jnp.int32, (nv, nbins, L), 1)
    onehot = (idx[:, None, :] == bins).astype(jnp.float32)  # (nV, nbins, L)
    counts = jnp.sum(onehot, axis=-1)                       # (nV, nbins)

    cmax = jnp.max(counts, axis=-1, keepdims=True)          # (nV, 1)
    cmin = jnp.min(counts, axis=-1, keepdims=True)
    p = counts * pl.reciprocal(cmax + jnp.float32(1e-4), approx=True)   # EUP slot
    nz = counts > 0.0
    plogp = jnp.where(nz, p * jnp.log2(jnp.where(nz, p, 1.0)), 0.0)
    ent = -jnp.sum(plogp, axis=-1, keepdims=True)           # (nV, 1)
    # any empty bin -> 0*log2(0)=nan in numpy -> nan_to_num(nan=maxENT)
    ent = jnp.where(cmin == 0.0, jnp.float32(max_ent), ent)
    o_ref[0] = ent


def _entropy_call(emd_sel):
    # emd_sel: (B, nV, L).  TODO(synk): L is left unpadded (lane-sparse at toy sizes);
    # at realistic C*nH*nW it is already a multiple of 128 and masking padded values
    # out of min/max/histogram is not worth the complexity.
    B, nV, L = emd_sel.shape
    nbins = 30
    flops = B * nV * (6 * L + 3 * nbins * L + 8 * nbins)
    transcendentals = B * nV * (nbins + 1)
    bytes_accessed = 4 * (B * nV * L + B * nV)
    return pl.pallas_call(
        _entropy_kernel,
        out_shape=jax.ShapeDtypeStruct((B, nV, 1), jnp.float32),
        grid_spec=pltpu.PrefetchScalarGridSpec(
            num_scalar_prefetch=0,
            grid=(B,),
            in_specs=[pl.BlockSpec((1, nV, L), lambda b: (b, 0, 0))],
            out_specs=pl.BlockSpec((1, nV, 1), lambda b: (b, 0, 0)),
        ),
        compiler_params=pltpu.CompilerParams(dimension_semantics=("parallel",)),
        cost_estimate=pl.CostEstimate(
            flops=int(flops), transcendentals=int(transcendentals),
            bytes_accessed=int(bytes_accessed)),
    )(emd_sel)


# ------------------------------------------------------------------ forward
@jax.jit
def ent_forward(x):
    """x: (B, C, T, H, W) float32 -> scalar float32 (ENT.forward value)."""
    B, C, T, H, W = x.shape
    nH, nW = H // 8, W // 8

    # Tiny separable interpolation factors (parameter/glue setup; always VMEM resident).
    mw = _interp_matrix(W, nW)                  # (W, nW)
    mht = _interp_matrix(H, nH).T               # (nH, H)

    # Kernel 1: separable bilinear downsample of every (H, W) plane.
    x4 = x.reshape(B, C * T, H, W)
    ct_tile = _pick_ct_tile(C * T, H, W)
    d = _downsample(x4, mw, mht, ct_tile)       # (B, C*T, nH, nW)

    # torch: .view(B*T, C, H, W) ... .view(B, T, C, nH, nW) are raw row-major reshapes
    # of contiguous memory, so a raw reshape of the (b, c, t, nh, nw)-ordered result
    # reproduces exactly the slices entropy() ravels.
    L = C * nH * nW
    emd = d.reshape(B, T, L)
    emd_sel = emd[:, ::4, :]                    # the t in range(0, T, 4) slices
    nV = emd_sel.shape[1]

    # Kernel 2: vectorized 30-bin histogram entropy, one grid step per batch.
    ents = _entropy_call(emd_sel)               # (B, nV, 1)
    return jnp.sum(ents) / jnp.float32(B * nV * 10.0)


if __name__ == "__main__":
    key = jax.random.PRNGKey(0)
    B, C, T, H, W = 2, 4, 8, 16, 16
    x = jax.random.normal(key, (B, C, T, H, W), dtype=jnp.float32)

    out = ent_forward(x)
    jax.block_until_ready(out)
    assert out.shape == () and out.dtype == jnp.float32
    print("KERNEL_OK")
</pallas_src>

<mosaic_0001>
module attributes {stable_mosaic.version = 11 : i64} {
  func.func @_downsample_kernel(%arg0: i32, %arg1: i32, %arg2: memref<1x32x16x16xf32, #tpu.memory_space<vmem>>, %arg3: memref<16x2xf32, #tpu.memory_space<vmem>>, %arg4: memref<2x16xf32, #tpu.memory_space<vmem>>, %arg5: memref<1x32x2x2xf32, #tpu.memory_space<vmem>>) attributes {dimension_semantics = [#tpu.dimension_semantics<parallel>, #tpu.dimension_semantics<parallel>], iteration_bounds = array<i64: 2, 1>, scalar_prefetch = 0 : i64, scratch_operands = 0 : i64, tpu.core_type = #tpu.core_type<tc>, window_params = [{transform_indices = @transform_0, window_bounds = array<i64: 1, 32, 16, 16>}, {pipeline_mode = #tpu.pipeline_mode<synchronous>, transform_indices = @transform_1, window_bounds = array<i64: 16, 2>}, {pipeline_mode = #tpu.pipeline_mode<synchronous>, transform_indices = @transform_2, window_bounds = array<i64: 2, 16>}, {transform_indices = @transform_3, window_bounds = array<i64: 1, 32, 2, 2>}]} {
    %c0 = arith.constant 0 : index
    %c0_0 = arith.constant 0 : index
    %c0_1 = arith.constant 0 : index
    %c0_2 = arith.constant 0 : index
    %0 = vector.load %arg2[%c0, %c0_0, %c0_1, %c0_2] : memref<1x32x16x16xf32, #tpu.memory_space<vmem>>, vector<1x32x16x16xf32>
    %1 = vector.shape_cast %0 : vector<1x32x16x16xf32> to vector<32x16x16xf32>
    %2 = vector.shape_cast %1 : vector<32x16x16xf32> to vector<512x16xf32>
    %c0_3 = arith.constant 0 : index
    %c0_4 = arith.constant 0 : index
    %3 = vector.load %arg3[%c0_3, %c0_4] : memref<16x2xf32, #tpu.memory_space<vmem>>, vector<16x2xf32>
    %cst = arith.constant dense<0.000000e+00> : vector<512x2xf32>
    %4 = tpu.matmul %2, %3, %cst {dimension_numbers = #tpu.dot_dimension_numbers<[1], [0], [0], [1], [0, 0, 1, 1], [], []>} : vector<512x16xf32>, vector<16x2xf32>, vector<512x2xf32> -> vector<512x2xf32>
    %5 = vector.shape_cast %4 : vector<512x2xf32> to vector<32x16x2xf32>
    %c0_5 = arith.constant 0 : index
    %c0_6 = arith.constant 0 : index
    %6 = vector.load %arg4[%c0_5, %c0_6] : memref<2x16xf32, #tpu.memory_space<vmem>>, vector<2x16xf32>
    %7 = vector.shape_cast %6 : vector<2x16xf32> to vector<1x2x16xf32>
    %8 = vector.shape_cast %7 : vector<1x2x16xf32> to vector<1x2x16xf32>
    %9 = vector.broadcast %8 : vector<1x2x16xf32> to vector<32x2x16xf32>
    "tpu.trace_start"() <{level = 10 : i32, message = "bnh,bhw->bnw"}> : () -> ()
    %cst_7 = arith.constant dense<0.000000e+00> : vector<32x2x2xf32>
    %10 = tpu.matmul %9, %5, %cst_7 {dimension_numbers = #tpu.dot_dimension_numbers<[2], [1], [1], [2], [0, 0, 0, 1, 1, 2], [0], [0]>} : vector<32x2x16xf32>, vector<32x16x2xf32>, vector<32x2x2xf32> -> vector<32x2x2xf32>
    "tpu.trace_stop"() : () -> ()
    %c0_8 = arith.constant 0 : index
    %c0_9 = arith.constant 0 : index
    %c0_10 = arith.constant 0 : index
    %c0_11 = arith.constant 0 : index
    %11 = vector.load %arg5[%c0_8, %c0_9, %c0_10, %c0_11] : memref<1x32x2x2xf32, #tpu.memory_space<vmem>>, vector<1x32x2x2xf32>
    %12 = vector.shape_cast %11 : vector<1x32x2x2xf32> to vector<32x2x2xf32>
    %13 = vector.shape_cast %10 : vector<32x2x2xf32> to vector<1x32x2x2xf32>
    tpu.vector_store %arg5[%c0_8, %c0_9, %c0_10, %c0_11], %13 {strides = array<i32>} : memref<1x32x2x2xf32, #tpu.memory_space<vmem>>, vector<1x32x2x2xf32>,
    return
  }
  func.func @transform_0(%arg0: i32, %arg1: i32) -> (i32, i32, i32, i32) {
    %c0_i32 = arith.constant 0 : i32
    %c0_i32_0 = arith.constant 0 : i32
    %c0_i32_1 = arith.constant 0 : i32
    return %arg0, %arg1, %c0_i32, %c0_i32_0 : i32, i32, i32, i32
  }
  func.func @transform_1(%arg0: i32, %arg1: i32) -> (i32, i32) {
    %c0_i32 = arith.constant 0 : i32
    %c0_i32_0 = arith.constant 0 : i32
    %c0_i32_1 = arith.constant 0 : i32
    return %c0_i32, %c0_i32_0 : i32, i32
  }
  func.func @transform_2(%arg0: i32, %arg1: i32) -> (i32, i32) {
    %c0_i32 = arith.constant 0 : i32
    %c0_i32_0 = arith.constant 0 : i32
    %c0_i32_1 = arith.constant 0 : i32
    return %c0_i32, %c0_i32_0 : i32, i32
  }
  func.func @transform_3(%arg0: i32, %arg1: i32) -> (i32, i32, i32, i32) {
    %c0_i32 = arith.constant 0 : i32
    %c0_i32_0 = arith.constant 0 : i32
    %c0_i32_1 = arith.constant 0 : i32
    return %arg0, %arg1, %c0_i32, %c0_i32_0 : i32, i32, i32, i32
  }
}

module attributes {stable_mosaic.version = 11 : i64} {
  func.func @_entropy_kernel(%arg0: i32, %arg1: memref<1x2x16xf32, #tpu.memory_space<vmem>>, %arg2: memref<1x2x1xf32, #tpu.memory_space<vmem>>) attributes {dimension_semantics = [#tpu.dimension_semantics<parallel>], iteration_bounds = array<i64: 2>, scalar_prefetch = 0 : i64, scratch_operands = 0 : i64, tpu.core_type = #tpu.core_type<tc>, window_params = [{transform_indices = @transform_0, window_bounds = array<i64: 1, 2, 16>}, {transform_indices = @transform_1, window_bounds = array<i64: 1, 2, 1>}]} {
    %c0 = arith.constant 0 : index
    %c0_0 = arith.constant 0 : index
    %c0_1 = arith.constant 0 : index
    %0 = vector.load %arg1[%c0, %c0_0, %c0_1] : memref<1x2x16xf32, #tpu.memory_space<vmem>>, vector<1x2x16xf32>
    %1 = vector.shape_cast %0 : vector<1x2x16xf32> to vector<2x16xf32>
    %cst = arith.constant dense<0x7F800000> : vector<2xf32>
    %2 = vector.multi_reduction <minimumf>, %1, %cst [1] : vector<2x16xf32> to vector<2xf32>
    %3 = vector.shape_cast %2 : vector<2xf32> to vector<2x1xf32>
    %cst_2 = arith.constant dense<0xFF800000> : vector<2xf32>
    %4 = vector.multi_reduction <maximumf>, %1, %cst_2 [1] : vector<2x16xf32> to vector<2xf32>
    %5 = vector.shape_cast %4 : vector<2xf32> to vector<2x1xf32>
    %6 = arith.cmpf oeq, %5, %3 : vector<2x1xf32>
    %cst_3 = arith.constant 5.000000e-01 : f32
    %7 = vector.broadcast %cst_3 : f32 to vector<2x1xf32>
    %8 = arith.subf %3, %7 : vector<2x1xf32>
    %9 = arith.select %6, %8, %3 : vector<2x1xi1>, vector<2x1xf32>
    %cst_4 = arith.constant 5.000000e-01 : f32
    %10 = vector.broadcast %cst_4 : f32 to vector<2x1xf32>
    %11 = arith.addf %5, %10 : vector<2x1xf32>
    %12 = arith.select %6, %11, %5 : vector<2x1xi1>, vector<2x1xf32>
    %13 = arith.subf %12, %9 : vector<2x1xf32>
    %cst_5 = arith.constant 3.000000e+01 : f32
    %14 = vector.broadcast %cst_5 : f32 to vector<2x1xf32>
    %15 = arith.divf %14, %13 : vector<2x1xf32>
    %16 = vector.broadcast %9 : vector<2x1xf32> to vector<2x16xf32>
    %17 = arith.subf %1, %16 : vector<2x16xf32>
    %18 = vector.broadcast %15 : vector<2x1xf32> to vector<2x16xf32>
    %19 = arith.mulf %17, %18 : vector<2x16xf32>
    %20 = math.floor %19 : vector<2x16xf32>
    %21 = arith.fptosi %20 : vector<2x16xf32> to vector<2x16xi32>
    %c0_i32 = arith.constant 0 : i32
    %c29_i32 = arith.constant 29 : i32
    %22 = vector.broadcast %c0_i32 : i32 to vector<2x16xi32>
    %23 = arith.maxsi %22, %21 : vector<2x16xi32>
    %24 = vector.broadcast %c29_i32 : i32 to vector<2x16xi32>
    %25 = arith.minsi %24, %23 : vector<2x16xi32>
    %26 = tpu.iota {dimensions = array<i32: 1>} : vector<2x30x16xi32>
    %27 = vector.shape_cast %25 : vector<2x16xi32> to vector<2x1x16xi32>
    %28 = vector.broadcast %27 : vector<2x1x16xi32> to vector<2x30x16xi32>
    %29 = arith.cmpi eq, %28, %26 : vector<2x30x16xi32>
    %30 = arith.extui %29 : vector<2x30x16xi1> to vector<2x30x16xi32>
    %31 = arith.sitofp %30 : vector<2x30x16xi32> to vector<2x30x16xf32>
    %cst_6 = arith.constant dense<0.000000e+00> : vector<2x30xf32>
    %32 = vector.multi_reduction <add>, %31, %cst_6 [2] : vector<2x30x16xf32> to vector<2x30xf32>
    %cst_7 = arith.constant dense<0xFF800000> : vector<2xf32>
    %33 = vector.multi_reduction <maximumf>, %32, %cst_7 [1] : vector<2x30xf32> to vector<2xf32>
    %34 = vector.shape_cast %33 : vector<2xf32> to vector<2x1xf32>
    %cst_8 = arith.constant dense<0x7F800000> : vector<2xf32>
    %35 = vector.multi_reduction <minimumf>, %32, %cst_8 [1] : vector<2x30xf32> to vector<2xf32>
    %36 = vector.shape_cast %35 : vector<2xf32> to vector<2x1xf32>
    %cst_9 = arith.constant 9.99999974E-5 : f32
    %37 = vector.broadcast %cst_9 : f32 to vector<2x1xf32>
    %38 = arith.addf %34, %37 : vector<2x1xf32>
    %39 = tpu.reciprocal %38 {approx = true} : vector<2x1xf32> -> vector<2x1xf32>
    %40 = vector.broadcast %39 : vector<2x1xf32> to vector<2x30xf32>
    %41 = arith.mulf %32, %40 : vector<2x30xf32>
    %cst_10 = arith.constant 0.000000e+00 : f32
    %42 = vector.broadcast %cst_10 : f32 to vector<2x30xf32>
    %43 = arith.cmpf ogt, %32, %42 : vector<2x30xf32>
    %cst_11 = arith.constant 1.000000e+00 : f32
    %44 = vector.broadcast %cst_11 : f32 to vector<2x30xf32>
    %45 = arith.select %43, %41, %44 : vector<2x30xi1>, vector<2x30xf32>
    %46 = math.log %45 : vector<2x30xf32>
    %cst_12 = arith.constant 2.000000e+00 : f32
    %47 = math.log %cst_12 : f32
    %48 = vector.broadcast %47 : f32 to vector<2x30xf32>
    %49 = arith.divf %46, %48 : vector<2x30xf32>
    %50 = arith.mulf %41, %49 : vector<2x30xf32>
    %cst_13 = arith.constant 0.000000e+00 : f32
    %51 = vector.broadcast %cst_13 : f32 to vector<2x30xf32>
    %52 = arith.select %43, %50, %51 : vector<2x30xi1>, vector<2x30xf32>
    %cst_14 = arith.constant dense<0.000000e+00> : vector<2xf32>
    %53 = vector.multi_reduction <add>, %52, %cst_14 [1] : vector<2x30xf32> to vector<2xf32>
    %54 = vector.shape_cast %53 : vector<2xf32> to vector<2x1xf32>
    %cst_15 = arith.constant 0.000000e+00 : f32
    %55 = vector.broadcast %cst_15 : f32 to vector<2x1xf32>
    %56 = arith.subf %55, %54 : vector<2x1xf32>
    %cst_16 = arith.constant 0.000000e+00 : f32
    %57 = vector.broadcast %cst_16 : f32 to vector<2x1xf32>
    %58 = arith.cmpf oeq, %36, %57 : vector<2x1xf32>
    %cst_17 = arith.constant 1.000000e+00 : f32
    %59 = vector.broadcast %cst_17 : f32 to vector<2x1xf32>
    %60 = arith.select %58, %59, %56 : vector<2x1xi1>, vector<2x1xf32>
    %c0_18 = arith.constant 0 : index
    %c0_19 = arith.constant 0 : index
    %c0_20 = arith.constant 0 : index
    %61 = vector.load %arg2[%c0_18, %c0_19, %c0_20] : memref<1x2x1xf32, #tpu.memory_space<vmem>>, vector<1x2x1xf32>
    %62 = vector.shape_cast %61 : vector<1x2x1xf32> to vector<2x1xf32>
    %63 = vector.shape_cast %60 : vector<2x1xf32> to vector<1x2x1xf32>
    tpu.vector_store %arg2[%c0_18, %c0_19, %c0_20], %63 {strides = array<i32>} : memref<1x2x1xf32, #tpu.memory_space<vmem>>, vector<1x2x1xf32>,
    return
  }
  func.func @transform_0(%arg0: i32) -> (i32, i32, i32) {
    %c0_i32 = arith.constant 0 : i32
    %c0_i32_0 = arith.constant 0 : i32
    %c0_i32_1 = arith.constant 0 : i32
    return %arg0, %c0_i32, %c0_i32_0 : i32, i32, i32
  }
  func.func @transform_1(%arg0: i32) -> (i32, i32, i32) {
    %c0_i32 = arith.constant 0 : i32
    %c0_i32_0 = arith.constant 0 : i32
    %c0_i32_1 = arith.constant 0 : i32
    return %arg0, %c0_i32, %c0_i32_0 : i32, i32, i32
  }
}

</mosaic_0001>

<llo_original>
// kernel: ent_forward.3
$region0: #{ent_forward.3}
  #allocation0 [shape = 'u32[]', space=smem, size = 0x4, offset = 0x4, fixed_abs, tag = 'smem constant byte address 0x4 - core index']
  #allocation1 [shape = 'u32[144,128]{1,0:T(1,128)}', space=vmem, size = 0x12000, scoped, tag = 'internal scratch']
  %s0 = inlined_call_operand.vmem [shape: f32[2,2,16], index: 0, kind: input, shape index: {}]
  %s1 = inlined_call_operand.vmem [shape: f32[2,2,1], index: 1, kind: output, shape index: {}]
  %s2 = sld [smem:[#allocation0]]
  $region37: #{ent_forward.3} parent=0
    _
  %s4 = ssub.s32 1, %s2
  %s5 = scalar_select 0, %s4, %s2
  loop: start=0, step=1, limit=4
  $region2: #{ent_forward.3} parent=0 // loop_pre_header
    _
  $region3: #{ent_forward.3} parent=0 // loop_header
    %s7 = sphi 0, %s11
    %p8 = scmp.ge.s32.totalorder %s7, 4
    %s17 = sphi 0, %s19
    %s20 = sphi 0, %s17
    %s21 = sphi 0, %s20
    %s37 = sphi 0, %s21
    %s43 = sphi 0, %s45
    %s46 = sphi 0, %s43
    %s47 = sphi 0, %s46
    %s63 = sphi 0, %s47
  $region4: #{ent_forward.3} parent=0 // loop_header_branch
    %10 = sbr.rel (%p8) target = $region8
  $region5: #{ent_forward.3} parent=0 // loop_body
    %s12 = ssub.s32 %s7, 1
    %s13 = ssub.s32 %s7, 2
    %s14 = sadd.s32 %s7, 1
    %s15 = ssub.s32 %s7, %s14
    %p16 = scmp.eq.s32.totalorder %s15, 0
    %s18 = sadd.s32 %s17, 1
    %s19 = scalar_select %p16, %s17, %s18
    %p22 = pneg %p16
    %p23 = scmp.eq.s32.totalorder %s7, 1
    %p24 = por %p22, %p23
    %p25 = scmp.ne.s32.totalorder %s17, %s20
    %p26 = scmp.eq.s32.totalorder %s7, 0
    %p27 = por %p25, %p26
    %p28 = scmp.ne.s32.totalorder %s17, %s20
    %p29 = scmp.eq.s32.totalorder %s12, 1
    %p30 = por %p28, %p29
    %p31 = scmp.ne.s32.totalorder %s20, %s21
    %p32 = scmp.eq.s32.totalorder %s12, 0
    %p33 = por %p31, %p32
    %p34 = scmp.ne.s32.totalorder %s20, %s21
    %p35 = scmp.eq.s32.totalorder %s13, 1
    %p36 = por %p34, %p35
    %p38 = scmp.ne.s32.totalorder %s21, %s37
    %p39 = scmp.eq.s32.totalorder %s13, 0
    %p40 = por %p38, %p39
    %s41 = ssub.s32 %s7, %s14
    %p42 = scmp.eq.s32.totalorder %s41, 0
    %s44 = sadd.s32 %s43, 1
    %s45 = scalar_select %p42, %s43, %s44
    %p48 = pneg %p42
    %p49 = scmp.eq.s32.totalorder %s7, 1
    %p50 = por %p48, %p49
    %p51 = scmp.ne.s32.totalorder %s43, %s46
    %p52 = scmp.eq.s32.totalorder %s7, 0
    %p53 = por %p51, %p52
    %p54 = scmp.ne.s32.totalorder %s43, %s46
    %p55 = scmp.eq.s32.totalorder %s12, 1
    %p56 = por %p54, %p55
    %p57 = scmp.ne.s32.totalorder %s46, %s47
    %p58 = scmp.eq.s32.totalorder %s12, 0
    %p59 = por %p57, %p58
    %p60 = scmp.ne.s32.totalorder %s46, %s47
    %p61 = scmp.eq.s32.totalorder %s13, 1
    %p62 = por %p60, %p61
    %p64 = scmp.ne.s32.totalorder %s47, %s63
    %p65 = scmp.eq.s32.totalorder %s13, 0
    %p66 = por %p64, %p65
    %p67 = scmp.le.s32.totalorder 1, %s7
    %p68 = scmp.lt.s32.totalorder %s7, 3
    %p69 = pnand %p67, %p68
    %p70 = pneg %p69
    // Predicated region
    $region9: #{ent_forward.3} parent=5 // pred_check
      _
    $region10: #{ent_forward.3} parent=5 // pred_check_branch
      %72 = sbr.rel (%p69) target = $region12
    $region11: #{ent_forward.3} parent=5 // pred_region
      %s73 = ssub.s32 %s7, 1
    $region12: #{ent_forward.3} parent=5 // pred_fallthru
      _
    %p74 = scmp.lt.s32.totalorder %s7, 2
    // Predicated region
    $region13: #{ent_forward.3} parent=5 // pred_check
      %p75 = pneg %p74
    $region14: #{ent_forward.3} parent=5 // pred_check_branch
      %77 = sbr.rel (%p75) target = $region16
    $region15: #{ent_forward.3} parent=5 // pred_region
      // Predicated region
      $region17: #{ent_forward.3} parent=15 // pred_check
        %p78 = pneg %p27
      $region18: #{ent_forward.3} parent=15 // pred_check_branch
        %80 = sbr.rel (%p78) target = $region20
      $region19: #{ent_forward.3} parent=15 // pred_region
        %p81 = scmp.lt.s32.totalorder %s7, 1
        %s82 = scalar_select %p81, %s7, 1
        %s83 = smul.addr %s82, 2
        %s84 = scalar_lea.vmem %s0, %s83
      $region20: #{ent_forward.3} parent=15 // pred_fallthru
        _
    $region16: #{ent_forward.3} parent=5 // pred_fallthru
      _
    %p85 = scmp.le.s32.totalorder 1, %s7
    %p86 = scmp.lt.s32.totalorder %s7, 3
    %p87 = pnand %p85, %p86
    %p88 = pneg %p87
    // Predicated region
    $region21: #{ent_forward.3} parent=5 // pred_check
      _
    $region22: #{ent_forward.3} parent=5 // pred_check_branch
      %90 = sbr.rel (%p87) target = $region24
    $region23: #{ent_forward.3} parent=5 // pred_region
      %s91 = ssub.s32 %s7, 1
      %p92 = scmp.lt.s32.totalorder %s12, 1
      %s93 = scalar_select %p92, %s12, 1
      %s94 = smul.addr %s93, 2
      %s95 = scalar_lea.vmem %s0, %s94
      %p96 = pneg %p33
      %p97 = pneg %p30
      %p98 = pneg %p59
      %p99 = pneg %p56
      %p100 = scmp.lt.s32.totalorder %s12, 1
      %s101 = scalar_select %p100, %s12, 1
      %s102 = smul.addr %s101, 2
      %s103 = scalar_lea.vmem %s1, %s102
      %p104 = scmp.lt.s32.totalorder %s12, 1
      %s105 = scalar_select %p104, %s12, 1
      %s106 = smul.addr %s105, 2
      %s107 = scalar_lea.vmem %s0, %s106
      %p108 = scmp.lt.s32.totalorder %s12, 1
      %s109 = scalar_select %p108, %s12, 1
      %s110 = smul.addr %s109, 2
      %s111 = scalar_lea.vmem %s1, %s110
      %v112 = vld [vmem:[%s107] sm:$0x3]
      %vm113 = vcmask 123904
      %v114 = vsel %vm113, %v112, inf
      %115 = vmin.xlane.f32.xlu0 %v114
      %v116 = vpop.xlane.xlu0 %115
      %v117 = vsel %vm113, %v112, -inf
      %118 = vmax.xlane.f32.xlu0 %v117
      %v119 = vpop.xlane.xlu0 %118
      %vm120 = vcmp.eq.f32.partialorder %v119, %v116
      %v121 = vsub.f32 %v116, 0.5
      %v122 = vsel %vm120, %v121, %v116
      %v123 = vadd.f32 %v119, 0.5
      %v124 = vsel %vm120, %v123, %v119
      %v125 = vsub.f32 %v124, %v122
      %v126 = vrcp.pop %v125
      %v127 = vmul.f32 30.0, %v126
      %v128 = vsub.f32 %v112, %v122
      %v129 = vmul.f32 %v128, %v127
      %v130 = vfloor.f32 %v129
      %v131 = vcvt.f32.s32.to.zero.pseudo %v130
      %vm132 = vcmp.gt.s32.totalorder %v131, 0
      %v133 = vsel %vm132, %v131, 0
      %vm134 = vcmp.lt.s32.totalorder %v133, 29
      %v135 = vsel %vm134, %v133, 29
      %v136 = vlaneseq
      %v137 = vshrl.u32 %v136, 7
      %v138 = vadd.s32 %v137, 8
      %v139 = vadd.s32 %v137, 16
      %v140 = vadd.s32 %v137, 24
      %v142 = vunpack.c.l.s4 1966171168
      %v143 = vunpack.c.0.s8 %v142
      %v144 = vlaneseq
      %v145 = vshrl.u32 %v144, 7
      %v146 = vsub.s32 %v143, %v145
      %v147 = vrot.slane %v135, %v146
      %v148 = vcombine.high %v147, %v147
      %v150 = vunpack.c.l.s4 1966171168
      %v151 = vunpack.c.0.s8 %v150
      %v152 = vlaneseq
      %v153 = vshrl.u32 %v152, 7
      %v154 = vsub.s32 %v151, %v153
      %v155 = vrot.slane %v147, %v154
      %v157 = vunpack.c.l.s4 1966171168
      %v158 = vunpack.c.0.s8 %v157
      %v159 = vlaneseq
      %v160 = vshrl.u32 %v159, 7
      %v161 = vsub.s32 %v158, %v160
      %v162 = vrot.slane %v148, %v161
      %v163 = vlaneseq
      %v164 = vshrl.u32 %v163, 7
      %v165 = vsub.s32 0, %v164
      %v166 = vrot.slane %v155, %v165
      %v167 = vlaneseq
      %v168 = vshrl.u32 %v167, 7
      %v169 = vsub.s32 0, %v168
      %v170 = vrot.slane %v162, %v169
      %vm171 = vcmp.eq.s32.totalorder %v166, %v137
      %vm172 = vcmp.eq.s32.totalorder %v166, %v138
      %vm173 = vcmp.eq.s32.totalorder %v166, %v139
      %vm174 = vcmp.eq.s32.totalorder %v166, %v140
      %vm175 = vcmp.eq.s32.totalorder %v170, %v137
      %vm176 = vcmp.eq.s32.totalorder %v170, %v138
      %vm177 = vcmp.eq.s32.totalorder %v170, %v139
      %vm178 = vcmp.eq.s32.totalorder %v170, %v140
      %v179 = vsel %vm171, 1, 0
      %v180 = vsel %vm172, 1, 0
      %v181 = vsel %vm173, 1, 0
      %v182 = vsel %vm174, 1, 0
      %v183 = vsel %vm175, 1, 0
      %v184 = vsel %vm176, 1, 0
      %v185 = vsel %vm177, 1, 0
      %v186 = vsel %vm178, 1, 0
      %v187 = vcvt.s32.f32 %v179
      %v188 = vcvt.s32.f32 %v180
      %v189 = vcvt.s32.f32 %v181
      %v190 = vcvt.s32.f32 %v182
      %v191 = vcvt.s32.f32 %v183
      %v192 = vcvt.s32.f32 %v184
      %v193 = vcvt.s32.f32 %v185
      %v194 = vcvt.s32.f32 %v186
      %vm195 = vcmask 130048
      %v196 = vsel %vm195, %v187, 0.0
      %197 = vadd.xlane.f32.xlu0 %v196
      %v198 = vpop.xlane.xlu0 %197
      %v199 = vsel %vm195, %v188, 0.0
      %200 = vadd.xlane.f32.xlu0 %v199
      %v201 = vpop.xlane.xlu0 %200
      %v202 = vsel %vm195, %v189, 0.0
      %203 = vadd.xlane.f32.xlu0 %v202
      %v204 = vpop.xlane.xlu0 %203
      %vm205 = vcmask 128000
      %v206 = vsel %vm205, %v190, 0.0
      %207 = vadd.xlane.f32.xlu0 %v206
      %v208 = vpop.xlane.xlu0 %207
      %v209 = vsel %vm195, %v191, 0.0
      %210 = vadd.xlane.f32.xlu0 %v209
      %v211 = vpop.xlane.xlu0 %210
      %v212 = vsel %vm195, %v192, 0.0
      %213 = vadd.xlane.f32.xlu0 %v212
      %v214 = vpop.xlane.xlu0 %213
      %v215 = vsel %vm195, %v193, 0.0
      %216 = vadd.xlane.f32.xlu0 %v215
      %v217 = vpop.xlane.xlu0 %216
      %v218 = vsel %vm205, %v194, 0.0
      %219 = vadd.xlane.f32.xlu0 %v218
      %v220 = vpop.xlane.xlu0 %219
      %v229 = vlaneseq
      %v230 = vand.u32 %v229, 127
      %v231 = vlaneseq
      %v232 = vshrl.u32 %v231, 7
      %v233 = vsub.s32 %v230, %v232
      %v234 = vrot.slane %v198, %v233
      %v235 = vadd.s32 %v230, 4294967288
      %v236 = vlaneseq
      %v237 = vshrl.u32 %v236, 7
      %v238 = vsub.s32 %v235, %v237
      %v239 = vrot.slane %v201, %v238
      %vm240 = vcmask 130112
      %v241 = vsel %vm240, %v239, %v234
      %v242 = vadd.s32 %v230, 4294967280
      %v243 = vlaneseq
      %v244 = vshrl.u32 %v243, 7
      %v245 = vsub.s32 %v242, %v244
      %v246 = vrot.slane %v204, %v245
      %vm247 = vcmask 195712
      %v248 = vsel %vm247, %v246, %v241
      %v249 = vadd.s32 %v230, 4294967272
      %v250 = vlaneseq
      %v251 = vshrl.u32 %v250, 7
      %v252 = vsub.s32 %v249, %v251
      %v253 = vrot.slane %v208, %v252
      %vm254 = vcmask 261312
      %v255 = vsel %vm254, %v253, %v248
      %v256 = vlaneseq
      %v257 = vshrl.u32 %v256, 7
      %v258 = vsub.s32 %v230, %v257
      %v259 = vrot.slane %v211, %v258
      %v260 = vlaneseq
      %v261 = vshrl.u32 %v260, 7
      %v262 = vsub.s32 %v235, %v261
      %v263 = vrot.slane %v214, %v262
      %v264 = vsel %vm240, %v263, %v259
      %v265 = vlaneseq
      %v266 = vshrl.u32 %v265, 7
      %v267 = vsub.s32 %v242, %v266
      %v268 = vrot.slane %v217, %v267
      %v269 = vsel %vm247, %v268, %v264
      %v270 = vlaneseq
      %v271 = vshrl.u32 %v270, 7
      %v272 = vsub.s32 %v249, %v271
      %v273 = vrot.slane %v220, %v272
      %v274 = vsel %vm254, %v273, %v269
      %vm275 = vcmask 1041409
      %v276 = vsel %vm275, %v274, %v255
      %vm278 = vcmask 238592
      %v279 = vsel %vm278, %v276, -inf
      %280 = vmax.xlane.f32.xlu0 %v279
      %v281 = vpop.xlane.xlu0 %280
      %v282 = vsel %vm278, %v276, inf
      %283 = vmin.xlane.f32.xlu0 %v282
      %v284 = vpop.xlane.xlu0 %283
      %v285 = vadd.f32 %v281, 0.0001
      %v286 = vrcp.pop %v285
      %v288 = vlaneseq
      %v289 = vshrl.u32 %v288, 7
      %v290 = vsub.s32 0, %v289
      %v291 = vrot.slane %v286, %v290
      %v292 = vlaneseq
      %v293 = vshrl.u32 %v292, 7
      %v294 = vsub.s32 1, %v293
      %v295 = vrot.slane %v286, %v294
      %v298 = vmul.f32 %v198, %v291
      %v299 = vmul.f32 %v201, %v291
      %v300 = vmul.f32 %v204, %v291
      %v301 = vmul.f32 %v208, %v291
      %v302 = vmul.f32 %v211, %v295
      %v303 = vmul.f32 %v214, %v295
      %v304 = vmul.f32 %v217, %v295
      %v305 = vmul.f32 %v220, %v295
      %vm306 = vcmp.gt.f32.partialorder %v198, 0.0
      %vm307 = vcmp.gt.f32.partialorder %v201, 0.0
      %vm308 = vcmp.gt.f32.partialorder %v204, 0.0
      %vm309 = vcmp.gt.f32.partialorder %v208, 0.0
      %vm310 = vcmp.gt.f32.partialorder %v211, 0.0
      %vm311 = vcmp.gt.f32.partialorder %v214, 0.0
      %vm312 = vcmp.gt.f32.partialorder %v217, 0.0
      %vm313 = vcmp.gt.f32.partialorder %v220, 0.0
      %v314 = vsel %vm306, %v298, 1.0
      %v315 = vsel %vm307, %v299, 1.0
      %v316 = vsel %vm308, %v300, 1.0
      %v317 = vsel %vm309, %v301, 1.0
      %v318 = vsel %vm310, %v302, 1.0
      %v319 = vsel %vm311, %v303, 1.0
      %v320 = vsel %vm312, %v304, 1.0
      %v321 = vsel %vm313, %v305, 1.0
      %v322 = vlog2.pop %v314
      %v323 = vmul.f32 %v322, 0.6931472
      %v324 = vlog2.pop %v315
      %v325 = vmul.f32 %v324, 0.6931472
      %v326 = vlog2.pop %v316
      %v327 = vmul.f32 %v326, 0.6931472
      %v328 = vlog2.pop %v317
      %v329 = vmul.f32 %v328, 0.6931472
      %v330 = vlog2.pop %v318
      %v331 = vmul.f32 %v330, 0.6931472
      %v332 = vlog2.pop %v319
      %v333 = vmul.f32 %v332, 0.6931472
      %v334 = vlog2.pop %v320
      %v335 = vmul.f32 %v334, 0.6931472
      %v336 = vlog2.pop %v321
      %v337 = vmul.f32 %v336, 0.6931472
      %v338 = vrcp.pop 0.6931472
      %v339 = vmul.f32 %v323, %v338
      %v340 = vmul.f32 %v325, %v338
      %v341 = vmul.f32 %v327, %v338
      %v342 = vmul.f32 %v329, %v338
      %v343 = vmul.f32 %v331, %v338
      %v344 = vmul.f32 %v333, %v338
      %v345 = vmul.f32 %v335, %v338
      %v346 = vmul.f32 %v337, %v338
      %v347 = vmul.f32 %v298, %v339
      %v348 = vmul.f32 %v299, %v340
      %v349 = vmul.f32 %v300, %v341
      %v350 = vmul.f32 %v301, %v342
      %v351 = vmul.f32 %v302, %v343
      %v352 = vmul.f32 %v303, %v344
      %v353 = vmul.f32 %v304, %v345
      %v354 = vmul.f32 %v305, %v346
      %v355 = vsel %vm306, %v347, 0.0
      %v356 = vsel %vm307, %v348, 0.0
      %v357 = vsel %vm308, %v349, 0.0
      %v358 = vsel %vm309, %v350, 0.0
      %v359 = vsel %vm310, %v351, 0.0
      %v360 = vsel %vm311, %v352, 0.0
      %v361 = vsel %vm312, %v353, 0.0
      %v362 = vsel %vm313, %v354, 0.0
      %371 = vset.pattern.permute.xlu0 0
      %372 = vperm.xlu0 %371, %v355
      %v373 = vpop.permute.xlu0 %372
      %374 = vset.pattern.permute.xlu0 0
      %375 = vperm.xlu0 %374, %v356
      %v376 = vpop.permute.xlu0 %375
      %377 = vset.pattern.permute.xlu0 0
      %378 = vperm.xlu0 %377, %v357
      %v379 = vpop.permute.xlu0 %378
      %380 = vset.pattern.permute.xlu0 0
      %381 = vperm.xlu0 %380, %v358
      %v382 = vpop.permute.xlu0 %381
      %383 = vset.pattern.permute.xlu0 0
      %384 = vperm.xlu0 %383, %v359
      %v385 = vpop.permute.xlu0 %384
      %386 = vset.pattern.permute.xlu0 0
      %387 = vperm.xlu0 %386, %v360
      %v388 = vpop.permute.xlu0 %387
      %389 = vset.pattern.permute.xlu0 0
      %390 = vperm.xlu0 %389, %v361
      %v391 = vpop.permute.xlu0 %390
      %392 = vset.pattern.permute.xlu0 0
      %393 = vperm.xlu0 %392, %v362
      %v394 = vpop.permute.xlu0 %393
      %v395 = vlaneseq
      %v396 = vshrl.u32 %v395, 7
      %v397 = vsub.s32 %v230, %v396
      %v398 = vrot.slane %v373, %v397
      %v399 = vlaneseq
      %v400 = vshrl.u32 %v399, 7
      %v401 = vsub.s32 %v235, %v400
      %v402 = vrot.slane %v376, %v401
      %v403 = vsel %vm240, %v402, %v398
      %v404 = vlaneseq
      %v405 = vshrl.u32 %v404, 7
      %v406 = vsub.s32 %v242, %v405
      %v407 = vrot.slane %v379, %v406
      %v408 = vsel %vm247, %v407, %v403
      %v409 = vlaneseq
      %v410 = vshrl.u32 %v409, 7
      %v411 = vsub.s32 %v249, %v410
      %v412 = vrot.slane %v382, %v411
      %v413 = vsel %vm254, %v412, %v408
      %v414 = vlaneseq
      %v415 = vshrl.u32 %v414, 7
      %v416 = vsub.s32 %v230, %v415
      %v417 = vrot.slane %v385, %v416
      %v418 = vlaneseq
      %v419 = vshrl.u32 %v418, 7
      %v420 = vsub.s32 %v235, %v419
      %v421 = vrot.slane %v388, %v420
      %v422 = vsel %vm240, %v421, %v417
      %v423 = vlaneseq
      %v424 = vshrl.u32 %v423, 7
      %v425 = vsub.s32 %v242, %v424
      %v426 = vrot.slane %v391, %v425
      %v427 = vsel %vm247, %v426, %v422
      %v428 = vlaneseq
      %v429 = vshrl.u32 %v428, 7
      %v430 = vsub.s32 %v249, %v429
      %v431 = vrot.slane %v394, %v430
      %v432 = vsel %vm254, %v431, %v427
      %v433 = vsel %vm275, %v432, %v413
      %v435 = vsel %vm278, %v433, 0.0
      %436 = vadd.xlane.f32.xlu0 %v435
      %v437 = vpop.xlane.xlu0 %436
      %v438 = vsub.f32 0.0, %v437
      %vm439 = vcmp.eq.f32.partialorder %v284, 0.0
      %v440 = vsel %vm439, 1.0, %v438
      %vm441 = vcmask 1024
      %442 = vst.msk [vmem:[%s111] sm:$0x3] %vm441, %v440
      %p443 = scmp.lt.s32.totalorder %s12, 1
      %s444 = scalar_select %p443, %s12, 1
      %s445 = smul.addr %s444, 2
      %s446 = scalar_lea.vmem %s1, %s445
      // Predicated region
      $region25: #{ent_forward.3} parent=23 // pred_check
        %p447 = pneg %p56
      $region26: #{ent_forward.3} parent=23 // pred_check_branch
        %449 = sbr.rel (%p447) target = $region28
      $region27: #{ent_forward.3} parent=23 // pred_region
        _
      $region28: #{ent_forward.3} parent=23 // pred_fallthru
        _
    $region24: #{ent_forward.3} parent=5 // pred_fallthru
      _
    %p450 = scmp.le.s32.totalorder 2, %s7
    // Predicated region
    $region29: #{ent_forward.3} parent=5 // pred_check
      %p451 = pneg %p450
    $region30: #{ent_forward.3} parent=5 // pred_check_branch
      %453 = sbr.rel (%p451) target = $region32
    $region31: #{ent_forward.3} parent=5 // pred_region
      %s454 = ssub.s32 %s7, 2
      // Predicated region
      $region33: #{ent_forward.3} parent=31 // pred_check
        %p455 = pneg %p62
      $region34: #{ent_forward.3} parent=31 // pred_check_branch
        %457 = sbr.rel (%p455) target = $region36
      $region35: #{ent_forward.3} parent=31 // pred_region
        %p458 = scmp.lt.s32.totalorder %s13, 1
        %s459 = scalar_select %p458, %s13, 1
        %s460 = smul.addr %s459, 2
        %s461 = scalar_lea.vmem %s1, %s460
      $region36: #{ent_forward.3} parent=31 // pred_fallthru
        _
    $region32: #{ent_forward.3} parent=5 // pred_fallthru
      _
  $region6: #{ent_forward.3} parent=0 // loop_footer
    %s11 = sadd.s32 1, %s7
  $region7: #{ent_forward.3} parent=0 // loop_footer_branch
    %6 = sbr.rel target = $region3
  $region8: #{ent_forward.3} parent=0 // loop_exit
    _

// kernel: ent_forward.2
$region0: #{ent_forward.2}
  #allocation0 [shape = 'u32[]', space=smem, size = 0x4, offset = 0x4, fixed_abs, tag = 'smem constant byte address 0x4 - core index']
  #allocation1 [shape = 'u32[144,128]{1,0:T(1,128)}', space=vmem, size = 0x12000, scoped, tag = 'internal scratch']
  %s0 = inlined_call_operand.hbm [shape: f32[2,32,16,16], index: 0, kind: input, shape index: {}]
  %s1 = inlined_call_operand.vmem [shape: f32[16,2], index: 1, kind: input, shape index: {}]
  %s2 = inlined_call_operand.vmem [shape: f32[2,16], index: 2, kind: input, shape index: {}]
  %s3 = inlined_call_operand.vmem [shape: f32[2,32,2,2], index: 3, kind: output, shape index: {}]
  %s4 = sld [smem:[#allocation0]]
  $region49: #{ent_forward.2} parent=0
    _
  %s6 = ssub.s32 1, %s4
  %s7 = scalar_select 0, %s6, %s4
  $region1: #{ent_forward.2} parent=0
    #allocation2 [shape = 'u8[524288]{0}', space=vmem, size = 0x80000, scoped, tag = 'input window, operand 0']
    #allocation3 [shape = 's32[2]{0}', space=sflag, size = 0x8, scoped, tag = 'scoped memory for ent_forward.2']
    %8 = vsyncpa [#allocation3], 0
    %s9 = scalar_lea.sflag [#allocation3], 1
    %10 = vsyncpa %s9, 0
    loop: start=0, step=1, limit=4
    $region2: #{ent_forward.2} parent=1 // loop_pre_header
      _
    $region3: #{ent_forward.2} parent=1 // loop_header
      %s12 = sphi 0, %s16
      %p13 = scmp.ge.s32.totalorder %s12, 4
      %s19 = sphi 0, %s31
      %s20 = sphi 0, %s27
      %s21 = sphi 0, %s19
      %s22 = sphi 0, %s20
      %s23 = sphi 0, %s21
      %s24 = sphi 0, %s22
      %s36 = sphi 0, %s38
      %s39 = sphi 0, %s36
      %s40 = sphi 0, %s39
      %s56 = sphi 0, %s40
      %s60 = sphi 0, %s60
      %s62 = sphi 0, %s60
      %s63 = sphi 0, %s62
      %s77 = sphi 0, %s63
      %s81 = sphi 0, %s81
      %s83 = sphi 0, %s81
      %s84 = sphi 0, %s83
      %s98 = sphi 0, %s84
      %s106 = sphi 0, %s108
      %s109 = sphi 0, %s106
      %s110 = sphi 0, %s109
      %s126 = sphi 0, %s110
    $region4: #{ent_forward.2} parent=1 // loop_header_branch
      %15 = sbr.rel (%p13) target = $region8
    $region5: #{ent_forward.2} parent=1 // loop_body
      %s17 = ssub.s32 %s12, 1
      %s18 = ssub.s32 %s12, 2
      %s25 = sadd.s32 1, %s20
      %p26 = scmp.ge.s32.totalorder %s25, 1
      %s27 = scalar_select %p26, 0, %s25
      %s28 = sadd.s32 1, %s19
      %s29 = scalar_select %p26, %s28, %s19
      %p30 = scmp.ge.s32.totalorder %s29, 2
      %s31 = scalar_select %p30, 0, %s29
      %s32 = ssub.s32 %s19, %s31
      %s33 = ssub.s32 %s20, %s27
      %s34 = sor.u32 %s32, %s33
      %p35 = scmp.eq.s32.totalorder %s34, 0
      %s37 = sadd.s32 %s36, 1
      %s38 = scalar_select %p35, %s36, %s37
      %p41 = pneg %p35
      %p42 = scmp.eq.s32.totalorder %s12, 1
      %p43 = por %p41, %p42
      %p44 = scmp.ne.s32.totalorder %s36, %s39
      %p45 = scmp.eq.s32.totalorder %s12, 0
      %p46 = por %p44, %p45
      %p47 = scmp.ne.s32.totalorder %s36, %s39
      %p48 = scmp.eq.s32.totalorder %s17, 1
      %p49 = por %p47, %p48
      %p50 = scmp.ne.s32.totalorder %s39, %s40
      %p51 = scmp.eq.s32.totalorder %s17, 0
      %p52 = por %p50, %p51
      %p53 = scmp.ne.s32.totalorder %s39, %s40
      %p54 = scmp.eq.s32.totalorder %s18, 1
      %p55 = por %p53, %p54
      %p57 = scmp.ne.s32.totalorder %s40, %s56
      %p58 = scmp.eq.s32.totalorder %s18, 0
      %p59 = por %p57, %p58
      %s61 = sadd.s32 %s60, 1
      %p64 = scmp.eq.s32.totalorder %s12, 1
      %p65 = scmp.ne.s32.totalorder %s60, %s62
      %p66 = scmp.eq.s32.totalorder %s12, 0
      %p67 = por %p65, %p66
      %p68 = scmp.ne.s32.totalorder %s60, %s62
      %p69 = scmp.eq.s32.totalorder %s17, 1
      %p70 = por %p68, %p69
      %p71 = scmp.ne.s32.totalorder %s62, %s63
      %p72 = scmp.eq.s32.totalorder %s17, 0
      %p73 = por %p71, %p72
      %p74 = scmp.ne.s32.totalorder %s62, %s63
      %p75 = scmp.eq.s32.totalorder %s18, 1
      %p76 = por %p74, %p75
      %p78 = scmp.ne.s32.totalorder %s63, %s77
      %p79 = scmp.eq.s32.totalorder %s18, 0
      %p80 = por %p78, %p79
      %s82 = sadd.s32 %s81, 1
      %p85 = scmp.eq.s32.totalorder %s12, 1
      %p86 = scmp.ne.s32.totalorder %s81, %s83
      %p87 = scmp.eq.s32.totalorder %s12, 0
      %p88 = por %p86, %p87
      %p89 = scmp.ne.s32.totalorder %s81, %s83
      %p90 = scmp.eq.s32.totalorder %s17, 1
      %p91 = por %p89, %p90
      %p92 = scmp.ne.s32.totalorder %s83, %s84
      %p93 = scmp.eq.s32.totalorder %s17, 0
      %p94 = por %p92, %p93
      %p95 = scmp.ne.s32.totalorder %s83, %s84
      %p96 = scmp.eq.s32.totalorder %s18, 1
      %p97 = por %p95, %p96
      %p99 = scmp.ne.s32.totalorder %s84, %s98
      %p100 = scmp.eq.s32.totalorder %s18, 0
      %p101 = por %p99, %p100
      %s102 = ssub.s32 %s19, %s31
      %s103 = ssub.s32 %s20, %s27
      %s104 = sor.u32 %s102, %s103
      %p105 = scmp.eq.s32.totalorder %s104, 0
      %s107 = sadd.s32 %s106, 1
      %s108 = scalar_select %p105, %s106, %s107
      %p111 = pneg %p105
      %p112 = scmp.eq.s32.totalorder %s12, 1
      %p113 = por %p111, %p112
      %p114 = scmp.ne.s32.totalorder %s106, %s109
      %p115 = scmp.eq.s32.totalorder %s12, 0
      %p116 = por %p114, %p115
      %p117 = scmp.ne.s32.totalorder %s106, %s109
      %p118 = scmp.eq.s32.totalorder %s17, 1
      %p119 = por %p117, %p118
      %p120 = scmp.ne.s32.totalorder %s109, %s110
      %p121 = scmp.eq.s32.totalorder %s17, 0
      %p122 = por %p120, %p121
      %p123 = scmp.ne.s32.totalorder %s109, %s110
      %p124 = scmp.eq.s32.totalorder %s18, 1
      %p125 = por %p123, %p124
      %p127 = scmp.ne.s32.totalorder %s110, %s126
      %p128 = scmp.eq.s32.totalorder %s18, 0
      %p129 = por %p127, %p128
      %p130 = scmp.le.s32.totalorder 1, %s12
      %p131 = scmp.lt.s32.totalorder %s12, 3
      %p132 = pnand %p130, %p131
      %p133 = pneg %p132
      // Predicated region
      $region9: #{ent_forward.2} parent=5 // pred_check
        _
      $region10: #{ent_forward.2} parent=5 // pred_check_branch
        %135 = sbr.rel (%p132) target = $region12
      $region11: #{ent_forward.2} parent=5 // pred_region
        %s136 = ssub.s32 %s12, 1
        // Predicated region
        $region13: #{ent_forward.2} parent=11 // pred_check
          %p137 = pneg %p73
        $region14: #{ent_forward.2} parent=11 // pred_check_branch
          %139 = sbr.rel (%p137) target = $region16
        $region15: #{ent_forward.2} parent=11 // pred_region
          _
        $region16: #{ent_forward.2} parent=11 // pred_fallthru
          _
        // Predicated region
        $region17: #{ent_forward.2} parent=11 // pred_check
          %p140 = pneg %p94
        $region18: #{ent_forward.2} parent=11 // pred_check_branch
          %142 = sbr.rel (%p140) target = $region20
        $region19: #{ent_forward.2} parent=11 // pred_region
          _
        $region20: #{ent_forward.2} parent=11 // pred_fallthru
          _
      $region12: #{ent_forward.2} parent=5 // pred_fallthru
        _
      %p143 = scmp.lt.s32.totalorder %s12, 2
      // Predicated region
      $region21: #{ent_forward.2} parent=5 // pred_check
        %p144 = pneg %p143
      $region22: #{ent_forward.2} parent=5 // pred_check_branch
        %146 = sbr.rel (%p144) target = $region24
      $region23: #{ent_forward.2} parent=5 // pred_region
        // Predicated region
        $region25: #{ent_forward.2} parent=23 // pred_check
          %p147 = pneg %p46
        $region26: #{ent_forward.2} parent=23 // pred_check_branch
          %149 = sbr.rel (%p147) target = $region28
        $region27: #{ent_forward.2} parent=23 // pred_region
          %s150 = sand.u32 %s36, 1
          %s151 = scalar_lea.sflag [#allocation3], %s150
          %s152 = sand.u32 %s36, 1
          %s153 = smul.addr %s152, 512
          %s154 = scalar_lea.vmem [#allocation2], %s153
          %s155 = smul.u32 32, %s20
          %s157 = ssub.s32 8192, 8192
          %158 = vsyncadd %s151, %s157
          %s159 = smul.addr %s155, 2
          %s160 = smul.addr %s19, 64
          %s161 = sadd.s32 %s159, %s160
          %s162 = smul.addr %s161, 128
          %s163 = scalar_lea.hbm %s0, %s162
          %s164 = sshll.u32 %s154, 4
          %s165 = int_to_ptr.vmem [resolvable:$true] %s164
          %170 = dma.hbm_to_vmem [thread:$0]  %s163, 8192, %s165, %s151, 128, 128, 8
        $region28: #{ent_forward.2} parent=23 // pred_fallthru
          _
      $region24: #{ent_forward.2} parent=5 // pred_fallthru
        _
      %p171 = scmp.le.s32.totalorder 1, %s12
      %p172 = scmp.lt.s32.totalorder %s12, 3
      %p173 = pnand %p171, %p172
      %p174 = pneg %p173
      // Predicated region
      $region29: #{ent_forward.2} parent=5 // pred_check
        _
      $region30: #{ent_forward.2} parent=5 // pred_check_branch
        %176 = sbr.rel (%p173) target = $region32
      $region31: #{ent_forward.2} parent=5 // pred_region
        %s177 = ssub.s32 %s12, 1
        %s178 = sand.u32 %s39, 1
        %s179 = scalar_lea.sflag [#allocation3], %s178
        %s180 = sand.u32 %s39, 1
        %s181 = smul.addr %s180, 512
        %s182 = scalar_lea.vmem [#allocation2], %s181
        // Predicated region
        $region33: #{ent_forward.2} parent=31 // pred_check
          %p183 = pneg %p52
        $region34: #{ent_forward.2} parent=31 // pred_check_branch
          %185 = sbr.rel (%p183) target = $region36
        $region35: #{ent_forward.2} parent=31 // pred_region
          %186 = dma.done %s179, 8192
        $region36: #{ent_forward.2} parent=31 // pred_fallthru
          _
        %s187 = sand.u32 %s39, 1
        %s188 = scalar_lea.sflag [#allocation3], %s187
        %s189 = sand.u32 %s39, 1
        %s190 = smul.addr %s189, 512
        %s191 = scalar_lea.vmem [#allocation2], %s190
        %p192 = pneg %p52
        %p193 = pneg %p49
        %p194 = pneg %p73
        %p195 = pneg %p70
        %p196 = pneg %p94
        %p197 = pneg %p91
        %p198 = pneg %p122
        %p199 = pneg %p119
        %s200 = smul.u32 32, %s22
        %p201 = scmp.lt.s32.totalorder %s21, 1
        %s202 = scalar_select %p201, %s21, 1
        %p203 = scmp.lt.s32.totalorder %s200, 31
        %s204 = scalar_select %p203, %s200, 31
        %s205 = smul.addr %s202, 32
        %s206 = sadd.s32 %s204, %s205
        %s207 = smul.addr %s206, 2
        %s208 = scalar_lea.vmem %s3, %s207
        %s209 = smul.u32 32, %s22
        %s210 = smul.u32 32, %s22
        %p211 = scmp.lt.s32.totalorder %s21, 1
        %s212 = scalar_select %p211, %s21, 1
        %p213 = scmp.lt.s32.totalorder %s210, 31
        %s214 = scalar_select %p213, %s210, 31
        %s215 = smul.addr %s212, 32
        %s216 = sadd.s32 %s214, %s215
        %s217 = smul.addr %s216, 2
        %s218 = scalar_lea.vmem %s3, %s217
        %s219 = smul.u32 32, %s22
        %v220 = vld [vmem:[%s182] sm:$0xff]
        %v221 = vld [vmem:[%s182 + $0x8] sm:$0xff]
        %v222 = vld [vmem:[%s182 + $0x10] sm:$0xff]
        %v223 = vld [vmem:[%s182 + $0x18] sm:$0xff]
        %v224 = vld [vmem:[%s182 + $0x20] sm:$0xff]
        %v225 = vld [vmem:[%s182 + $0x28] sm:$0xff]
        %v226 = vld [vmem:[%s182 + $0x30] sm:$0xff]
        %v227 = vld [vmem:[%s182 + $0x38] sm:$0xff]
        %v228 = vld [vmem:[%s182 + $0x40] sm:$0xff]
        %v229 = vld [vmem:[%s182 + $0x48] sm:$0xff]
        %v230 = vld [vmem:[%s182 + $0x50] sm:$0xff]
        %v231 = vld [vmem:[%s182 + $0x58] sm:$0xff]
        %v232 = vld [vmem:[%s182 + $0x60] sm:$0xff]
        %v233 = vld [vmem:[%s182 + $0x68] sm:$0xff]
        %v234 = vld [vmem:[%s182 + $0x70] sm:$0xff]
        %v235 = vld [vmem:[%s182 + $0x78] sm:$0xff]
        %v236 = vld [vmem:[%s182 + $0x80] sm:$0xff]
        %v237 = vld [vmem:[%s182 + $0x88] sm:$0xff]
        %v238 = vld [vmem:[%s182 + $0x90] sm:$0xff]
        %v239 = vld [vmem:[%s182 + $0x98] sm:$0xff]
        %v240 = vld [vmem:[%s182 + $0xa0] sm:$0xff]
        %v241 = vld [vmem:[%s182 + $0xa8] sm:$0xff]
        %v242 = vld [vmem:[%s182 + $0xb0] sm:$0xff]
        %v243 = vld [vmem:[%s182 + $0xb8] sm:$0xff]
        %v244 = vld [vmem:[%s182 + $0xc0] sm:$0xff]
        %v245 = vld [vmem:[%s182 + $0xc8] sm:$0xff]
        %v246 = vld [vmem:[%s182 + $0xd0] sm:$0xff]
        %v247 = vld [vmem:[%s182 + $0xd8] sm:$0xff]
        %v248 = vld [vmem:[%s182 + $0xe0] sm:$0xff]
        %v249 = vld [vmem:[%s182 + $0xe8] sm:$0xff]
        %v250 = vld [vmem:[%s182 + $0xf0] sm:$0xff]
        %v251 = vld [vmem:[%s182 + $0xf8] sm:$0xff]
        %v252 = vld [vmem:[%s182 + $0x100] sm:$0xff]
        %v253 = vld [vmem:[%s182 + $0x108] sm:$0xff]
        %v254 = vld [vmem:[%s182 + $0x110] sm:$0xff]
        %v255 = vld [vmem:[%s182 + $0x118] sm:$0xff]
        %v256 = vld [vmem:[%s182 + $0x120] sm:$0xff]
        %v257 = vld [vmem:[%s182 + $0x128] sm:$0xff]
        %v258 = vld [vmem:[%s182 + $0x130] sm:$0xff]
        %v259 = vld [vmem:[%s182 + $0x138] sm:$0xff]
        %v260 = vld [vmem:[%s182 + $0x140] sm:$0xff]
        %v261 = vld [vmem:[%s182 + $0x148] sm:$0xff]
        %v262 = vld [vmem:[%s182 + $0x150] sm:$0xff]
        %v263 = vld [vmem:[%s182 + $0x158] sm:$0xff]
        %v264 = vld [vmem:[%s182 + $0x160] sm:$0xff]
        %v265 = vld [vmem:[%s182 + $0x168] sm:$0xff]
        %v266 = vld [vmem:[%s182 + $0x170] sm:$0xff]
        %v267 = vld [vmem:[%s182 + $0x178] sm:$0xff]
        %v268 = vld [vmem:[%s182 + $0x180] sm:$0xff]
        %v269 = vld [vmem:[%s182 + $0x188] sm:$0xff]
        %v270 = vld [vmem:[%s182 + $0x190] sm:$0xff]
        %v271 = vld [vmem:[%s182 + $0x198] sm:$0xff]
        %v272 = vld [vmem:[%s182 + $0x1a0] sm:$0xff]
        %v273 = vld [vmem:[%s182 + $0x1a8] sm:$0xff]
        %v274 = vld [vmem:[%s182 + $0x1b0] sm:$0xff]
        %v275 = vld [vmem:[%s182 + $0x1b8] sm:$0xff]
        %v276 = vld [vmem:[%s182 + $0x1c0] sm:$0xff]
        %v277 = vld [vmem:[%s182 + $0x1c8] sm:$0xff]
        %v278 = vld [vmem:[%s182 + $0x1d0] sm:$0xff]
        %v279 = vld [vmem:[%s182 + $0x1d8] sm:$0xff]
        %v280 = vld [vmem:[%s182 + $0x1e0] sm:$0xff]
        %v281 = vld [vmem:[%s182 + $0x1e8] sm:$0xff]
        %v282 = vld [vmem:[%s182 + $0x1f0] sm:$0xff]
        %v283 = vld [vmem:[%s182 + $0x1f8] sm:$0xff]
        %v284 = vld [vmem:[%s1] sm:$0xff]
        %v285 = vld [vmem:[%s1 + $0x8] sm:$0xff]
        %vm286 = vcmask 130048
        %v288 = vsel %vm286, %v220, 0
        %v291 = vsel %vm286, %v221, 0
        %v294 = vsel %vm286, %v222, 0
        %v297 = vsel %vm286, %v223, 0
        %v300 = vsel %vm286, %v224, 0
        %v303 = vsel %vm286, %v225, 0
        %v306 = vsel %vm286, %v226, 0
        %v309 = vsel %vm286, %v227, 0
        %v312 = vsel %vm286, %v228, 0
        %v315 = vsel %vm286, %v229, 0
        %v318 = vsel %vm286, %v230, 0
        %v321 = vsel %vm286, %v231, 0
        %v324 = vsel %vm286, %v232, 0
        %v327 = vsel %vm286, %v233, 0
        %v330 = vsel %vm286, %v234, 0
        %v333 = vsel %vm286, %v235, 0
        %v336 = vsel %vm286, %v236, 0
        %v339 = vsel %vm286, %v237, 0
        %v342 = vsel %vm286, %v238, 0
        %v345 = vsel %vm286, %v239, 0
        %v348 = vsel %vm286, %v240, 0
        %v351 = vsel %vm286, %v241, 0
        %v354 = vsel %vm286, %v242, 0
        %v357 = vsel %vm286, %v243, 0
        %v360 = vsel %vm286, %v244, 0
        %v363 = vsel %vm286, %v245, 0
        %v366 = vsel %vm286, %v246, 0
        %v369 = vsel %vm286, %v247, 0
        %v372 = vsel %vm286, %v248, 0
        %v375 = vsel %vm286, %v249, 0
        %v378 = vsel %vm286, %v250, 0
        %v381 = vsel %vm286, %v251, 0
        %v384 = vsel %vm286, %v252, 0
        %v387 = vsel %vm286, %v253, 0
        %v390 = vsel %vm286, %v254, 0
        %v393 = vsel %vm286, %v255, 0
        %v396 = vsel %vm286, %v256, 0
        %v399 = vsel %vm286, %v257, 0
        %v402 = vsel %vm286, %v258, 0
        %v405 = vsel %vm286, %v259, 0
        %v408 = vsel %vm286, %v260, 0
        %v411 = vsel %vm286, %v261, 0
        %v414 = vsel %vm286, %v262, 0
        %v417 = vsel %vm286, %v263, 0
        %v420 = vsel %vm286, %v264, 0
        %v423 = vsel %vm286, %v265, 0
        %v426 = vsel %vm286, %v266, 0
        %v429 = vsel %vm286, %v267, 0
        %v432 = vsel %vm286, %v268, 0
        %v435 = vsel %vm286, %v269, 0
        %v438 = vsel %vm286, %v270, 0
        %v441 = vsel %vm286, %v271, 0
        %v444 = vsel %vm286, %v272, 0
        %v447 = vsel %vm286, %v273, 0
        %v450 = vsel %vm286, %v274, 0
        %v453 = vsel %vm286, %v275, 0
        %v456 = vsel %vm286, %v276, 0
        %v459 = vsel %vm286, %v277, 0
        %v462 = vsel %vm286, %v278, 0
        %v465 = vsel %vm286, %v279, 0
        %v468 = vsel %vm286, %v280, 0
        %v471 = vsel %vm286, %v281, 0
        %v474 = vsel %vm286, %v282, 0
        %v477 = vsel %vm286, %v283, 0
        %479 = vmatprep.subr.mxu0 0.0
        %480 = vmatpush1.msra.mxu0 %v284
        %481 = vmatprep.subr.mxu0 0.0
        %482 = vmatpush1.msra.mxu0 %v285
        %483 = vmatprep.subr.mxu0 0.0
        %484 = vmatpush1.msra.mxu0 0.0
        %485 = vmatprep.subr.mxu0 0.0
        %486 = vmatpush1.msra.mxu0 0.0
        %487 = vmatprep.subr.mxu0 0.0
        %488 = vmatpush1.msra.mxu0 0.0
        %489 = vmatprep.subr.mxu0 0.0
        %490 = vmatpush1.msra.mxu0 0.0
        %491 = vmatprep.subr.mxu0 0.0
        %492 = vmatpush1.msra.mxu0 0.0
        %493 = vmatprep.subr.mxu0 0.0
        %494 = vmatpush1.msra.mxu0 0.0
        %495 = vmatprep.subr.mxu0 0.0
        %496 = vmatpush1.msra.mxu0 0.0
        %497 = vmatprep.subr.mxu0 0.0
        %498 = vmatpush1.msra.mxu0 0.0
        %499 = vmatprep.subr.mxu0 0.0
        %500 = vmatpush1.msra.mxu0 0.0
        %501 = vmatprep.subr.mxu0 0.0
        %502 = vmatpush1.msra.mxu0 0.0
        %503 = vmatprep.subr.mxu0 0.0
        %504 = vmatpush1.msra.mxu0 0.0
        %505 = vmatprep.subr.mxu0 0.0
        %506 = vmatpush1.msra.mxu0 0.0
        %507 = vmatprep.subr.mxu0 0.0
        %508 = vmatpush1.msra.mxu0 0.0
        %509 = vmatprep.subr.mxu0 0.0
        %510 = vmatpush1.msra.mxu0 0.0
        %511 = vmatprep.subr.mxu0 0.0
        %512 = vmatpush1.msra.mxu0 0.0
        %513 = vmatprep.subr.mxu0 0.0
        %514 = vmatpush1.msra.mxu0 0.0
        %515 = vmatprep.subr.mxu0 0.0
        %516 = vmatpush1.msra.mxu0 0.0
        %517 = vmatprep.subr.mxu0 0.0
        %518 = vmatpush1.msra.mxu0 0.0
        %519 = vmatprep.subr.mxu0 0.0
        %520 = vmatpush1.msra.mxu0 0.0
        %521 = vmatprep.subr.mxu0 0.0
        %522 = vmatpush1.msra.mxu0 0.0
        %523 = vmatprep.subr.mxu0 0.0
        %524 = vmatpush1.msra.mxu0 0.0
        %525 = vmatprep.subr.mxu0 0.0
        %526 = vmatpush1.msra.mxu0 0.0
        %527 = vmatprep.subr.mxu0 0.0
        %528 = vmatpush1.msra.mxu0 0.0
        %529 = vmatprep.subr.mxu0 0.0
        %530 = vmatpush1.msra.mxu0 0.0
        %531 = vmatprep.subr.mxu0 0.0
        %532 = vmatpush1.msra.mxu0 0.0
        %533 = vmatprep.subr.mxu0 0.0
        %534 = vmatpush1.msra.mxu0 0.0
        %535 = vmatprep.subr.mxu0 0.0
        %536 = vmatpush1.msra.mxu0 0.0
        %537 = vmatprep.subr.mxu0 0.0
        %538 = vmatpush1.msra.mxu0 0.0
        %539 = vmatprep.subr.mxu0 0.0
        %540 = vmatpush1.msra.mxu0 0.0
        %541 = vmatprep.subr.mxu0 0.0
        %542 = vmatpush1.msra.mxu0 0.0
        %543 = vmatprep.mubr.f32.mxu0 0.0
        %544 = vmatmul.mubr.f32.gmra.mrb[0].mxu0 %v288
        %v545 = vpop.f32.mrb[0].mxu0
        %v546 = vadd.f32 0.0, %v545
        %v547 = vpop.f32.mrb[0].mxu0
        %548 = vmatprep.mubr.f32.mxu0 0.0
        %549 = vmatmul.mubr.f32.gmra.mrb[0].mxu0 %v291
        %v550 = vpop.f32.mrb[0].mxu0
        %v551 = vadd.f32 0.0, %v550
        %v552 = vpop.f32.mrb[0].mxu0
        %553 = vmatprep.mubr.f32.mxu0 0.0
        %554 = vmatmul.mubr.f32.gmra.mrb[0].mxu0 %v294
        %v555 = vpop.f32.mrb[0].mxu0
        %v556 = vadd.f32 0.0, %v555
        %v557 = vpop.f32.mrb[0].mxu0
        %558 = vmatprep.mubr.f32.mxu0 0.0
        %559 = vmatmul.mubr.f32.gmra.mrb[0].mxu0 %v297
        %v560 = vpop.f32.mrb[0].mxu0
        %v561 = vadd.f32 0.0, %v560
        %v562 = vpop.f32.mrb[0].mxu0
        %563 = vmatprep.mubr.f32.mxu0 0.0
        %564 = vmatmul.mubr.f32.gmra.mrb[0].mxu0 %v300
        %v565 = vpop.f32.mrb[0].mxu0
        %v566 = vadd.f32 0.0, %v565
        %v567 = vpop.f32.mrb[0].mxu0
        %568 = vmatprep.mubr.f32.mxu0 0.0
        %569 = vmatmul.mubr.f32.gmra.mrb[0].mxu0 %v303
        %v570 = vpop.f32.mrb[0].mxu0
        %v571 = vadd.f32 0.0, %v570
        %v572 = vpop.f32.mrb[0].mxu0
        %573 = vmatprep.mubr.f32.mxu0 0.0
        %574 = vmatmul.mubr.f32.gmra.mrb[0].mxu0 %v306
        %v575 = vpop.f32.mrb[0].mxu0
        %v576 = vadd.f32 0.0, %v575
        %v577 = vpop.f32.mrb[0].mxu0
        %578 = vmatprep.mubr.f32.mxu0 0.0
        %579 = vmatmul.mubr.f32.gmra.mrb[0].mxu0 %v309
        %v580 = vpop.f32.mrb[0].mxu0
        %v581 = vadd.f32 0.0, %v580
        %v582 = vpop.f32.mrb[0].mxu0
        %583 = vmatprep.mubr.f32.mxu0 0.0
        %584 = vmatmul.mubr.f32.gmra.mrb[0].mxu0 %v312
        %v585 = vpop.f32.mrb[0].mxu0
        %v586 = vadd.f32 0.0, %v585
        %v587 = vpop.f32.mrb[0].mxu0
        %588 = vmatprep.mubr.f32.mxu0 0.0
        %589 = vmatmul.mubr.f32.gmra.mrb[0].mxu0 %v315
        %v590 = vpop.f32.mrb[0].mxu0
        %v591 = vadd.f32 0.0, %v590
        %v592 = vpop.f32.mrb[0].mxu0
        %593 = vmatprep.mubr.f32.mxu0 0.0
        %594 = vmatmul.mubr.f32.gmra.mrb[0].mxu0 %v318
        %v595 = vpop.f32.mrb[0].mxu0
        %v596 = vadd.f32 0.0, %v595
        %v597 = vpop.f32.mrb[0].mxu0
        %598 = vmatprep.mubr.f32.mxu0 0.0
        %599 = vmatmul.mubr.f32.gmra.mrb[0].mxu0 %v321
        %v600 = vpop.f32.mrb[0].mxu0
        %v601 = vadd.f32 0.0, %v600
        %v602 = vpop.f32.mrb[0].mxu0
        %603 = vmatprep.mubr.f32.mxu0 0.0
        %604 = vmatmul.mubr.f32.gmra.mrb[0].mxu0 %v324
        %v605 = vpop.f32.mrb[0].mxu0
        %v606 = vadd.f32 0.0, %v605
        %v607 = vpop.f32.mrb[0].mxu0
        %608 = vmatprep.mubr.f32.mxu0 0.0
        %609 = vmatmul.mubr.f32.gmra.mrb[0].mxu0 %v327
        %v610 = vpop.f32.mrb[0].mxu0
        %v611 = vadd.f32 0.0, %v610
        %v612 = vpop.f32.mrb[0].mxu0
        %613 = vmatprep.mubr.f32.mxu0 0.0
        %614 = vmatmul.mubr.f32.gmra.mrb[0].mxu0 %v330
        %v615 = vpop.f32.mrb[0].mxu0
        %v616 = vadd.f32 0.0, %v615
        %v617 = vpop.f32.mrb[0].mxu0
        %618 = vmatprep.mubr.f32.mxu0 0.0
        %619 = vmatmul.mubr.f32.gmra.mrb[0].mxu0 %v333
        %v620 = vpop.f32.mrb[0].mxu0
        %v621 = vadd.f32 0.0, %v620
        %v622 = vpop.f32.mrb[0].mxu0
        %623 = vmatprep.mubr.f32.mxu0 0.0
        %624 = vmatmul.mubr.f32.gmra.mrb[0].mxu0 %v336
        %v625 = vpop.f32.mrb[0].mxu0
        %v626 = vadd.f32 0.0, %v625
        %v627 = vpop.f32.mrb[0].mxu0
        %628 = vmatprep.mubr.f32.mxu0 0.0
        %629 = vmatmul.mubr.f32.gmra.mrb[0].mxu0 %v339
        %v630 = vpop.f32.mrb[0].mxu0
        %v631 = vadd.f32 0.0, %v630
        %v632 = vpop.f32.mrb[0].mxu0
        %633 = vmatprep.mubr.f32.mxu0 0.0
        %634 = vmatmul.mubr.f32.gmra.mrb[0].mxu0 %v342
        %v635 = vpop.f32.mrb[0].mxu0
        %v636 = vadd.f32 0.0, %v635
        %v637 = vpop.f32.mrb[0].mxu0
        %638 = vmatprep.mubr.f32.mxu0 0.0
        %639 = vmatmul.mubr.f32.gmra.mrb[0].mxu0 %v345
        %v640 = vpop.f32.mrb[0].mxu0
        %v641 = vadd.f32 0.0, %v640
        %v642 = vpop.f32.mrb[0].mxu0
        %643 = vmatprep.mubr.f32.mxu0 0.0
        %644 = vmatmul.mubr.f32.gmra.mrb[0].mxu0 %v348
        %v645 = vpop.f32.mrb[0].mxu0
        %v646 = vadd.f32 0.0, %v645
        %v647 = vpop.f32.mrb[0].mxu0
        %648 = vmatprep.mubr.f32.mxu0 0.0
        %649 = vmatmul.mubr.f32.gmra.mrb[0].mxu0 %v351
        %v650 = vpop.f32.mrb[0].mxu0
        %v651 = vadd.f32 0.0, %v650
        %v652 = vpop.f32.mrb[0].mxu0
        %653 = vmatprep.mubr.f32.mxu0 0.0
        %654 = vmatmul.mubr.f32.gmra.mrb[0].mxu0 %v354
        %v655 = vpop.f32.mrb[0].mxu0
        %v656 = vadd.f32 0.0, %v655
        %v657 = vpop.f32.mrb[0].mxu0
        %658 = vmatprep.mubr.f32.mxu0 0.0
        %659 = vmatmul.mubr.f32.gmra.mrb[0].mxu0 %v357
        %v660 = vpop.f32.mrb[0].mxu0
        %v661 = vadd.f32 0.0, %v660
        %v662 = vpop.f32.mrb[0].mxu0
        %663 = vmatprep.mubr.f32.mxu0 0.0
        %664 = vmatmul.mubr.f32.gmra.mrb[0].mxu0 %v360
        %v665 = vpop.f32.mrb[0].mxu0
        %v666 = vadd.f32 0.0, %v665
        %v667 = vpop.f32.mrb[0].mxu0
        %668 = vmatprep.mubr.f32.mxu0 0.0
        %669 = vmatmul.mubr.f32.gmra.mrb[0].mxu0 %v363
        %v670 = vpop.f32.mrb[0].mxu0
        %v671 = vadd.f32 0.0, %v670
        %v672 = vpop.f32.mrb[0].mxu0
        %673 = vmatprep.mubr.f32.mxu0 0.0
        %674 = vmatmul.mubr.f32.gmra.mrb[0].mxu0 %v366
        %v675 = vpop.f32.mrb[0].mxu0
        %v676 = vadd.f32 0.0, %v675
        %v677 = vpop.f32.mrb[0].mxu0
        %678 = vmatprep.mubr.f32.mxu0 0.0
        %679 = vmatmul.mubr.f32.gmra.mrb[0].mxu0 %v369
        %v680 = vpop.f32.mrb[0].mxu0
        %v681 = vadd.f32 0.0, %v680
        %v682 = vpop.f32.mrb[0].mxu0
        %683 = vmatprep.mubr.f32.mxu0 0.0
        %684 = vmatmul.mubr.f32.gmra.mrb[0].mxu0 %v372
        %v685 = vpop.f32.mrb[0].mxu0
        %v686 = vadd.f32 0.0, %v685
        %v687 = vpop.f32.mrb[0].mxu0
        %688 = vmatprep.mubr.f32.mxu0 0.0
        %689 = vmatmul.mubr.f32.gmra.mrb[0].mxu0 %v375
        %v690 = vpop.f32.mrb[0].mxu0
        %v691 = vadd.f32 0.0, %v690
        %v692 = vpop.f32.mrb[0].mxu0
        %693 = vmatprep.mubr.f32.mxu0 0.0
        %694 = vmatmul.mubr.f32.gmra.mrb[0].mxu0 %v378
        %v695 = vpop.f32.mrb[0].mxu0
        %v696 = vadd.f32 0.0, %v695
        %v697 = vpop.f32.mrb[0].mxu0
        %698 = vmatprep.mubr.f32.mxu0 0.0
        %699 = vmatmul.mubr.f32.gmra.mrb[0].mxu0 %v381
        %v700 = vpop.f32.mrb[0].mxu0
        %v701 = vadd.f32 0.0, %v700
        %v702 = vpop.f32.mrb[0].mxu0
        %703 = vmatprep.mubr.f32.mxu0 0.0
        %704 = vmatmul.mubr.f32.gmra.mrb[0].mxu0 %v384
        %v705 = vpop.f32.mrb[0].mxu0
        %v706 = vadd.f32 0.0, %v705
        %v707 = vpop.f32.mrb[0].mxu0
        %708 = vmatprep.mubr.f32.mxu0 0.0
        %709 = vmatmul.mubr.f32.gmra.mrb[0].mxu0 %v387
        %v710 = vpop.f32.mrb[0].mxu0
        %v711 = vadd.f32 0.0, %v710
        %v712 = vpop.f32.mrb[0].mxu0
        %713 = vmatprep.mubr.f32.mxu0 0.0
        %714 = vmatmul.mubr.f32.gmra.mrb[0].mxu0 %v390
        %v715 = vpop.f32.mrb[0].mxu0
        %v716 = vadd.f32 0.0, %v715
        %v717 = vpop.f32.mrb[0].mxu0
        %718 = vmatprep.mubr.f32.mxu0 0.0
        %719 = vmatmul.mubr.f32.gmra.mrb[0].mxu0 %v393
        %v720 = vpop.f32.mrb[0].mxu0
        %v721 = vadd.f32 0.0, %v720
        %v722 = vpop.f32.mrb[0].mxu0
        %723 = vmatprep.mubr.f32.mxu0 0.0
        %724 = vmatmul.mubr.f32.gmra.mrb[0].mxu0 %v396
        %v725 = vpop.f32.mrb[0].mxu0
        %v726 = vadd.f32 0.0, %v725
        %v727 = vpop.f32.mrb[0].mxu0
        %728 = vmatprep.mubr.f32.mxu0 0.0
        %729 = vmatmul.mubr.f32.gmra.mrb[0].mxu0 %v399
        %v730 = vpop.f32.mrb[0].mxu0
        %v731 = vadd.f32 0.0, %v730
        %v732 = vpop.f32.mrb[0].mxu0
        %733 = vmatprep.mubr.f32.mxu0 0.0
        %734 = vmatmul.mubr.f32.gmra.mrb[0].mxu0 %v402
        %v735 = vpop.f32.mrb[0].mxu0
        %v736 = vadd.f32 0.0, %v735
        %v737 = vpop.f32.mrb[0].mxu0
        %738 = vmatprep.mubr.f32.mxu0 0.0
        %739 = vmatmul.mubr.f32.gmra.mrb[0].mxu0 %v405
        %v740 = vpop.f32.mrb[0].mxu0
        %v741 = vadd.f32 0.0, %v740
        %v742 = vpop.f32.mrb[0].mxu0
        %743 = vmatprep.mubr.f32.mxu0 0.0
        %744 = vmatmul.mubr.f32.gmra.mrb[0].mxu0 %v408
        %v745 = vpop.f32.mrb[0].mxu0
        %v746 = vadd.f32 0.0, %v745
        %v747 = vpop.f32.mrb[0].mxu0
        %748 = vmatprep.mubr.f32.mxu0 0.0
        %749 = vmatmul.mubr.f32.gmra.mrb[0].mxu0 %v411
        %v750 = vpop.f32.mrb[0].mxu0
        %v751 = vadd.f32 0.0, %v750
        %v752 = vpop.f32.mrb[0].mxu0
        %753 = vmatprep.mubr.f32.mxu0 0.0
        %754 = vmatmul.mubr.f32.gmra.mrb[0].mxu0 %v414
        %v755 = vpop.f32.mrb[0].mxu0
        %v756 = vadd.f32 0.0, %v755
        %v757 = vpop.f32.mrb[0].mxu0
        %758 = vmatprep.mubr.f32.mxu0 0.0
        %759 = vmatmul.mubr.f32.gmra.mrb[0].mxu0 %v417
        %v760 = vpop.f32.mrb[0].mxu0
        %v761 = vadd.f32 0.0, %v760
        %v762 = vpop.f32.mrb[0].mxu0
        %763 = vmatprep.mubr.f32.mxu0 0.0
        %764 = vmatmul.mubr.f32.gmra.mrb[0].mxu0 %v420
        %v765 = vpop.f32.mrb[0].mxu0
        %v766 = vadd.f32 0.0, %v765
        %v767 = vpop.f32.mrb[0].mxu0
        %768 = vmatprep.mubr.f32.mxu0 0.0
        %769 = vmatmul.mubr.f32.gmra.mrb[0].mxu0 %v423
        %v770 = vpop.f32.mrb[0].mxu0
        %v771 = vadd.f32 0.0, %v770
        %v772 = vpop.f32.mrb[0].mxu0
        %773 = vmatprep.mubr.f32.mxu0 0.0
        %774 = vmatmul.mubr.f32.gmra.mrb[0].mxu0 %v426
        %v775 = vpop.f32.mrb[0].mxu0
        %v776 = vadd.f32 0.0, %v775
        %v777 = vpop.f32.mrb[0].mxu0
        %778 = vmatprep.mubr.f32.mxu0 0.0
        %779 = vmatmul.mubr.f32.gmra.mrb[0].mxu0 %v429
        %v780 = vpop.f32.mrb[0].mxu0
        %v781 = vadd.f32 0.0, %v780
        %v782 = vpop.f32.mrb[0].mxu0
        %783 = vmatprep.mubr.f32.mxu0 0.0
        %784 = vmatmul.mubr.f32.gmra.mrb[0].mxu0 %v432
        %v785 = vpop.f32.mrb[0].mxu0
        %v786 = vadd.f32 0.0, %v785
        %v787 = vpop.f32.mrb[0].mxu0
        %788 = vmatprep.mubr.f32.mxu0 0.0
        %789 = vmatmul.mubr.f32.gmra.mrb[0].mxu0 %v435
        %v790 = vpop.f32.mrb[0].mxu0
        %v791 = vadd.f32 0.0, %v790
        %v792 = vpop.f32.mrb[0].mxu0
        %793 = vmatprep.mubr.f32.mxu0 0.0
        %794 = vmatmul.mubr.f32.gmra.mrb[0].mxu0 %v438
        %v795 = vpop.f32.mrb[0].mxu0
        %v796 = vadd.f32 0.0, %v795
        %v797 = vpop.f32.mrb[0].mxu0
        %798 = vmatprep.mubr.f32.mxu0 0.0
        %799 = vmatmul.mubr.f32.gmra.mrb[0].mxu0 %v441
        %v800 = vpop.f32.mrb[0].mxu0
        %v801 = vadd.f32 0.0, %v800
        %v802 = vpop.f32.mrb[0].mxu0
        %803 = vmatprep.mubr.f32.mxu0 0.0
        %804 = vmatmul.mubr.f32.gmra.mrb[0].mxu0 %v444
        %v805 = vpop.f32.mrb[0].mxu0
        %v806 = vadd.f32 0.0, %v805
        %v807 = vpop.f32.mrb[0].mxu0
        %808 = vmatprep.mubr.f32.mxu0 0.0
        %809 = vmatmul.mubr.f32.gmra.mrb[0].mxu0 %v447
        %v810 = vpop.f32.mrb[0].mxu0
        %v811 = vadd.f32 0.0, %v810
        %v812 = vpop.f32.mrb[0].mxu0
        %813 = vmatprep.mubr.f32.mxu0 0.0
        %814 = vmatmul.mubr.f32.gmra.mrb[0].mxu0 %v450
        %v815 = vpop.f32.mrb[0].mxu0
        %v816 = vadd.f32 0.0, %v815
        %v817 = vpop.f32.mrb[0].mxu0
        %818 = vmatprep.mubr.f32.mxu0 0.0
        %819 = vmatmul.mubr.f32.gmra.mrb[0].mxu0 %v453
        %v820 = vpop.f32.mrb[0].mxu0
        %v821 = vadd.f32 0.0, %v820
        %v822 = vpop.f32.mrb[0].mxu0
        %823 = vmatprep.mubr.f32.mxu0 0.0
        %824 = vmatmul.mubr.f32.gmra.mrb[0].mxu0 %v456
        %v825 = vpop.f32.mrb[0].mxu0
        %v826 = vadd.f32 0.0, %v825
        %v827 = vpop.f32.mrb[0].mxu0
        %828 = vmatprep.mubr.f32.mxu0 0.0
        %829 = vmatmul.mubr.f32.gmra.mrb[0].mxu0 %v459
        %v830 = vpop.f32.mrb[0].mxu0
        %v831 = vadd.f32 0.0, %v830
        %v832 = vpop.f32.mrb[0].mxu0
        %833 = vmatprep.mubr.f32.mxu0 0.0
        %834 = vmatmul.mubr.f32.gmra.mrb[0].mxu0 %v462
        %v835 = vpop.f32.mrb[0].mxu0
        %v836 = vadd.f32 0.0, %v835
        %v837 = vpop.f32.mrb[0].mxu0
        %838 = vmatprep.mubr.f32.mxu0 0.0
        %839 = vmatmul.mubr.f32.gmra.mrb[0].mxu0 %v465
        %v840 = vpop.f32.mrb[0].mxu0
        %v841 = vadd.f32 0.0, %v840
        %v842 = vpop.f32.mrb[0].mxu0
        %843 = vmatprep.mubr.f32.mxu0 0.0
        %844 = vmatmul.mubr.f32.gmra.mrb[0].mxu0 %v468
        %v845 = vpop.f32.mrb[0].mxu0
        %v846 = vadd.f32 0.0, %v845
        %v847 = vpop.f32.mrb[0].mxu0
        %848 = vmatprep.mubr.f32.mxu0 0.0
        %849 = vmatmul.mubr.f32.gmra.mrb[0].mxu0 %v471
        %v850 = vpop.f32.mrb[0].mxu0
        %v851 = vadd.f32 0.0, %v850
        %v852 = vpop.f32.mrb[0].mxu0
        %853 = vmatprep.mubr.f32.mxu0 0.0
        %854 = vmatmul.mubr.f32.gmra.mrb[0].mxu0 %v474
        %v855 = vpop.f32.mrb[0].mxu0
        %v856 = vadd.f32 0.0, %v855
        %v857 = vpop.f32.mrb[0].mxu0
        %858 = vmatprep.mubr.f32.mxu0 0.0
        %859 = vmatmul.mubr.f32.gmra.mrb[0].mxu0 %v477
        %v860 = vpop.f32.mrb[0].mxu0
        %v861 = vadd.f32 0.0, %v860
        %v862 = vpop.f32.mrb[0].mxu0
        %863 = vdwg.mxu0
        %v864 = vld [vmem:[%s2] sm:$0x3]
        %v866 = vsel %vm286, %v864, 0
        %868 = vmatprep.subr.mxu0 0.0
        %869 = vmatpush1.msra.mxu0 %v546
        %870 = vmatprep.subr.mxu0 0.0
        %871 = vmatpush1.msra.mxu0 %v551
        %872 = vmatprep.subr.mxu0 0.0
        %873 = vmatpush1.msra.mxu0 0.0
        %874 = vmatprep.subr.mxu0 0.0
        %875 = vmatpush1.msra.mxu0 0.0
        %876 = vmatprep.subr.mxu0 0.0
        %877 = vmatpush1.msra.mxu0 0.0
        %878 = vmatprep.subr.mxu0 0.0
        %879 = vmatpush1.msra.mxu0 0.0
        %880 = vmatprep.subr.mxu0 0.0
        %881 = vmatpush1.msra.mxu0 0.0
        %882 = vmatprep.subr.mxu0 0.0
        %883 = vmatpush1.msra.mxu0 0.0
        %884 = vmatprep.subr.mxu0 0.0
        %885 = vmatpush1.msra.mxu0 0.0
        %886 = vmatprep.subr.mxu0 0.0
        %887 = vmatpush1.msra.mxu0 0.0
        %888 = vmatprep.subr.mxu0 0.0
        %889 = vmatpush1.msra.mxu0 0.0
        %890 = vmatprep.subr.mxu0 0.0
        %891 = vmatpush1.msra.mxu0 0.0
        %892 = vmatprep.subr.mxu0 0.0
        %893 = vmatpush1.msra.mxu0 0.0
        %894 = vmatprep.subr.mxu0 0.0
        %895 = vmatpush1.msra.mxu0 0.0
        %896 = vmatprep.subr.mxu0 0.0
        %897 = vmatpush1.msra.mxu0 0.0
        %898 = vmatprep.subr.mxu0 0.0
        %899 = vmatpush1.msra.mxu0 0.0
        %900 = vmatprep.subr.mxu0 0.0
        %901 = vmatpush1.msra.mxu0 0.0
        %902 = vmatprep.subr.mxu0 0.0
        %903 = vmatpush1.msra.mxu0 0.0
        %904 = vmatprep.subr.mxu0 0.0
        %905 = vmatpush1.msra.mxu0 0.0
        %906 = vmatprep.subr.mxu0 0.0
        %907 = vmatpush1.msra.mxu0 0.0
        %908 = vmatprep.subr.mxu0 0.0
        %909 = vmatpush1.msra.mxu0 0.0
        %910 = vmatprep.subr.mxu0 0.0
        %911 = vmatpush1.msra.mxu0 0.0
        %912 = vmatprep.subr.mxu0 0.0
        %913 = vmatpush1.msra.mxu0 0.0
        %914 = vmatprep.subr.mxu0 0.0
        %915 = vmatpush1.msra.mxu0 0.0
        %916 = vmatprep.subr.mxu0 0.0
        %917 = vmatpush1.msra.mxu0 0.0
        %918 = vmatprep.subr.mxu0 0.0
        %919 = vmatpush1.msra.mxu0 0.0
        %920 = vmatprep.subr.mxu0 0.0
        %921 = vmatpush1.msra.mxu0 0.0
        %922 = vmatprep.subr.mxu0 0.0
        %923 = vmatpush1.msra.mxu0 0.0
        %924 = vmatprep.subr.mxu0 0.0
        %925 = vmatpush1.msra.mxu0 0.0
        %926 = vmatprep.subr.mxu0 0.0
        %927 = vmatpush1.msra.mxu0 0.0
        %928 = vmatprep.subr.mxu0 0.0
        %929 = vmatpush1.msra.mxu0 0.0
        %930 = vmatprep.subr.mxu0 0.0
        %931 = vmatpush1.msra.mxu0 0.0
        %932 = vmatprep.mubr.f32.mxu0 0.0
        %933 = vmatmul.mubr.f32.gmra.mrb[0].mxu0 %v866
        %v934 = vpop.f32.mrb[0].mxu0
        %v935 = vadd.f32 0.0, %v934
        %v936 = vpop.f32.mrb[0].mxu0
        %937 = vdwg.mxu0
        %938 = vmatprep.subr.mxu0 0.0
        %939 = vmatpush1.msra.mxu0 %v556
        %940 = vmatprep.subr.mxu0 0.0
        %941 = vmatpush1.msra.mxu0 %v561
        %942 = vmatprep.subr.mxu0 0.0
        %943 = vmatpush1.msra.mxu0 0.0
        %944 = vmatprep.subr.mxu0 0.0
        %945 = vmatpush1.msra.mxu0 0.0
        %946 = vmatprep.subr.mxu0 0.0
        %947 = vmatpush1.msra.mxu0 0.0
        %948 = vmatprep.subr.mxu0 0.0
        %949 = vmatpush1.msra.mxu0 0.0
        %950 = vmatprep.subr.mxu0 0.0
        %951 = vmatpush1.msra.mxu0 0.0
        %952 = vmatprep.subr.mxu0 0.0
        %953 = vmatpush1.msra.mxu0 0.0
        %954 = vmatprep.subr.mxu0 0.0
        %955 = vmatpush1.msra.mxu0 0.0
        %956 = vmatprep.subr.mxu0 0.0
        %957 = vmatpush1.msra.mxu0 0.0
        %958 = vmatprep.subr.mxu0 0.0
        %959 = vmatpush1.msra.mxu0 0.0
        %960 = vmatprep.subr.mxu0 0.0
        %961 = vmatpush1.msra.mxu0 0.0
        %962 = vmatprep.subr.mxu0 0.0
        %963 = vmatpush1.msra.mxu0 0.0
        %964 = vmatprep.subr.mxu0 0.0
        %965 = vmatpush1.msra.mxu0 0.0
        %966 = vmatprep.subr.mxu0 0.0
        %967 = vmatpush1.msra.mxu0 0.0
        %968 = vmatprep.subr.mxu0 0.0
        %969 = vmatpush1.msra.mxu0 0.0
        %970 = vmatprep.subr.mxu0 0.0
        %971 = vmatpush1.msra.mxu0 0.0
        %972 = vmatprep.subr.mxu0 0.0
        %973 = vmatpush1.msra.mxu0 0.0
        %974 = vmatprep.subr.mxu0 0.0
        %975 = vmatpush1.msra.mxu0 0.0
        %976 = vmatprep.subr.mxu0 0.0
        %977 = vmatpush1.msra.mxu0 0.0
        %978 = vmatprep.subr.mxu0 0.0
        %979 = vmatpush1.msra.mxu0 0.0
        %980 = vmatprep.subr.mxu0 0.0
        %981 = vmatpush1.msra.mxu0 0.0
        %982 = vmatprep.subr.mxu0 0.0
        %983 = vmatpush1.msra.mxu0 0.0
        %984 = vmatprep.subr.mxu0 0.0
        %985 = vmatpush1.msra.mxu0 0.0
        %986 = vmatprep.subr.mxu0 0.0
        %987 = vmatpush1.msra.mxu0 0.0
        %988 = vmatprep.subr.mxu0 0.0
        %989 = vmatpush1.msra.mxu0 0.0
        %990 = vmatprep.subr.mxu0 0.0
        %991 = vmatpush1.msra.mxu0 0.0
        %992 = vmatprep.subr.mxu0 0.0
        %993 = vmatpush1.msra.mxu0 0.0
        %994 = vmatprep.subr.mxu0 0.0
        %995 = vmatpush1.msra.mxu0 0.0
        %996 = vmatprep.subr.mxu0 0.0
        %997 = vmatpush1.msra.mxu0 0.0
        %998 = vmatprep.subr.mxu0 0.0
        %999 = vmatpush1.msra.mxu0 0.0
        %1000 = vmatprep.subr.mxu0 0.0
        %1001 = vmatpush1.msra.mxu0 0.0
        %1002 = vmatprep.mubr.f32.mxu0 0.0
        %1003 = vmatmul.mubr.f32.gmra.mrb[0].mxu0 %v866
        %v1004 = vpop.f32.mrb[0].mxu0
        %v1005 = vadd.f32 0.0, %v1004
        %v1006 = vpop.f32.mrb[0].mxu0
        %1007 = vdwg.mxu0
        %1008 = vmatprep.subr.mxu0 0.0
        %1009 = vmatpush1.msra.mxu0 %v566
        %1010 = vmatprep.subr.mxu0 0.0
        %1011 = vmatpush1.msra.mxu0 %v571
        %1012 = vmatprep.subr.mxu0 0.0
        %1013 = vmatpush1.msra.mxu0 0.0
        %1014 = vmatprep.subr.mxu0 0.0
        %1015 = vmatpush1.msra.mxu0 0.0
        %1016 = vmatprep.subr.mxu0 0.0
        %1017 = vmatpush1.msra.mxu0 0.0
        %1018 = vmatprep.subr.mxu0 0.0
        %1019 = vmatpush1.msra.mxu0 0.0
        %1020 = vmatprep.subr.mxu0 0.0
        %1021 = vmatpush1.msra.mxu0 0.0
        %1022 = vmatprep.subr.mxu0 0.0
        %1023 = vmatpush1.msra.mxu0 0.0
        %1024 = vmatprep.subr.mxu0 0.0
        %1025 = vmatpush1.msra.mxu0 0.0
        %1026 = vmatprep.subr.mxu0 0.0
        %1027 = vmatpush1.msra.mxu0 0.0
        %1028 = vmatprep.subr.mxu0 0.0
        %1029 = vmatpush1.msra.mxu0 0.0
        %1030 = vmatprep.subr.mxu0 0.0
        %1031 = vmatpush1.msra.mxu0 0.0
        %1032 = vmatprep.subr.mxu0 0.0
        %1033 = vmatpush1.msra.mxu0 0.0
        %1034 = vmatprep.subr.mxu0 0.0
        %1035 = vmatpush1.msra.mxu0 0.0
        %1036 = vmatprep.subr.mxu0 0.0
        %1037 = vmatpush1.msra.mxu0 0.0
        %1038 = vmatprep.subr.mxu0 0.0
        %1039 = vmatpush1.msra.mxu0 0.0
        %1040 = vmatprep.subr.mxu0 0.0
        %1041 = vmatpush1.msra.mxu0 0.0
        %1042 = vmatprep.subr.mxu0 0.0
        %1043 = vmatpush1.msra.mxu0 0.0
        %1044 = vmatprep.subr.mxu0 0.0
        %1045 = vmatpush1.msra.mxu0 0.0
        %1046 = vmatprep.subr.mxu0 0.0
        %1047 = vmatpush1.msra.mxu0 0.0
        %1048 = vmatprep.subr.mxu0 0.0
        %1049 = vmatpush1.msra.mxu0 0.0
        %1050 = vmatprep.subr.mxu0 0.0
        %1051 = vmatpush1.msra.mxu0 0.0
        %1052 = vmatprep.subr.mxu0 0.0
        %1053 = vmatpush1.msra.mxu0 0.0
        %1054 = vmatprep.subr.mxu0 0.0
        %1055 = vmatpush1.msra.mxu0 0.0
        %1056 = vmatprep.subr.mxu0 0.0
        %1057 = vmatpush1.msra.mxu0 0.0
        %1058 = vmatprep.subr.mxu0 0.0
        %1059 = vmatpush1.msra.mxu0 0.0
        %1060 = vmatprep.subr.mxu0 0.0
        %1061 = vmatpush1.msra.mxu0 0.0
        %1062 = vmatprep.subr.mxu0 0.0
        %1063 = vmatpush1.msra.mxu0 0.0
        %1064 = vmatprep.subr.mxu0 0.0
        %1065 = vmatpush1.msra.mxu0 0.0
        %1066 = vmatprep.subr.mxu0 0.0
        %1067 = vmatpush1.msra.mxu0 0.0
        %1068 = vmatprep.subr.mxu0 0.0
        %1069 = vmatpush1.msra.mxu0 0.0
        %1070 = vmatprep.subr.mxu0 0.0
        %1071 = vmatpush1.msra.mxu0 0.0
        %1072 = vmatprep.mubr.f32.mxu0 0.0
        %1073 = vmatmul.mubr.f32.gmra.mrb[0].mxu0 %v866
        %v1074 = vpop.f32.mrb[0].mxu0
        %v1075 = vadd.f32 0.0, %v1074
        %v1076 = vpop.f32.mrb[0].mxu0
        %1077 = vdwg.mxu0
        %1078 = vmatprep.subr.mxu0 0.0
        %1079 = vmatpush1.msra.mxu0 %v576
        %1080 = vmatprep.subr.mxu0 0.0
        %1081 = vmatpush1.msra.mxu0 %v581
        %1082 = vmatprep.subr.mxu0 0.0
        %1083 = vmatpush1.msra.mxu0 0.0
        %1084 = vmatprep.subr.mxu0 0.0
        %1085 = vmatpush1.msra.mxu0 0.0
        %1086 = vmatprep.subr.mxu0 0.0
        %1087 = vmatpush1.msra.mxu0 0.0
        %1088 = vmatprep.subr.mxu0 0.0
        %1089 = vmatpush1.msra.mxu0 0.0
        %1090 = vmatprep.subr.mxu0 0.0
        %1091 = vmatpush1.msra.mxu0 0.0
        %1092 = vmatprep.subr.mxu0 0.0
        %1093 = vmatpush1.msra.mxu0 0.0
        %1094 = vmatprep.subr.mxu0 0.0
        %1095 = vmatpush1.msra.mxu0 0.0
        %1096 = vmatprep.subr.mxu0 0.0
        %1097 = vmatpush1.msra.mxu0 0.0
        %1098 = vmatprep.subr.mxu0 0.0
        %1099 = vmatpush1.msra.mxu0 0.0
        %1100 = vmatprep.subr.mxu0 0.0
        %1101 = vmatpush1.msra.mxu0 0.0
        %1102 = vmatprep.subr.mxu0 0.0
        %1103 = vmatpush1.msra.mxu0 0.0
        %1104 = vmatprep.subr.mxu0 0.0
        %1105 = vmatpush1.msra.mxu0 0.0
        %1106 = vmatprep.subr.mxu0 0.0
        %1107 = vmatpush1.msra.mxu0 0.0
        %1108 = vmatprep.subr.mxu0 0.0
        %1109 = vmatpush1.msra.mxu0 0.0
        %1110 = vmatprep.subr.mxu0 0.0
        %1111 = vmatpush1.msra.mxu0 0.0
        %1112 = vmatprep.subr.mxu0 0.0
        %1113 = vmatpush1.msra.mxu0 0.0
        %1114 = vmatprep.subr.mxu0 0.0
        %1115 = vmatpush1.msra.mxu0 0.0
        %1116 = vmatprep.subr.mxu0 0.0
        %1117 = vmatpush1.msra.mxu0 0.0
        %1118 = vmatprep.subr.mxu0 0.0
        %1119 = vmatpush1.msra.mxu0 0.0
        %1120 = vmatprep.subr.mxu0 0.0
        %1121 = vmatpush1.msra.mxu0 0.0
        %1122 = vmatprep.subr.mxu0 0.0
        %1123 = vmatpush1.msra.mxu0 0.0
        %1124 = vmatprep.subr.mxu0 0.0
        %1125 = vmatpush1.msra.mxu0 0.0
        %1126 = vmatprep.subr.mxu0 0.0
        %1127 = vmatpush1.msra.mxu0 0.0
        %1128 = vmatprep.subr.mxu0 0.0
        %1129 = vmatpush1.msra.mxu0 0.0
        %1130 = vmatprep.subr.mxu0 0.0
        %1131 = vmatpush1.msra.mxu0 0.0
        %1132 = vmatprep.subr.mxu0 0.0
        %1133 = vmatpush1.msra.mxu0 0.0
        %1134 = vmatprep.subr.mxu0 0.0
        %1135 = vmatpush1.msra.mxu0 0.0
        %1136 = vmatprep.subr.mxu0 0.0
        %1137 = vmatpush1.msra.mxu0 0.0
        %1138 = vmatprep.subr.mxu0 0.0
        %1139 = vmatpush1.msra.mxu0 0.0
        %1140 = vmatprep.subr.mxu0 0.0
        %1141 = vmatpush1.msra.mxu0 0.0
        %1142 = vmatprep.mubr.f32.mxu0 0.0
        %1143 = vmatmul.mubr.f32.gmra.mrb[0].mxu0 %v866
        %v1144 = vpop.f32.mrb[0].mxu0
        %v1145 = vadd.f32 0.0, %v1144
        %v1146 = vpop.f32.mrb[0].mxu0
        %1147 = vdwg.mxu0
        %1148 = vmatprep.subr.mxu0 0.0
        %1149 = vmatpush1.msra.mxu0 %v586
        %1150 = vmatprep.subr.mxu0 0.0
        %1151 = vmatpush1.msra.mxu0 %v591
        %1152 = vmatprep.subr.mxu0 0.0
        %1153 = vmatpush1.msra.mxu0 0.0
        %1154 = vmatprep.subr.mxu0 0.0
        %1155 = vmatpush1.msra.mxu0 0.0
        %1156 = vmatprep.subr.mxu0 0.0
        %1157 = vmatpush1.msra.mxu0 0.0
        %1158 = vmatprep.subr.mxu0 0.0
        %1159 = vmatpush1.msra.mxu0 0.0
        %1160 = vmatprep.subr.mxu0 0.0
        %1161 = vmatpush1.msra.mxu0 0.0
        %1162 = vmatprep.subr.mxu0 0.0
        %1163 = vmatpush1.msra.mxu0 0.0
        %1164 = vmatprep.subr.mxu0 0.0
        %1165 = vmatpush1.msra.mxu0 0.0
        %1166 = vmatprep.subr.mxu0 0.0
        %1167 = vmatpush1.msra.mxu0 0.0
        %1168 = vmatprep.subr.mxu0 0.0
        %1169 = vmatpush1.msra.mxu0 0.0
        %1170 = vmatprep.subr.mxu0 0.0
        %1171 = vmatpush1.msra.mxu0 0.0
        %1172 = vmatprep.subr.mxu0 0.0
        %1173 = vmatpush1.msra.mxu0 0.0
        %1174 = vmatprep.subr.mxu0 0.0
        %1175 = vmatpush1.msra.mxu0 0.0
        %1176 = vmatprep.subr.mxu0 0.0
        %1177 = vmatpush1.msra.mxu0 0.0
        %1178 = vmatprep.subr.mxu0 0.0
        %1179 = vmatpush1.msra.mxu0 0.0
        %1180 = vmatprep.subr.mxu0 0.0
        %1181 = vmatpush1.msra.mxu0 0.0
        %1182 = vmatprep.subr.mxu0 0.0
        %1183 = vmatpush1.msra.mxu0 0.0
        %1184 = vmatprep.subr.mxu0 0.0
        %1185 = vmatpush1.msra.mxu0 0.0
        %1186 = vmatprep.subr.mxu0 0.0
        %1187 = vmatpush1.msra.mxu0 0.0
        %1188 = vmatprep.subr.mxu0 0.0
        %1189 = vmatpush1.msra.mxu0 0.0
        %1190 = vmatprep.subr.mxu0 0.0
        %1191 = vmatpush1.msra.mxu0 0.0
        %1192 = vmatprep.subr.mxu0 0.0
        %1193 = vmatpush1.msra.mxu0 0.0
        %1194 = vmatprep.subr.mxu0 0.0
        %1195 = vmatpush1.msra.mxu0 0.0
        %1196 = vmatprep.subr.mxu0 0.0
        %1197 = vmatpush1.msra.mxu0 0.0
        %1198 = vmatprep.subr.mxu0 0.0
        %1199 = vmatpush1.msra.mxu0 0.0
        %1200 = vmatprep.subr.mxu0 0.0
        %1201 = vmatpush1.msra.mxu0 0.0
        %1202 = vmatprep.subr.mxu0 0.0
        %1203 = vmatpush1.msra.mxu0 0.0
        %1204 = vmatprep.subr.mxu0 0.0
        %1205 = vmatpush1.msra.mxu0 0.0
        %1206 = vmatprep.subr.mxu0 0.0
        %1207 = vmatpush1.msra.mxu0 0.0
        %1208 = vmatprep.subr.mxu0 0.0
        %1209 = vmatpush1.msra.mxu0 0.0
        %1210 = vmatprep.subr.mxu0 0.0
        %1211 = vmatpush1.msra.mxu0 0.0
        %1212 = vmatprep.mubr.f32.mxu0 0.0
        %1213 = vmatmul.mubr.f32.gmra.mrb[0].mxu0 %v866
        %v1214 = vpop.f32.mrb[0].mxu0
        %v1215 = vadd.f32 0.0, %v1214
        %v1216 = vpop.f32.mrb[0].mxu0
        %1217 = vdwg.mxu0
        %1218 = vmatprep.subr.mxu0 0.0
        %1219 = vmatpush1.msra.mxu0 %v596
        %1220 = vmatprep.subr.mxu0 0.0
        %1221 = vmatpush1.msra.mxu0 %v601
        %1222 = vmatprep.subr.mxu0 0.0
        %1223 = vmatpush1.msra.mxu0 0.0
        %1224 = vmatprep.subr.mxu0 0.0
        %1225 = vmatpush1.msra.mxu0 0.0
        %1226 = vmatprep.subr.mxu0 0.0
        %1227 = vmatpush1.msra.mxu0 0.0
        %1228 = vmatprep.subr.mxu0 0.0
        %1229 = vmatpush1.msra.mxu0 0.0
        %1230 = vmatprep.subr.mxu0 0.0
        %1231 = vmatpush1.msra.mxu0 0.0
        %1232 = vmatprep.subr.mxu0 0.0
        %1233 = vmatpush1.msra.mxu0 0.0
        %1234 = vmatprep.subr.mxu0 0.0
        %1235 = vmatpush1.msra.mxu0 0.0
        %1236 = vmatprep.subr.mxu0 0.0
        %1237 = vmatpush1.msra.mxu0 0.0
        %1238 = vmatprep.subr.mxu0 0.0
        %1239 = vmatpush1.msra.mxu0 0.0
        %1240 = vmatprep.subr.mxu0 0.0
        %1241 = vmatpush1.msra.mxu0 0.0
        %1242 = vmatprep.subr.mxu0 0.0
        %1243 = vmatpush1.msra.mxu0 0.0
        %1244 = vmatprep.subr.mxu0 0.0
        %1245 = vmatpush1.msra.mxu0 0.0
        %1246 = vmatprep.subr.mxu0 0.0
        %1247 = vmatpush1.msra.mxu0 0.0
        %1248 = vmatprep.subr.mxu0 0.0
        %1249 = vmatpush1.msra.mxu0 0.0
        %1250 = vmatprep.subr.mxu0 0.0
        %1251 = vmatpush1.msra.mxu0 0.0
        %1252 = vmatprep.subr.mxu0 0.0
        %1253 = vmatpush1.msra.mxu0 0.0
        %1254 = vmatprep.subr.mxu0 0.0
        %1255 = vmatpush1.msra.mxu0 0.0
        %1256 = vmatprep.subr.mxu0 0.0
        %1257 = vmatpush1.msra.mxu0 0.0
        %1258 = vmatprep.subr.mxu0 0.0
        %1259 = vmatpush1.msra.mxu0 0.0
        %1260 = vmatprep.subr.mxu0 0.0
        %1261 = vmatpush1.msra.mxu0 0.0
        %1262 = vmatprep.subr.mxu0 0.0
        %1263 = vmatpush1.msra.mxu0 0.0
        %1264 = vmatprep.subr.mxu0 0.0
        %1265 = vmatpush1.msra.mxu0 0.0
        %1266 = vmatprep.subr.mxu0 0.0
        %1267 = vmatpush1.msra.mxu0 0.0
        %1268 = vmatprep.subr.mxu0 0.0
        %1269 = vmatpush1.msra.mxu0 0.0
        %1270 = vmatprep.subr.mxu0 0.0
        %1271 = vmatpush1.msra.mxu0 0.0
        %1272 = vmatprep.subr.mxu0 0.0
        %1273 = vmatpush1.msra.mxu0 0.0
        %1274 = vmatprep.subr.mxu0 0.0
        %1275 = vmatpush1.msra.mxu0 0.0
        %1276 = vmatprep.subr.mxu0 0.0
        %1277 = vmatpush1.msra.mxu0 0.0
        %1278 = vmatprep.subr.mxu0 0.0
        %1279 = vmatpush1.msra.mxu0 0.0
        %1280 = vmatprep.subr.mxu0 0.0
        %1281 = vmatpush1.msra.mxu0 0.0
        %1282 = vmatprep.mubr.f32.mxu0 0.0
        %1283 = vmatmul.mubr.f32.gmra.mrb[0].mxu0 %v866
        %v1284 = vpop.f32.mrb[0].mxu0
        %v1285 = vadd.f32 0.0, %v1284
        %v1286 = vpop.f32.mrb[0].mxu0
        %1287 = vdwg.mxu0
        %1288 = vmatprep.subr.mxu0 0.0
        %1289 = vmatpush1.msra.mxu0 %v606
        %1290 = vmatprep.subr.mxu0 0.0
        %1291 = vmatpush1.msra.mxu0 %v611
        %1292 = vmatprep.subr.mxu0 0.0
        %1293 = vmatpush1.msra.mxu0 0.0
        %1294 = vmatprep.subr.mxu0 0.0
        %1295 = vmatpush1.msra.mxu0 0.0
        %1296 = vmatprep.subr.mxu0 0.0
        %1297 = vmatpush1.msra.mxu0 0.0
        %1298 = vmatprep.subr.mxu0 0.0
        %1299 = vmatpush1.msra.mxu0 0.0
        %1300 = vmatprep.subr.mxu0 0.0
        %1301 = vmatpush1.msra.mxu0 0.0
        %1302 = vmatprep.subr.mxu0 0.0
        %1303 = vmatpush1.msra.mxu0 0.0
        %1304 = vmatprep.subr.mxu0 0.0
        %1305 = vmatpush1.msra.mxu0 0.0
        %1306 = vmatprep.subr.mxu0 0.0
        %1307 = vmatpush1.msra.mxu0 0.0
        %1308 = vmatprep.subr.mxu0 0.0
        %1309 = vmatpush1.msra.mxu0 0.0
        %1310 = vmatprep.subr.mxu0 0.0
        %1311 = vmatpush1.msra.mxu0 0.0
        %1312 = vmatprep.subr.mxu0 0.0
        %1313 = vmatpush1.msra.mxu0 0.0
        %1314 = vmatprep.subr.mxu0 0.0
        %1315 = vmatpush1.msra.mxu0 0.0
        %1316 = vmatprep.subr.mxu0 0.0
        %1317 = vmatpush1.msra.mxu0 0.0
        %1318 = vmatprep.subr.mxu0 0.0
        %1319 = vmatpush1.msra.mxu0 0.0
        %1320 = vmatprep.subr.mxu0 0.0
        %1321 = vmatpush1.msra.mxu0 0.0
        %1322 = vmatprep.subr.mxu0 0.0
        %1323 = vmatpush1.msra.mxu0 0.0
        %1324 = vmatprep.subr.mxu0 0.0
        %1325 = vmatpush1.msra.mxu0 0.0
        %1326 = vmatprep.subr.mxu0 0.0
        %1327 = vmatpush1.msra.mxu0 0.0
        %1328 = vmatprep.subr.mxu0 0.0
        %1329 = vmatpush1.msra.mxu0 0.0
        %1330 = vmatprep.subr.mxu0 0.0
        %1331 = vmatpush1.msra.mxu0 0.0
        %1332 = vmatprep.subr.mxu0 0.0
        %1333 = vmatpush1.msra.mxu0 0.0
        %1334 = vmatprep.subr.mxu0 0.0
        %1335 = vmatpush1.msra.mxu0 0.0
        %1336 = vmatprep.subr.mxu0 0.0
        %1337 = vmatpush1.msra.mxu0 0.0
        %1338 = vmatprep.subr.mxu0 0.0
        %1339 = vmatpush1.msra.mxu0 0.0
        %1340 = vmatprep.subr.mxu0 0.0
        %1341 = vmatpush1.msra.mxu0 0.0
        %1342 = vmatprep.subr.mxu0 0.0
        %1343 = vmatpush1.msra.mxu0 0.0
        %1344 = vmatprep.subr.mxu0 0.0
        %1345 = vmatpush1.msra.mxu0 0.0
        %1346 = vmatprep.subr.mxu0 0.0
        %1347 = vmatpush1.msra.mxu0 0.0
        %1348 = vmatprep.subr.mxu0 0.0
        %1349 = vmatpush1.msra.mxu0 0.0
        %1350 = vmatprep.subr.mxu0 0.0
        %1351 = vmatpush1.msra.mxu0 0.0
        %1352 = vmatprep.mubr.f32.mxu0 0.0
        %1353 = vmatmul.mubr.f32.gmra.mrb[0].mxu0 %v866
        %v1354 = vpop.f32.mrb[0].mxu0
        %v1355 = vadd.f32 0.0, %v1354
        %v1356 = vpop.f32.mrb[0].mxu0
        %1357 = vdwg.mxu0
        %1358 = vmatprep.subr.mxu0 0.0
        %1359 = vmatpush1.msra.mxu0 %v616
        %1360 = vmatprep.subr.mxu0 0.0
        %1361 = vmatpush1.msra.mxu0 %v621
        %1362 = vmatprep.subr.mxu0 0.0
        %1363 = vmatpush1.msra.mxu0 0.0
        %1364 = vmatprep.subr.mxu0 0.0
        %1365 = vmatpush1.msra.mxu0 0.0
        %1366 = vmatprep.subr.mxu0 0.0
        %1367 = vmatpush1.msra.mxu0 0.0
        %1368 = vmatprep.subr.mxu0 0.0
        %1369 = vmatpush1.msra.mxu0 0.0
        %1370 = vmatprep.subr.mxu0 0.0
        %1371 = vmatpush1.msra.mxu0 0.0
        %1372 = vmatprep.subr.mxu0 0.0
        %1373 = vmatpush1.msra.mxu0 0.0
        %1374 = vmatprep.subr.mxu0 0.0
        %1375 = vmatpush1.msra.mxu0 0.0
        %1376 = vmatprep.subr.mxu0 0.0
        %1377 = vmatpush1.msra.mxu0 0.0
        %1378 = vmatprep.subr.mxu0 0.0
        %1379 = vmatpush1.msra.mxu0 0.0
        %1380 = vmatprep.subr.mxu0 0.0
        %1381 = vmatpush1.msra.mxu0 0.0
        %1382 = vmatprep.subr.mxu0 0.0
        %1383 = vmatpush1.msra.mxu0 0.0
        %1384 = vmatprep.subr.mxu0 0.0
        %1385 = vmatpush1.msra.mxu0 0.0
        %1386 = vmatprep.subr.mxu0 0.0
        %1387 = vmatpush1.msra.mxu0 0.0
        %1388 = vmatprep.subr.mxu0 0.0
        %1389 = vmatpush1.msra.mxu0 0.0
        %1390 = vmatprep.subr.mxu0 0.0
        %1391 = vmatpush1.msra.mxu0 0.0
        %1392 = vmatprep.subr.mxu0 0.0
        %1393 = vmatpush1.msra.mxu0 0.0
        %1394 = vmatprep.subr.mxu0 0.0
        %1395 = vmatpush1.msra.mxu0 0.0
        %1396 = vmatprep.subr.mxu0 0.0
        %1397 = vmatpush1.msra.mxu0 0.0
        %1398 = vmatprep.subr.mxu0 0.0
        %1399 = vmatpush1.msra.mxu0 0.0
        %1400 = vmatprep.subr.mxu0 0.0
        %1401 = vmatpush1.msra.mxu0 0.0
        %1402 = vmatprep.subr.mxu0 0.0
        %1403 = vmatpush1.msra.mxu0 0.0
        %1404 = vmatprep.subr.mxu0 0.0
        %1405 = vmatpush1.msra.mxu0 0.0
        %1406 = vmatprep.subr.mxu0 0.0
        %1407 = vmatpush1.msra.mxu0 0.0
        %1408 = vmatprep.subr.mxu0 0.0
        %1409 = vmatpush1.msra.mxu0 0.0
        %1410 = vmatprep.subr.mxu0 0.0
        %1411 = vmatpush1.msra.mxu0 0.0
        %1412 = vmatprep.subr.mxu0 0.0
        %1413 = vmatpush1.msra.mxu0 0.0
        %1414 = vmatprep.subr.mxu0 0.0
        %1415 = vmatpush1.msra.mxu0 0.0
        %1416 = vmatprep.subr.mxu0 0.0
        %1417 = vmatpush1.msra.mxu0 0.0
        %1418 = vmatprep.subr.mxu0 0.0
        %1419 = vmatpush1.msra.mxu0 0.0
        %1420 = vmatprep.subr.mxu0 0.0
        %1421 = vmatpush1.msra.mxu0 0.0
        %1422 = vmatprep.mubr.f32.mxu0 0.0
        %1423 = vmatmul.mubr.f32.gmra.mrb[0].mxu0 %v866
        %v1424 = vpop.f32.mrb[0].mxu0
        %v1425 = vadd.f32 0.0, %v1424
        %v1426 = vpop.f32.mrb[0].mxu0
        %1427 = vdwg.mxu0
        %1428 = vmatprep.subr.mxu0 0.0
        %1429 = vmatpush1.msra.mxu0 %v626
        %1430 = vmatprep.subr.mxu0 0.0
        %1431 = vmatpush1.msra.mxu0 %v631
        %1432 = vmatprep.subr.mxu0 0.0
        %1433 = vmatpush1.msra.mxu0 0.0
        %1434 = vmatprep.subr.mxu0 0.0
        %1435 = vmatpush1.msra.mxu0 0.0
        %1436 = vmatprep.subr.mxu0 0.0
        %1437 = vmatpush1.msra.mxu0 0.0
        %1438 = vmatprep.subr.mxu0 0.0
        %1439 = vmatpush1.msra.mxu0 0.0
        %1440 = vmatprep.subr.mxu0 0.0
        %1441 = vmatpush1.msra.mxu0 0.0
        %1442 = vmatprep.subr.mxu0 0.0
        %1443 = vmatpush1.msra.mxu0 0.0
        %1444 = vmatprep.subr.mxu0 0.0
        %1445 = vmatpush1.msra.mxu0 0.0
        %1446 = vmatprep.subr.mxu0 0.0
        %1447 = vmatpush1.msra.mxu0 0.0
        %1448 = vmatprep.subr.mxu0 0.0
        %1449 = vmatpush1.msra.mxu0 0.0
        %1450 = vmatprep.subr.mxu0 0.0
        %1451 = vmatpush1.msra.mxu0 0.0
        %1452 = vmatprep.subr.mxu0 0.0
        %1453 = vmatpush1.msra.mxu0 0.0
        %1454 = vmatprep.subr.mxu0 0.0
        %1455 = vmatpush1.msra.mxu0 0.0
        %1456 = vmatprep.subr.mxu0 0.0
        %1457 = vmatpush1.msra.mxu0 0.0
        %1458 = vmatprep.subr.mxu0 0.0
        %1459 = vmatpush1.msra.mxu0 0.0
        %1460 = vmatprep.subr.mxu0 0.0
        %1461 = vmatpush1.msra.mxu0 0.0
        %1462 = vmatprep.subr.mxu0 0.0
        %1463 = vmatpush1.msra.mxu0 0.0
        %1464 = vmatprep.subr.mxu0 0.0
        %1465 = vmatpush1.msra.mxu0 0.0
        %1466 = vmatprep.subr.mxu0 0.0
        %1467 = vmatpush1.msra.mxu0 0.0
        %1468 = vmatprep.subr.mxu0 0.0
        %1469 = vmatpush1.msra.mxu0 0.0
        %1470 = vmatprep.subr.mxu0 0.0
        %1471 = vmatpush1.msra.mxu0 0.0
        %1472 = vmatprep.subr.mxu0 0.0
        %1473 = vmatpush1.msra.mxu0 0.0
        %1474 = vmatprep.subr.mxu0 0.0
        %1475 = vmatpush1.msra.mxu0 0.0
        %1476 = vmatprep.subr.mxu0 0.0
        %1477 = vmatpush1.msra.mxu0 0.0
        %1478 = vmatprep.subr.mxu0 0.0
        %1479 = vmatpush1.msra.mxu0 0.0
        %1480 = vmatprep.subr.mxu0 0.0
        %1481 = vmatpush1.msra.mxu0 0.0
        %1482 = vmatprep.subr.mxu0 0.0
        %1483 = vmatpush1.msra.mxu0 0.0
        %1484 = vmatprep.subr.mxu0 0.0
        %1485 = vmatpush1.msra.mxu0 0.0
        %1486 = vmatprep.subr.mxu0 0.0
        %1487 = vmatpush1.msra.mxu0 0.0
        %1488 = vmatprep.subr.mxu0 0.0
        %1489 = vmatpush1.msra.mxu0 0.0
        %1490 = vmatprep.subr.mxu0 0.0
        %1491 = vmatpush1.msra.mxu0 0.0
        %1492 = vmatprep.mubr.f32.mxu0 0.0
        %1493 = vmatmul.mubr.f32.gmra.mrb[0].mxu0 %v866
        %v1494 = vpop.f32.mrb[0].mxu0
        %v1495 = vadd.f32 0.0, %v1494
        %v1496 = vpop.f32.mrb[0].mxu0
        %1497 = vdwg.mxu0
        %1498 = vmatprep.subr.mxu0 0.0
        %1499 = vmatpush1.msra.mxu0 %v636
        %1500 = vmatprep.subr.mxu0 0.0
        %1501 = vmatpush1.msra.mxu0 %v641
        %1502 = vmatprep.subr.mxu0 0.0
        %1503 = vmatpush1.msra.mxu0 0.0
        %1504 = vmatprep.subr.mxu0 0.0
        %1505 = vmatpush1.msra.mxu0 0.0
        %1506 = vmatprep.subr.mxu0 0.0
        %1507 = vmatpush1.msra.mxu0 0.0
        %1508 = vmatprep.subr.mxu0 0.0
        %1509 = vmatpush1.msra.mxu0 0.0
        %1510 = vmatprep.subr.mxu0 0.0
        %1511 = vmatpush1.msra.mxu0 0.0
        %1512 = vmatprep.subr.mxu0 0.0
        %1513 = vmatpush1.msra.mxu0 0.0
        %1514 = vmatprep.subr.mxu0 0.0
        %1515 = vmatpush1.msra.mxu0 0.0
        %1516 = vmatprep.subr.mxu0 0.0
        %1517 = vmatpush1.msra.mxu0 0.0
        %1518 = vmatprep.subr.mxu0 0.0
        %1519 = vmatpush1.msra.mxu0 0.0
        %1520 = vmatprep.subr.mxu0 0.0
        %1521 = vmatpush1.msra.mxu0 0.0
        %1522 = vmatprep.subr.mxu0 0.0
        %1523 = vmatpush1.msra.mxu0 0.0
        %1524 = vmatprep.subr.mxu0 0.0
        %1525 = vmatpush1.msra.mxu0 0.0
        %1526 = vmatprep.subr.mxu0 0.0
        %1527 = vmatpush1.msra.mxu0 0.0
        %1528 = vmatprep.subr.mxu0 0.0
        %1529 = vmatpush1.msra.mxu0 0.0
        %1530 = vmatprep.subr.mxu0 0.0
        %1531 = vmatpush1.msra.mxu0 0.0
        %1532 = vmatprep.subr.mxu0 0.0
        %1533 = vmatpush1.msra.mxu0 0.0
        %1534 = vmatprep.subr.mxu0 0.0
        %1535 = vmatpush1.msra.mxu0 0.0
        %1536 = vmatprep.subr.mxu0 0.0
        %1537 = vmatpush1.msra.mxu0 0.0
        %1538 = vmatprep.subr.mxu0 0.0
        %1539 = vmatpush1.msra.mxu0 0.0
        %1540 = vmatprep.subr.mxu0 0.0
        %1541 = vmatpush1.msra.mxu0 0.0
        %1542 = vmatprep.subr.mxu0 0.0
        %1543 = vmatpush1.msra.mxu0 0.0
        %1544 = vmatprep.subr.mxu0 0.0
        %1545 = vmatpush1.msra.mxu0 0.0
        %1546 = vmatprep.subr.mxu0 0.0
        %1547 = vmatpush1.msra.mxu0 0.0
        %1548 = vmatprep.subr.mxu0 0.0
        %1549 = vmatpush1.msra.mxu0 0.0
        %1550 = vmatprep.subr.mxu0 0.0
        %1551 = vmatpush1.msra.mxu0 0.0
        %1552 = vmatprep.subr.mxu0 0.0
        %1553 = vmatpush1.msra.mxu0 0.0
        %1554 = vmatprep.subr.mxu0 0.0
        %1555 = vmatpush1.msra.mxu0 0.0
        %1556 = vmatprep.subr.mxu0 0.0
        %1557 = vmatpush1.msra.mxu0 0.0
        %1558 = vmatprep.subr.mxu0 0.0
        %1559 = vmatpush1.msra.mxu0 0.0
        %1560 = vmatprep.subr.mxu0 0.0
        %1561 = vmatpush1.msra.mxu0 0.0
        %1562 = vmatprep.mubr.f32.mxu0 0.0
        %1563 = vmatmul.mubr.f32.gmra.mrb[0].mxu0 %v866
        %v1564 = vpop.f32.mrb[0].mxu0
        %v1565 = vadd.f32 0.0, %v1564
        %v1566 = vpop.f32.mrb[0].mxu0
        %1567 = vdwg.mxu0
        %1568 = vmatprep.subr.mxu0 0.0
        %1569 = vmatpush1.msra.mxu0 %v646
        %1570 = vmatprep.subr.mxu0 0.0
        %1571 = vmatpush1.msra.mxu0 %v651
        %1572 = vmatprep.subr.mxu0 0.0
        %1573 = vmatpush1.msra.mxu0 0.0
        %1574 = vmatprep.subr.mxu0 0.0
        %1575 = vmatpush1.msra.mxu0 0.0
        %1576 = vmatprep.subr.mxu0 0.0
        %1577 = vmatpush1.msra.mxu0 0.0
        %1578 = vmatprep.subr.mxu0 0.0
        %1579 = vmatpush1.msra.mxu0 0.0
        %1580 = vmatprep.subr.mxu0 0.0
        %1581 = vmatpush1.msra.mxu0 0.0
        %1582 = vmatprep.subr.mxu0 0.0
        %1583 = vmatpush1.msra.mxu0 0.0
        %1584 = vmatprep.subr.mxu0 0.0
        %1585 = vmatpush1.msra.mxu0 0.0
        %1586 = vmatprep.subr.mxu0 0.0
        %1587 = vmatpush1.msra.mxu0 0.0
        %1588 = vmatprep.subr.mxu0 0.0
        %1589 = vmatpush1.msra.mxu0 0.0
        %1590 = vmatprep.subr.mxu0 0.0
        %1591 = vmatpush1.msra.mxu0 0.0
        %1592 = vmatprep.subr.mxu0 0.0
        %1593 = vmatpush1.msra.mxu0 0.0
        %1594 = vmatprep.subr.mxu0 0.0
        %1595 = vmatpush1.msra.mxu0 0.0
        %1596 = vmatprep.subr.mxu0 0.0
        %1597 = vmatpush1.msra.mxu0 0.0
        %1598 = vmatprep.subr.mxu0 0.0
        %1599 = vmatpush1.msra.mxu0 0.0
        %1600 = vmatprep.subr.mxu0 0.0
        %1601 = vmatpush1.msra.mxu0 0.0
        %1602 = vmatprep.subr.mxu0 0.0
        %1603 = vmatpush1.msra.mxu0 0.0
        %1604 = vmatprep.subr.mxu0 0.0
        %1605 = vmatpush1.msra.mxu0 0.0
        %1606 = vmatprep.subr.mxu0 0.0
        %1607 = vmatpush1.msra.mxu0 0.0
        %1608 = vmatprep.subr.mxu0 0.0
        %1609 = vmatpush1.msra.mxu0 0.0
        %1610 = vmatprep.subr.mxu0 0.0
        %1611 = vmatpush1.msra.mxu0 0.0
        %1612 = vmatprep.subr.mxu0 0.0
        %1613 = vmatpush1.msra.mxu0 0.0
        %1614 = vmatprep.subr.mxu0 0.0
        %1615 = vmatpush1.msra.mxu0 0.0
        %1616 = vmatprep.subr.mxu0 0.0
        %1617 = vmatpush1.msra.mxu0 0.0
        %1618 = vmatprep.subr.mxu0 0.0
        %1619 = vmatpush1.msra.mxu0 0.0
        %1620 = vmatprep.subr.mxu0 0.0
        %1621 = vmatpush1.msra.mxu0 0.0
        %1622 = vmatprep.subr.mxu0 0.0
        %1623 = vmatpush1.msra.mxu0 0.0
        %1624 = vmatprep.subr.mxu0 0.0
        %1625 = vmatpush1.msra.mxu0 0.0
        %1626 = vmatprep.subr.mxu0 0.0
        %1627 = vmatpush1.msra.mxu0 0.0
        %1628 = vmatprep.subr.mxu0 0.0
        %1629 = vmatpush1.msra.mxu0 0.0
        %1630 = vmatprep.subr.mxu0 0.0
        %1631 = vmatpush1.msra.mxu0 0.0
        %1632 = vmatprep.mubr.f32.mxu0 0.0
        %1633 = vmatmul.mubr.f32.gmra.mrb[0].mxu0 %v866
        %v1634 = vpop.f32.mrb[0].mxu0
        %v1635 = vadd.f32 0.0, %v1634
        %v1636 = vpop.f32.mrb[0].mxu0
        %1637 = vdwg.mxu0
        %1638 = vmatprep.subr.mxu0 0.0
        %1639 = vmatpush1.msra.mxu0 %v656
        %1640 = vmatprep.subr.mxu0 0.0
        %1641 = vmatpush1.msra.mxu0 %v661
        %1642 = vmatprep.subr.mxu0 0.0
        %1643 = vmatpush1.msra.mxu0 0.0
        %1644 = vmatprep.subr.mxu0 0.0
        %1645 = vmatpush1.msra.mxu0 0.0
        %1646 = vmatprep.subr.mxu0 0.0
        %1647 = vmatpush1.msra.mxu0 0.0
        %1648 = vmatprep.subr.mxu0 0.0
        %1649 = vmatpush1.msra.mxu0 0.0
        %1650 = vmatprep.subr.mxu0 0.0
        %1651 = vmatpush1.msra.mxu0 0.0
        %1652 = vmatprep.subr.mxu0 0.0
        %1653 = vmatpush1.msra.mxu0 0.0
        %1654 = vmatprep.subr.mxu0 0.0
        %1655 = vmatpush1.msra.mxu0 0.0
        %1656 = vmatprep.subr.mxu0 0.0
        %1657 = vmatpush1.msra.mxu0 0.0
        %1658 = vmatprep.subr.mxu0 0.0
        %1659 = vmatpush1.msra.mxu0 0.0
        %1660 = vmatprep.subr.mxu0 0.0
        %1661 = vmatpush1.msra.mxu0 0.0
        %1662 = vmatprep.subr.mxu0 0.0
        %1663 = vmatpush1.msra.mxu0 0.0
        %1664 = vmatprep.subr.mxu0 0.0
        %1665 = vmatpush1.msra.mxu0 0.0
        %1666 = vmatprep.subr.mxu0 0.0
        %1667 = vmatpush1.msra.mxu0 0.0
        %1668 = vmatprep.subr.mxu0 0.0
        %1669 = vmatpush1.msra.mxu0 0.0
        %1670 = vmatprep.subr.mxu0 0.0
        %1671 = vmatpush1.msra.mxu0 0.0
        %1672 = vmatprep.subr.mxu0 0.0
        %1673 = vmatpush1.msra.mxu0 0.0
        %1674 = vmatprep.subr.mxu0 0.0
        %1675 = vmatpush1.msra.mxu0 0.0
        %1676 = vmatprep.subr.mxu0 0.0
        %1677 = vmatpush1.msra.mxu0 0.0
        %1678 = vmatprep.subr.mxu0 0.0
        %1679 = vmatpush1.msra.mxu0 0.0
        %1680 = vmatprep.subr.mxu0 0.0
        %1681 = vmatpush1.msra.mxu0 0.0
        %1682 = vmatprep.subr.mxu0 0.0
        %1683 = vmatpush1.msra.mxu0 0.0
        %1684 = vmatprep.subr.mxu0 0.0
        %1685 = vmatpush1.msra.mxu0 0.0
        %1686 = vmatprep.subr.mxu0 0.0
        %1687 = vmatpush1.msra.mxu0 0.0
        %1688 = vmatprep.subr.mxu0 0.0
        %1689 = vmatpush1.msra.mxu0 0.0
        %1690 = vmatprep.subr.mxu0 0.0
        %1691 = vmatpush1.msra.mxu0 0.0
        %1692 = vmatprep.subr.mxu0 0.0
        %1693 = vmatpush1.msra.mxu0 0.0
        %1694 = vmatprep.subr.mxu0 0.0
        %1695 = vmatpush1.msra.mxu0 0.0
        %1696 = vmatprep.subr.mxu0 0.0
        %1697 = vmatpush1.msra.mxu0 0.0
        %1698 = vmatprep.subr.mxu0 0.0
        %1699 = vmatpush1.msra.mxu0 0.0
        %1700 = vmatprep.subr.mxu0 0.0
        %1701 = vmatpush1.msra.mxu0 0.0
        %1702 = vmatprep.mubr.f32.mxu0 0.0
        %1703 = vmatmul.mubr.f32.gmra.mrb[0].mxu0 %v866
        %v1704 = vpop.f32.mrb[0].mxu0
        %v1705 = vadd.f32 0.0, %v1704
        %v1706 = vpop.f32.mrb[0].mxu0
        %1707 = vdwg.mxu0
        %1708 = vmatprep.subr.mxu0 0.0
        %1709 = vmatpush1.msra.mxu0 %v666
        %1710 = vmatprep.subr.mxu0 0.0
        %1711 = vmatpush1.msra.mxu0 %v671
        %1712 = vmatprep.subr.mxu0 0.0
        %1713 = vmatpush1.msra.mxu0 0.0
        %1714 = vmatprep.subr.mxu0 0.0
        %1715 = vmatpush1.msra.mxu0 0.0
        %1716 = vmatprep.subr.mxu0 0.0
        %1717 = vmatpush1.msra.mxu0 0.0
        %1718 = vmatprep.subr.mxu0 0.0
        %1719 = vmatpush1.msra.mxu0 0.0
        %1720 = vmatprep.subr.mxu0 0.0
        %1721 = vmatpush1.msra.mxu0 0.0
        %1722 = vmatprep.subr.mxu0 0.0
        %1723 = vmatpush1.msra.mxu0 0.0
        %1724 = vmatprep.subr.mxu0 0.0
        %1725 = vmatpush1.msra.mxu0 0.0
        %1726 = vmatprep.subr.mxu0 0.0
        %1727 = vmatpush1.msra.mxu0 0.0
        %1728 = vmatprep.subr.mxu0 0.0
        %1729 = vmatpush1.msra.mxu0 0.0
        %1730 = vmatprep.subr.mxu0 0.0
        %1731 = vmatpush1.msra.mxu0 0.0
        %1732 = vmatprep.subr.mxu0 0.0
        %1733 = vmatpush1.msra.mxu0 0.0
        %1734 = vmatprep.subr.mxu0 0.0
        %1735 = vmatpush1.msra.mxu0 0.0
        %1736 = vmatprep.subr.mxu0 0.0
        %1737 = vmatpush1.msra.mxu0 0.0
        %1738 = vmatprep.subr.mxu0 0.0
        %1739 = vmatpush1.msra.mxu0 0.0
        %1740 = vmatprep.subr.mxu0 0.0
        %1741 = vmatpush1.msra.mxu0 0.0
        %1742 = vmatprep.subr.mxu0 0.0
        %1743 = vmatpush1.msra.mxu0 0.0
        %1744 = vmatprep.subr.mxu0 0.0
        %1745 = vmatpush1.msra.mxu0 0.0
        %1746 = vmatprep.subr.mxu0 0.0
        %1747 = vmatpush1.msra.mxu0 0.0
        %1748 = vmatprep.subr.mxu0 0.0
        %1749 = vmatpush1.msra.mxu0 0.0
        %1750 = vmatprep.subr.mxu0 0.0
        %1751 = vmatpush1.msra.mxu0 0.0
        %1752 = vmatprep.subr.mxu0 0.0
        %1753 = vmatpush1.msra.mxu0 0.0
        %1754 = vmatprep.subr.mxu0 0.0
        %1755 = vmatpush1.msra.mxu0 0.0
        %1756 = vmatprep.subr.mxu0 0.0
        %1757 = vmatpush1.msra.mxu0 0.0
        %1758 = vmatprep.subr.mxu0 0.0
        %1759 = vmatpush1.msra.mxu0 0.0
        %1760 = vmatprep.subr.mxu0 0.0
        %1761 = vmatpush1.msra.mxu0 0.0
        %1762 = vmatprep.subr.mxu0 0.0
        %1763 = vmatpush1.msra.mxu0 0.0
        %1764 = vmatprep.subr.mxu0 0.0
        %1765 = vmatpush1.msra.mxu0 0.0
        %1766 = vmatprep.subr.mxu0 0.0
        %1767 = vmatpush1.msra.mxu0 0.0
        %1768 = vmatprep.subr.mxu0 0.0
        %1769 = vmatpush1.msra.mxu0 0.0
        %1770 = vmatprep.subr.mxu0 0.0
        %1771 = vmatpush1.msra.mxu0 0.0
        %1772 = vmatprep.mubr.f32.mxu0 0.0
        %1773 = vmatmul.mubr.f32.gmra.mrb[0].mxu0 %v866
        %v1774 = vpop.f32.mrb[0].mxu0
        %v1775 = vadd.f32 0.0, %v1774
        %v1776 = vpop.f32.mrb[0].mxu0
        %1777 = vdwg.mxu0
        %1778 = vmatprep.subr.mxu0 0.0
        %1779 = vmatpush1.msra.mxu0 %v676
        %1780 = vmatprep.subr.mxu0 0.0
        %1781 = vmatpush1.msra.mxu0 %v681
        %1782 = vmatprep.subr.mxu0 0.0
        %1783 = vmatpush1.msra.mxu0 0.0
        %1784 = vmatprep.subr.mxu0 0.0
        %1785 = vmatpush1.msra.mxu0 0.0
        %1786 = vmatprep.subr.mxu0 0.0
        %1787 = vmatpush1.msra.mxu0 0.0
        %1788 = vmatprep.subr.mxu0 0.0
        %1789 = vmatpush1.msra.mxu0 0.0
        %1790 = vmatprep.subr.mxu0 0.0
        %1791 = vmatpush1.msra.mxu0 0.0
        %1792 = vmatprep.subr.mxu0 0.0
        %1793 = vmatpush1.msra.mxu0 0.0
        %1794 = vmatprep.subr.mxu0 0.0
        %1795 = vmatpush1.msra.mxu0 0.0
        %1796 = vmatprep.subr.mxu0 0.0
        %1797 = vmatpush1.msra.mxu0 0.0
        %1798 = vmatprep.subr.mxu0 0.0
        %1799 = vmatpush1.msra.mxu0 0.0
        %1800 = vmatprep.subr.mxu0 0.0
        %1801 = vmatpush1.msra.mxu0 0.0
        %1802 = vmatprep.subr.mxu0 0.0
        %1803 = vmatpush1.msra.mxu0 0.0
        %1804 = vmatprep.subr.mxu0 0.0
        %1805 = vmatpush1.msra.mxu0 0.0
        %1806 = vmatprep.subr.mxu0 0.0
        %1807 = vmatpush1.msra.mxu0 0.0
        %1808 = vmatprep.subr.mxu0 0.0
        %1809 = vmatpush1.msra.mxu0 0.0
        %1810 = vmatprep.subr.mxu0 0.0
        %1811 = vmatpush1.msra.mxu0 0.0
        %1812 = vmatprep.subr.mxu0 0.0
        %1813 = vmatpush1.msra.mxu0 0.0
        %1814 = vmatprep.subr.mxu0 0.0
        %1815 = vmatpush1.msra.mxu0 0.0
        %1816 = vmatprep.subr.mxu0 0.0
        %1817 = vmatpush1.msra.mxu0 0.0
        %1818 = vmatprep.subr.mxu0 0.0
        %1819 = vmatpush1.msra.mxu0 0.0
        %1820 = vmatprep.subr.mxu0 0.0
        %1821 = vmatpush1.msra.mxu0 0.0
        %1822 = vmatprep.subr.mxu0 0.0
        %1823 = vmatpush1.msra.mxu0 0.0
        %1824 = vmatprep.subr.mxu0 0.0
        %1825 = vmatpush1.msra.mxu0 0.0
        %1826 = vmatprep.subr.mxu0 0.0
        %1827 = vmatpush1.msra.mxu0 0.0
        %1828 = vmatprep.subr.mxu0 0.0
        %1829 = vmatpush1.msra.mxu0 0.0
        %1830 = vmatprep.subr.mxu0 0.0
        %1831 = vmatpush1.msra.mxu0 0.0
        %1832 = vmatprep.subr.mxu0 0.0
        %1833 = vmatpush1.msra.mxu0 0.0
        %1834 = vmatprep.subr.mxu0 0.0
        %1835 = vmatpush1.msra.mxu0 0.0
        %1836 = vmatprep.subr.mxu0 0.0
        %1837 = vmatpush1.msra.mxu0 0.0
        %1838 = vmatprep.subr.mxu0 0.0
        %1839 = vmatpush1.msra.mxu0 0.0
        %1840 = vmatprep.subr.mxu0 0.0
        %1841 = vmatpush1.msra.mxu0 0.0
        %1842 = vmatprep.mubr.f32.mxu0 0.0
        %1843 = vmatmul.mubr.f32.gmra.mrb[0].mxu0 %v866
        %v1844 = vpop.f32.mrb[0].mxu0
        %v1845 = vadd.f32 0.0, %v1844
        %v1846 = vpop.f32.mrb[0].mxu0
        %1847 = vdwg.mxu0
        %1848 = vmatprep.subr.mxu0 0.0
        %1849 = vmatpush1.msra.mxu0 %v686
        %1850 = vmatprep.subr.mxu0 0.0
        %1851 = vmatpush1.msra.mxu0 %v691
        %1852 = vmatprep.subr.mxu0 0.0
        %1853 = vmatpush1.msra.mxu0 0.0
        %1854 = vmatprep.subr.mxu0 0.0
        %1855 = vmatpush1.msra.mxu0 0.0
        %1856 = vmatprep.subr.mxu0 0.0
        %1857 = vmatpush1.msra.mxu0 0.0
        %1858 = vmatprep.subr.mxu0 0.0
        %1859 = vmatpush1.msra.mxu0 0.0
        %1860 = vmatprep.subr.mxu0 0.0
        %1861 = vmatpush1.msra.mxu0 0.0
        %1862 = vmatprep.subr.mxu0 0.0
        %1863 = vmatpush1.msra.mxu0 0.0
        %1864 = vmatprep.subr.mxu0 0.0
        %1865 = vmatpush1.msra.mxu0 0.0
        %1866 = vmatprep.subr.mxu0 0.0
        %1867 = vmatpush1.msra.mxu0 0.0
        %1868 = vmatprep.subr.mxu0 0.0
        %1869 = vmatpush1.msra.mxu0 0.0
        %1870 = vmatprep.subr.mxu0 0.0
        %1871 = vmatpush1.msra.mxu0 0.0
        %1872 = vmatprep.subr.mxu0 0.0
        %1873 = vmatpush1.msra.mxu0 0.0
        %1874 = vmatprep.subr.mxu0 0.0
        %1875 = vmatpush1.msra.mxu0 0.0
        %1876 = vmatprep.subr.mxu0 0.0
        %1877 = vmatpush1.msra.mxu0 0.0
        %1878 = vmatprep.subr.mxu0 0.0
        %1879 = vmatpush1.msra.mxu0 0.0
        %1880 = vmatprep.subr.mxu0 0.0
        %1881 = vmatpush1.msra.mxu0 0.0
        %1882 = vmatprep.subr.mxu0 0.0
        %1883 = vmatpush1.msra.mxu0 0.0
        %1884 = vmatprep.subr.mxu0 0.0
        %1885 = vmatpush1.msra.mxu0 0.0
        %1886 = vmatprep.subr.mxu0 0.0
        %1887 = vmatpush1.msra.mxu0 0.0
        %1888 = vmatprep.subr.mxu0 0.0
        %1889 = vmatpush1.msra.mxu0 0.0
        %1890 = vmatprep.subr.mxu0 0.0
        %1891 = vmatpush1.msra.mxu0 0.0
        %1892 = vmatprep.subr.mxu0 0.0
        %1893 = vmatpush1.msra.mxu0 0.0
        %1894 = vmatprep.subr.mxu0 0.0
        %1895 = vmatpush1.msra.mxu0 0.0
        %1896 = vmatprep.subr.mxu0 0.0
        %1897 = vmatpush1.msra.mxu0 0.0
        %1898 = vmatprep.subr.mxu0 0.0
        %1899 = vmatpush1.msra.mxu0 0.0
        %1900 = vmatprep.subr.mxu0 0.0
        %1901 = vmatpush1.msra.mxu0 0.0
        %1902 = vmatprep.subr.mxu0 0.0
        %1903 = vmatpush1.msra.mxu0 0.0
        %1904 = vmatprep.subr.mxu0 0.0
        %1905 = vmatpush1.msra.mxu0 0.0
        %1906 = vmatprep.subr.mxu0 0.0
        %1907 = vmatpush1.msra.mxu0 0.0
        %1908 = vmatprep.subr.mxu0 0.0
        %1909 = vmatpush1.msra.mxu0 0.0
        %1910 = vmatprep.subr.mxu0 0.0
        %1911 = vmatpush1.msra.mxu0 0.0
        %1912 = vmatprep.mubr.f32.mxu0 0.0
        %1913 = vmatmul.mubr.f32.gmra.mrb[0].mxu0 %v866
        %v1914 = vpop.f32.mrb[0].mxu0
        %v1915 = vadd.f32 0.0, %v1914
        %v1916 = vpop.f32.mrb[0].mxu0
        %1917 = vdwg.mxu0
        %1918 = vmatprep.subr.mxu0 0.0
        %1919 = vmatpush1.msra.mxu0 %v696
        %1920 = vmatprep.subr.mxu0 0.0
        %1921 = vmatpush1.msra.mxu0 %v701
        %1922 = vmatprep.subr.mxu0 0.0
        %1923 = vmatpush1.msra.mxu0 0.0
        %1924 = vmatprep.subr.mxu0 0.0
        %1925 = vmatpush1.msra.mxu0 0.0
        %1926 = vmatprep.subr.mxu0 0.0
        %1927 = vmatpush1.msra.mxu0 0.0
        %1928 = vmatprep.subr.mxu0 0.0
        %1929 = vmatpush1.msra.mxu0 0.0
        %1930 = vmatprep.subr.mxu0 0.0
        %1931 = vmatpush1.msra.mxu0 0.0
        %1932 = vmatprep.subr.mxu0 0.0
        %1933 = vmatpush1.msra.mxu0 0.0
        %1934 = vmatprep.subr.mxu0 0.0
        %1935 = vmatpush1.msra.mxu0 0.0
        %1936 = vmatprep.subr.mxu0 0.0
        %1937 = vmatpush1.msra.mxu0 0.0
        %1938 = vmatprep.subr.mxu0 0.0
        %1939 = vmatpush1.msra.mxu0 0.0
        %1940 = vmatprep.subr.mxu0 0.0
        %1941 = vmatpush1.msra.mxu0 0.0
        %1942 = vmatprep.subr.mxu0 0.0
        %1943 = vmatpush1.msra.mxu0 0.0
        %1944 = vmatprep.subr.mxu0 0.0
        %1945 = vmatpush1.msra.mxu0 0.0
        %1946 = vmatprep.subr.mxu0 0.0
        %1947 = vmatpush1.msra.mxu0 0.0
        %1948 = vmatprep.subr.mxu0 0.0
        %1949 = vmatpush1.msra.mxu0 0.0
        %1950 = vmatprep.subr.mxu0 0.0
        %1951 = vmatpush1.msra.mxu0 0.0
        %1952 = vmatprep.subr.mxu0 0.0
        %1953 = vmatpush1.msra.mxu0 0.0
        %1954 = vmatprep.subr.mxu0 0.0
        %1955 = vmatpush1.msra.mxu0 0.0
        %1956 = vmatprep.subr.mxu0 0.0
        %1957 = vmatpush1.msra.mxu0 0.0
        %1958 = vmatprep.subr.mxu0 0.0
        %1959 = vmatpush1.msra.mxu0 0.0
        %1960 = vmatprep.subr.mxu0 0.0
        %1961 = vmatpush1.msra.mxu0 0.0
        %1962 = vmatprep.subr.mxu0 0.0
        %1963 = vmatpush1.msra.mxu0 0.0
        %1964 = vmatprep.subr.mxu0 0.0
        %1965 = vmatpush1.msra.mxu0 0.0
        %1966 = vmatprep.subr.mxu0 0.0
        %1967 = vmatpush1.msra.mxu0 0.0
        %1968 = vmatprep.subr.mxu0 0.0
        %1969 = vmatpush1.msra.mxu0 0.0
        %1970 = vmatprep.subr.mxu0 0.0
        %1971 = vmatpush1.msra.mxu0 0.0
        %1972 = vmatprep.subr.mxu0 0.0
        %1973 = vmatpush1.msra.mxu0 0.0
        %1974 = vmatprep.subr.mxu0 0.0
        %1975 = vmatpush1.msra.mxu0 0.0
        %1976 = vmatprep.subr.mxu0 0.0
        %1977 = vmatpush1.msra.mxu0 0.0
        %1978 = vmatprep.subr.mxu0 0.0
        %1979 = vmatpush1.msra.mxu0 0.0
        %1980 = vmatprep.subr.mxu0 0.0
        %1981 = vmatpush1.msra.mxu0 0.0
        %1982 = vmatprep.mubr.f32.mxu0 0.0
        %1983 = vmatmul.mubr.f32.gmra.mrb[0].mxu0 %v866
        %v1984 = vpop.f32.mrb[0].mxu0
        %v1985 = vadd.f32 0.0, %v1984
        %v1986 = vpop.f32.mrb[0].mxu0
        %1987 = vdwg.mxu0
        %1988 = vmatprep.subr.mxu0 0.0
        %1989 = vmatpush1.msra.mxu0 %v706
        %1990 = vmatprep.subr.mxu0 0.0
        %1991 = vmatpush1.msra.mxu0 %v711
        %1992 = vmatprep.subr.mxu0 0.0
        %1993 = vmatpush1.msra.mxu0 0.0
        %1994 = vmatprep.subr.mxu0 0.0
        %1995 = vmatpush1.msra.mxu0 0.0
        %1996 = vmatprep.subr.mxu0 0.0
        %1997 = vmatpush1.msra.mxu0 0.0
        %1998 = vmatprep.subr.mxu0 0.0
        %1999 = vmatpush1.msra.mxu0 0.0
        %2000 = vmatprep.subr.mxu0 0.0
        %2001 = vmatpush1.msra.mxu0 0.0
        %2002 = vmatprep.subr.mxu0 0.0
        %2003 = vmatpush1.msra.mxu0 0.0
        %2004 = vmatprep.subr.mxu0 0.0
        %2005 = vmatpush1.msra.mxu0 0.0
        %2006 = vmatprep.subr.mxu0 0.0
        %2007 = vmatpush1.msra.mxu0 0.0
        %2008 = vmatprep.subr.mxu0 0.0
        %2009 = vmatpush1.msra.mxu0 0.0
        %2010 = vmatprep.subr.mxu0 0.0
        %2011 = vmatpush1.msra.mxu0 0.0
        %2012 = vmatprep.subr.mxu0 0.0
        %2013 = vmatpush1.msra.mxu0 0.0
        %2014 = vmatprep.subr.mxu0 0.0
        %2015 = vmatpush1.msra.mxu0 0.0
        %2016 = vmatprep.subr.mxu0 0.0
        %2017 = vmatpush1.msra.mxu0 0.0
        %2018 = vmatprep.subr.mxu0 0.0
        %2019 = vmatpush1.msra.mxu0 0.0
        %2020 = vmatprep.subr.mxu0 0.0
        %2021 = vmatpush1.msra.mxu0 0.0
        %2022 = vmatprep.subr.mxu0 0.0
        %2023 = vmatpush1.msra.mxu0 0.0
        %2024 = vmatprep.subr.mxu0 0.0
        %2025 = vmatpush1.msra.mxu0 0.0
        %2026 = vmatprep.subr.mxu0 0.0
        %2027 = vmatpush1.msra.mxu0 0.0
        %2028 = vmatprep.subr.mxu0 0.0
        %2029 = vmatpush1.msra.mxu0 0.0
        %2030 = vmatprep.subr.mxu0 0.0
        %2031 = vmatpush1.msra.mxu0 0.0
        %2032 = vmatprep.subr.mxu0 0.0
        %2033 = vmatpush1.msra.mxu0 0.0
        %2034 = vmatprep.subr.mxu0 0.0
        %2035 = vmatpush1.msra.mxu0 0.0
        %2036 = vmatprep.subr.mxu0 0.0
        %2037 = vmatpush1.msra.mxu0 0.0
        %2038 = vmatprep.subr.mxu0 0.0
        %2039 = vmatpush1.msra.mxu0 0.0
        %2040 = vmatprep.subr.mxu0 0.0
        %2041 = vmatpush1.msra.mxu0 0.0
        %2042 = vmatprep.subr.mxu0 0.0
        %2043 = vmatpush1.msra.mxu0 0.0
        %2044 = vmatprep.subr.mxu0 0.0
        %2045 = vmatpush1.msra.mxu0 0.0
        %2046 = vmatprep.subr.mxu0 0.0
        %2047 = vmatpush1.msra.mxu0 0.0
        %2048 = vmatprep.subr.mxu0 0.0
        %2049 = vmatpush1.msra.mxu0 0.0
        %2050 = vmatprep.subr.mxu0 0.0
        %2051 = vmatpush1.msra.mxu0 0.0
        %2052 = vmatprep.mubr.f32.mxu0 0.0
        %2053 = vmatmul.mubr.f32.gmra.mrb[0].mxu0 %v866
        %v2054 = vpop.f32.mrb[0].mxu0
        %v2055 = vadd.f32 0.0, %v2054
        %v2056 = vpop.f32.mrb[0].mxu0
        %2057 = vdwg.mxu0
        %2058 = vmatprep.subr.mxu0 0.0
        %2059 = vmatpush1.msra.mxu0 %v716
        %2060 = vmatprep.subr.mxu0 0.0
        %2061 = vmatpush1.msra.mxu0 %v721
        %2062 = vmatprep.subr.mxu0 0.0
        %2063 = vmatpush1.msra.mxu0 0.0
        %2064 = vmatprep.subr.mxu0 0.0
        %2065 = vmatpush1.msra.mxu0 0.0
        %2066 = vmatprep.subr.mxu0 0.0
        %2067 = vmatpush1.msra.mxu0 0.0
        %2068 = vmatprep.subr.mxu0 0.0
        %2069 = vmatpush1.msra.mxu0 0.0
        %2070 = vmatprep.subr.mxu0 0.0
        %2071 = vmatpush1.msra.mxu0 0.0
        %2072 = vmatprep.subr.mxu0 0.0
        %2073 = vmatpush1.msra.mxu0 0.0
        %2074 = vmatprep.subr.mxu0 0.0
        %2075 = vmatpush1.msra.mxu0 0.0
        %2076 = vmatprep.subr.mxu0 0.0
        %2077 = vmatpush1.msra.mxu0 0.0
        %2078 = vmatprep.subr.mxu0 0.0
        %2079 = vmatpush1.msra.mxu0 0.0
        %2080 = vmatprep.subr.mxu0 0.0
        %2081 = vmatpush1.msra.mxu0 0.0
        %2082 = vmatprep.subr.mxu0 0.0
        %2083 = vmatpush1.msra.mxu0 0.0
        %2084 = vmatprep.subr.mxu0 0.0
        %2085 = vmatpush1.msra.mxu0 0.0
        %2086 = vmatprep.subr.mxu0 0.0
        %2087 = vmatpush1.msra.mxu0 0.0
        %2088 = vmatprep.subr.mxu0 0.0
        %2089 = vmatpush1.msra.mxu0 0.0
        %2090 = vmatprep.subr.mxu0 0.0
        %2091 = vmatpush1.msra.mxu0 0.0
        %2092 = vmatprep.subr.mxu0 0.0
        %2093 = vmatpush1.msra.mxu0 0.0
        %2094 = vmatprep.subr.mxu0 0.0
        %2095 = vmatpush1.msra.mxu0 0.0
        %2096 = vmatprep.subr.mxu0 0.0
        %2097 = vmatpush1.msra.mxu0 0.0
        %2098 = vmatprep.subr.mxu0 0.0
        %2099 = vmatpush1.msra.mxu0 0.0
        %2100 = vmatprep.subr.mxu0 0.0
        %2101 = vmatpush1.msra.mxu0 0.0
        %2102 = vmatprep.subr.mxu0 0.0
        %2103 = vmatpush1.msra.mxu0 0.0
        %2104 = vmatprep.subr.mxu0 0.0
        %2105 = vmatpush1.msra.mxu0 0.0
        %2106 = vmatprep.subr.mxu0 0.0
        %2107 = vmatpush1.msra.mxu0 0.0
        %2108 = vmatprep.subr.mxu0 0.0
        %2109 = vmatpush1.msra.mxu0 0.0
        %2110 = vmatprep.subr.mxu0 0.0
        %2111 = vmatpush1.msra.mxu0 0.0
        %2112 = vmatprep.subr.mxu0 0.0
        %2113 = vmatpush1.msra.mxu0 0.0
        %2114 = vmatprep.subr.mxu0 0.0
        %2115 = vmatpush1.msra.mxu0 0.0
        %2116 = vmatprep.subr.mxu0 0.0
        %2117 = vmatpush1.msra.mxu0 0.0
        %2118 = vmatprep.subr.mxu0 0.0
        %2119 = vmatpush1.msra.mxu0 0.0
        %2120 = vmatprep.subr.mxu0 0.0
        %2121 = vmatpush1.msra.mxu0 0.0
        %2122 = vmatprep.mubr.f32.mxu0 0.0
        %2123 = vmatmul.mubr.f32.gmra.mrb[0].mxu0 %v866
        %v2124 = vpop.f32.mrb[0].mxu0
        %v2125 = vadd.f32 0.0, %v2124
        %v2126 = vpop.f32.mrb[0].mxu0
        %2127 = vdwg.mxu0
        %2128 = vmatprep.subr.mxu0 0.0
        %2129 = vmatpush1.msra.mxu0 %v726
        %2130 = vmatprep.subr.mxu0 0.0
        %2131 = vmatpush1.msra.mxu0 %v731
        %2132 = vmatprep.subr.mxu0 0.0
        %2133 = vmatpush1.msra.mxu0 0.0
        %2134 = vmatprep.subr.mxu0 0.0
        %2135 = vmatpush1.msra.mxu0 0.0
        %2136 = vmatprep.subr.mxu0 0.0
        %2137 = vmatpush1.msra.mxu0 0.0
        %2138 = vmatprep.subr.mxu0 0.0
        %2139 = vmatpush1.msra.mxu0 0.0
        %2140 = vmatprep.subr.mxu0 0.0
        %2141 = vmatpush1.msra.mxu0 0.0
        %2142 = vmatprep.subr.mxu0 0.0
        %2143 = vmatpush1.msra.mxu0 0.0
        %2144 = vmatprep.subr.mxu0 0.0
        %2145 = vmatpush1.msra.mxu0 0.0
        %2146 = vmatprep.subr.mxu0 0.0
        %2147 = vmatpush1.msra.mxu0 0.0
        %2148 = vmatprep.subr.mxu0 0.0
        %2149 = vmatpush1.msra.mxu0 0.0
        %2150 = vmatprep.subr.mxu0 0.0
        %2151 = vmatpush1.msra.mxu0 0.0
        %2152 = vmatprep.subr.mxu0 0.0
        %2153 = vmatpush1.msra.mxu0 0.0
        %2154 = vmatprep.subr.mxu0 0.0
        %2155 = vmatpush1.msra.mxu0 0.0
        %2156 = vmatprep.subr.mxu0 0.0
        %2157 = vmatpush1.msra.mxu0 0.0
        %2158 = vmatprep.subr.mxu0 0.0
        %2159 = vmatpush1.msra.mxu0 0.0
        %2160 = vmatprep.subr.mxu0 0.0
        %2161 = vmatpush1.msra.mxu0 0.0
        %2162 = vmatprep.subr.mxu0 0.0
        %2163 = vmatpush1.msra.mxu0 0.0
        %2164 = vmatprep.subr.mxu0 0.0
        %2165 = vmatpush1.msra.mxu0 0.0
        %2166 = vmatprep.subr.mxu0 0.0
        %2167 = vmatpush1.msra.mxu0 0.0
        %2168 = vmatprep.subr.mxu0 0.0
        %2169 = vmatpush1.msra.mxu0 0.0
        %2170 = vmatprep.subr.mxu0 0.0
        %2171 = vmatpush1.msra.mxu0 0.0
        %2172 = vmatprep.subr.mxu0 0.0
        %2173 = vmatpush1.msra.mxu0 0.0
        %2174 = vmatprep.subr.mxu0 0.0
        %2175 = vmatpush1.msra.mxu0 0.0
        %2176 = vmatprep.subr.mxu0 0.0
        %2177 = vmatpush1.msra.mxu0 0.0
        %2178 = vmatprep.subr.mxu0 0.0
        %2179 = vmatpush1.msra.mxu0 0.0
        %2180 = vmatprep.subr.mxu0 0.0
        %2181 = vmatpush1.msra.mxu0 0.0
        %2182 = vmatprep.subr.mxu0 0.0
        %2183 = vmatpush1.msra.mxu0 0.0
        %2184 = vmatprep.subr.mxu0 0.0
        %2185 = vmatpush1.msra.mxu0 0.0
        %2186 = vmatprep.subr.mxu0 0.0
        %2187 = vmatpush1.msra.mxu0 0.0
        %2188 = vmatprep.subr.mxu0 0.0
        %2189 = vmatpush1.msra.mxu0 0.0
        %2190 = vmatprep.subr.mxu0 0.0
        %2191 = vmatpush1.msra.mxu0 0.0
        %2192 = vmatprep.mubr.f32.mxu0 0.0
        %2193 = vmatmul.mubr.f32.gmra.mrb[0].mxu0 %v866
        %v2194 = vpop.f32.mrb[0].mxu0
        %v2195 = vadd.f32 0.0, %v2194
        %v2196 = vpop.f32.mrb[0].mxu0
        %2197 = vdwg.mxu0
        %2198 = vmatprep.subr.mxu0 0.0
        %2199 = vmatpush1.msra.mxu0 %v736
        %2200 = vmatprep.subr.mxu0 0.0
        %2201 = vmatpush1.msra.mxu0 %v741
        %2202 = vmatprep.subr.mxu0 0.0
        %2203 = vmatpush1.msra.mxu0 0.0
        %2204 = vmatprep.subr.mxu0 0.0
        %2205 = vmatpush1.msra.mxu0 0.0
        %2206 = vmatprep.subr.mxu0 0.0
        %2207 = vmatpush1.msra.mxu0 0.0
        %2208 = vmatprep.subr.mxu0 0.0
        %2209 = vmatpush1.msra.mxu0 0.0
        %2210 = vmatprep.subr.mxu0 0.0
        %2211 = vmatpush1.msra.mxu0 0.0
        %2212 = vmatprep.subr.mxu0 0.0
        %2213 = vmatpush1.msra.mxu0 0.0
        %2214 = vmatprep.subr.mxu0 0.0
        %2215 = vmatpush1.msra.mxu0 0.0
        %2216 = vmatprep.subr.mxu0 0.0
        %2217 = vmatpush1.msra.mxu0 0.0
        %2218 = vmatprep.subr.mxu0 0.0
        %2219 = vmatpush1.msra.mxu0 0.0
        %2220 = vmatprep.subr.mxu0 0.0
        %2221 = vmatpush1.msra.mxu0 0.0
        %2222 = vmatprep.subr.mxu0 0.0
        %2223 = vmatpush1.msra.mxu0 0.0
        %2224 = vmatprep.subr.mxu0 0.0
        %2225 = vmatpush1.msra.mxu0 0.0
        %2226 = vmatprep.subr.mxu0 0.0
        %2227 = vmatpush1.msra.mxu0 0.0
        %2228 = vmatprep.subr.mxu0 0.0
        %2229 = vmatpush1.msra.mxu0 0.0
        %2230 = vmatprep.subr.mxu0 0.0
        %2231 = vmatpush1.msra.mxu0 0.0
        %2232 = vmatprep.subr.mxu0 0.0
        %2233 = vmatpush1.msra.mxu0 0.0
        %2234 = vmatprep.subr.mxu0 0.0
        %2235 = vmatpush1.msra.mxu0 0.0
        %2236 = vmatprep.subr.mxu0 0.0
        %2237 = vmatpush1.msra.mxu0 0.0
        %2238 = vmatprep.subr.mxu0 0.0
        %2239 = vmatpush1.msra.mxu0 0.0
        %2240 = vmatprep.subr.mxu0 0.0
        %2241 = vmatpush1.msra.mxu0 0.0
        %2242 = vmatprep.subr.mxu0 0.0
        %2243 = vmatpush1.msra.mxu0 0.0
        %2244 = vmatprep.subr.mxu0 0.0
        %2245 = vmatpush1.msra.mxu0 0.0
        %2246 = vmatprep.subr.mxu0 0.0
        %2247 = vmatpush1.msra.mxu0 0.0
        %2248 = vmatprep.subr.mxu0 0.0
        %2249 = vmatpush1.msra.mxu0 0.0
        %2250 = vmatprep.subr.mxu0 0.0
        %2251 = vmatpush1.msra.mxu0 0.0
        %2252 = vmatprep.subr.mxu0 0.0
        %2253 = vmatpush1.msra.mxu0 0.0
        %2254 = vmatprep.subr.mxu0 0.0
        %2255 = vmatpush1.msra.mxu0 0.0
        %2256 = vmatprep.subr.mxu0 0.0
        %2257 = vmatpush1.msra.mxu0 0.0
        %2258 = vmatprep.subr.mxu0 0.0
        %2259 = vmatpush1.msra.mxu0 0.0
        %2260 = vmatprep.subr.mxu0 0.0
        %2261 = vmatpush1.msra.mxu0 0.0
        %2262 = vmatprep.mubr.f32.mxu0 0.0
        %2263 = vmatmul.mubr.f32.gmra.mrb[0].mxu0 %v866
        %v2264 = vpop.f32.mrb[0].mxu0
        %v2265 = vadd.f32 0.0, %v2264
        %v2266 = vpop.f32.mrb[0].mxu0
        %2267 = vdwg.mxu0
        %2268 = vmatprep.subr.mxu0 0.0
        %2269 = vmatpush1.msra.mxu0 %v746
        %2270 = vmatprep.subr.mxu0 0.0
        %2271 = vmatpush1.msra.mxu0 %v751
        %2272 = vmatprep.subr.mxu0 0.0
        %2273 = vmatpush1.msra.mxu0 0.0
        %2274 = vmatprep.subr.mxu0 0.0
        %2275 = vmatpush1.msra.mxu0 0.0
        %2276 = vmatprep.subr.mxu0 0.0
        %2277 = vmatpush1.msra.mxu0 0.0
        %2278 = vmatprep.subr.mxu0 0.0
        %2279 = vmatpush1.msra.mxu0 0.0
        %2280 = vmatprep.subr.mxu0 0.0
        %2281 = vmatpush1.msra.mxu0 0.0
        %2282 = vmatprep.subr.mxu0 0.0
        %2283 = vmatpush1.msra.mxu0 0.0
        %2284 = vmatprep.subr.mxu0 0.0
        %2285 = vmatpush1.msra.mxu0 0.0
        %2286 = vmatprep.subr.mxu0 0.0
        %2287 = vmatpush1.msra.mxu0 0.0
        %2288 = vmatprep.subr.mxu0 0.0
        %2289 = vmatpush1.msra.mxu0 0.0
        %2290 = vmatprep.subr.mxu0 0.0
        %2291 = vmatpush1.msra.mxu0 0.0
        %2292 = vmatprep.subr.mxu0 0.0
        %2293 = vmatpush1.msra.mxu0 0.0
        %2294 = vmatprep.subr.mxu0 0.0
        %2295 = vmatpush1.msra.mxu0 0.0
        %2296 = vmatprep.subr.mxu0 0.0
        %2297 = vmatpush1.msra.mxu0 0.0
        %2298 = vmatprep.subr.mxu0 0.0
        %2299 = vmatpush1.msra.mxu0 0.0
        %2300 = vmatprep.subr.mxu0 0.0
        %2301 = vmatpush1.msra.mxu0 0.0
        %2302 = vmatprep.subr.mxu0 0.0
        %2303 = vmatpush1.msra.mxu0 0.0
        %2304 = vmatprep.subr.mxu0 0.0
        %2305 = vmatpush1.msra.mxu0 0.0
        %2306 = vmatprep.subr.mxu0 0.0
        %2307 = vmatpush1.msra.mxu0 0.0
        %2308 = vmatprep.subr.mxu0 0.0
        %2309 = vmatpush1.msra.mxu0 0.0
        %2310 = vmatprep.subr.mxu0 0.0
        %2311 = vmatpush1.msra.mxu0 0.0
        %2312 = vmatprep.subr.mxu0 0.0
        %2313 = vmatpush1.msra.mxu0 0.0
        %2314 = vmatprep.subr.mxu0 0.0
        %2315 = vmatpush1.msra.mxu0 0.0
        %2316 = vmatprep.subr.mxu0 0.0
        %2317 = vmatpush1.msra.mxu0 0.0
        %2318 = vmatprep.subr.mxu0 0.0
        %2319 = vmatpush1.msra.mxu0 0.0
        %2320 = vmatprep.subr.mxu0 0.0
        %2321 = vmatpush1.msra.mxu0 0.0
        %2322 = vmatprep.subr.mxu0 0.0
        %2323 = vmatpush1.msra.mxu0 0.0
        %2324 = vmatprep.subr.mxu0 0.0
        %2325 = vmatpush1.msra.mxu0 0.0
        %2326 = vmatprep.subr.mxu0 0.0
        %2327 = vmatpush1.msra.mxu0 0.0
        %2328 = vmatprep.subr.mxu0 0.0
        %2329 = vmatpush1.msra.mxu0 0.0
        %2330 = vmatprep.subr.mxu0 0.0
        %2331 = vmatpush1.msra.mxu0 0.0
        %2332 = vmatprep.mubr.f32.mxu0 0.0
        %2333 = vmatmul.mubr.f32.gmra.mrb[0].mxu0 %v866
        %v2334 = vpop.f32.mrb[0].mxu0
        %v2335 = vadd.f32 0.0, %v2334
        %v2336 = vpop.f32.mrb[0].mxu0
        %2337 = vdwg.mxu0
        %2338 = vmatprep.subr.mxu0 0.0
        %2339 = vmatpush1.msra.mxu0 %v756
        %2340 = vmatprep.subr.mxu0 0.0
        %2341 = vmatpush1.msra.mxu0 %v761
        %2342 = vmatprep.subr.mxu0 0.0
        %2343 = vmatpush1.msra.mxu0 0.0
        %2344 = vmatprep.subr.mxu0 0.0
        %2345 = vmatpush1.msra.mxu0 0.0
        %2346 = vmatprep.subr.mxu0 0.0
        %2347 = vmatpush1.msra.mxu0 0.0
        %2348 = vmatprep.subr.mxu0 0.0
        %2349 = vmatpush1.msra.mxu0 0.0
        %2350 = vmatprep.subr.mxu0 0.0
        %2351 = vmatpush1.msra.mxu0 0.0
        %2352 = vmatprep.subr.mxu0 0.0
        %2353 = vmatpush1.msra.mxu0 0.0
        %2354 = vmatprep.subr.mxu0 0.0
        %2355 = vmatpush1.msra.mxu0 0.0
        %2356 = vmatprep.subr.mxu0 0.0
        %2357 = vmatpush1.msra.mxu0 0.0
        %2358 = vmatprep.subr.mxu0 0.0
        %2359 = vmatpush1.msra.mxu0 0.0
        %2360 = vmatprep.subr.mxu0 0.0
        %2361 = vmatpush1.msra.mxu0 0.0
        %2362 = vmatprep.subr.mxu0 0.0
        %2363 = vmatpush1.msra.mxu0 0.0
        %2364 = vmatprep.subr.mxu0 0.0
        %2365 = vmatpush1.msra.mxu0 0.0
        %2366 = vmatprep.subr.mxu0 0.0
        %2367 = vmatpush1.msra.mxu0 0.0
        %2368 = vmatprep.subr.mxu0 0.0
        %2369 = vmatpush1.msra.mxu0 0.0
        %2370 = vmatprep.subr.mxu0 0.0
        %2371 = vmatpush1.msra.mxu0 0.0
        %2372 = vmatprep.subr.mxu0 0.0
        %2373 = vmatpush1.msra.mxu0 0.0
        %2374 = vmatprep.subr.mxu0 0.0
        %2375 = vmatpush1.msra.mxu0 0.0
        %2376 = vmatprep.subr.mxu0 0.0
        %2377 = vmatpush1.msra.mxu0 0.0
        %2378 = vmatprep.subr.mxu0 0.0
        %2379 = vmatpush1.msra.mxu0 0.0
        %2380 = vmatprep.subr.mxu0 0.0
        %2381 = vmatpush1.msra.mxu0 0.0
        %2382 = vmatprep.subr.mxu0 0.0
        %2383 = vmatpush1.msra.mxu0 0.0
        %2384 = vmatprep.subr.mxu0 0.0
        %2385 = vmatpush1.msra.mxu0 0.0
        %2386 = vmatprep.subr.mxu0 0.0
        %2387 = vmatpush1.msra.mxu0 0.0
        %2388 = vmatprep.subr.mxu0 0.0
        %2389 = vmatpush1.msra.mxu0 0.0
        %2390 = vmatprep.subr.mxu0 0.0
        %2391 = vmatpush1.msra.mxu0 0.0
        %2392 = vmatprep.subr.mxu0 0.0
        %2393 = vmatpush1.msra.mxu0 0.0
        %2394 = vmatprep.subr.mxu0 0.0
        %2395 = vmatpush1.msra.mxu0 0.0
        %2396 = vmatprep.subr.mxu0 0.0
        %2397 = vmatpush1.msra.mxu0 0.0
        %2398 = vmatprep.subr.mxu0 0.0
        %2399 = vmatpush1.msra.mxu0 0.0
        %2400 = vmatprep.subr.mxu0 0.0
        %2401 = vmatpush1.msra.mxu0 0.0
        %2402 = vmatprep.mubr.f32.mxu0 0.0
        %2403 = vmatmul.mubr.f32.gmra.mrb[0].mxu0 %v866
        %v2404 = vpop.f32.mrb[0].mxu0
        %v2405 = vadd.f32 0.0, %v2404
        %v2406 = vpop.f32.mrb[0].mxu0
        %2407 = vdwg.mxu0
        %2408 = vmatprep.subr.mxu0 0.0
        %2409 = vmatpush1.msra.mxu0 %v766
        %2410 = vmatprep.subr.mxu0 0.0
        %2411 = vmatpush1.msra.mxu0 %v771
        %2412 = vmatprep.subr.mxu0 0.0
        %2413 = vmatpush1.msra.mxu0 0.0
        %2414 = vmatprep.subr.mxu0 0.0
        %2415 = vmatpush1.msra.mxu0 0.0
        %2416 = vmatprep.subr.mxu0 0.0
        %2417 = vmatpush1.msra.mxu0 0.0
        %2418 = vmatprep.subr.mxu0 0.0
        %2419 = vmatpush1.msra.mxu0 0.0
        %2420 = vmatprep.subr.mxu0 0.0
        %2421 = vmatpush1.msra.mxu0 0.0
        %2422 = vmatprep.subr.mxu0 0.0
        %2423 = vmatpush1.msra.mxu0 0.0
        %2424 = vmatprep.subr.mxu0 0.0
        %2425 = vmatpush1.msra.mxu0 0.0
        %2426 = vmatprep.subr.mxu0 0.0
        %2427 = vmatpush1.msra.mxu0 0.0
        %2428 = vmatprep.subr.mxu0 0.0
        %2429 = vmatpush1.msra.mxu0 0.0
        %2430 = vmatprep.subr.mxu0 0.0
        %2431 = vmatpush1.msra.mxu0 0.0
        %2432 = vmatprep.subr.mxu0 0.0
        %2433 = vmatpush1.msra.mxu0 0.0
        %2434 = vmatprep.subr.mxu0 0.0
        %2435 = vmatpush1.msra.mxu0 0.0
        %2436 = vmatprep.subr.mxu0 0.0
        %2437 = vmatpush1.msra.mxu0 0.0
        %2438 = vmatprep.subr.mxu0 0.0
        %2439 = vmatpush1.msra.mxu0 0.0
        %2440 = vmatprep.subr.mxu0 0.0
        %2441 = vmatpush1.msra.mxu0 0.0
        %2442 = vmatprep.subr.mxu0 0.0
        %2443 = vmatpush1.msra.mxu0 0.0
        %2444 = vmatprep.subr.mxu0 0.0
        %2445 = vmatpush1.msra.mxu0 0.0
        %2446 = vmatprep.subr.mxu0 0.0
        %2447 = vmatpush1.msra.mxu0 0.0
        %2448 = vmatprep.subr.mxu0 0.0
        %2449 = vmatpush1.msra.mxu0 0.0
        %2450 = vmatprep.subr.mxu0 0.0
        %2451 = vmatpush1.msra.mxu0 0.0
        %2452 = vmatprep.subr.mxu0 0.0
        %2453 = vmatpush1.msra.mxu0 0.0
        %2454 = vmatprep.subr.mxu0 0.0
        %2455 = vmatpush1.msra.mxu0 0.0
        %2456 = vmatprep.subr.mxu0 0.0
        %2457 = vmatpush1.msra.mxu0 0.0
        %2458 = vmatprep.subr.mxu0 0.0
        %2459 = vmatpush1.msra.mxu0 0.0
        %2460 = vmatprep.subr.mxu0 0.0
        %2461 = vmatpush1.msra.mxu0 0.0
        %2462 = vmatprep.subr.mxu0 0.0
        %2463 = vmatpush1.msra.mxu0 0.0
        %2464 = vmatprep.subr.mxu0 0.0
        %2465 = vmatpush1.msra.mxu0 0.0
        %2466 = vmatprep.subr.mxu0 0.0
        %2467 = vmatpush1.msra.mxu0 0.0
        %2468 = vmatprep.subr.mxu0 0.0
        %2469 = vmatpush1.msra.mxu0 0.0
        %2470 = vmatprep.subr.mxu0 0.0
        %2471 = vmatpush1.msra.mxu0 0.0
        %2472 = vmatprep.mubr.f32.mxu0 0.0
        %2473 = vmatmul.mubr.f32.gmra.mrb[0].mxu0 %v866
        %v2474 = vpop.f32.mrb[0].mxu0
        %v2475 = vadd.f32 0.0, %v2474
        %v2476 = vpop.f32.mrb[0].mxu0
        %2477 = vdwg.mxu0
        %2478 = vmatprep.subr.mxu0 0.0
        %2479 = vmatpush1.msra.mxu0 %v776
        %2480 = vmatprep.subr.mxu0 0.0
        %2481 = vmatpush1.msra.mxu0 %v781
        %2482 = vmatprep.subr.mxu0 0.0
        %2483 = vmatpush1.msra.mxu0 0.0
        %2484 = vmatprep.subr.mxu0 0.0
        %2485 = vmatpush1.msra.mxu0 0.0
        %2486 = vmatprep.subr.mxu0 0.0
        %2487 = vmatpush1.msra.mxu0 0.0
        %2488 = vmatprep.subr.mxu0 0.0
        %2489 = vmatpush1.msra.mxu0 0.0
        %2490 = vmatprep.subr.mxu0 0.0
        %2491 = vmatpush1.msra.mxu0 0.0
        %2492 = vmatprep.subr.mxu0 0.0
        %2493 = vmatpush1.msra.mxu0 0.0
        %2494 = vmatprep.subr.mxu0 0.0
        %2495 = vmatpush1.msra.mxu0 0.0
        %2496 = vmatprep.subr.mxu0 0.0
        %2497 = vmatpush1.msra.mxu0 0.0
        %2498 = vmatprep.subr.mxu0 0.0
        %2499 = vmatpush1.msra.mxu0 0.0
        %2500 = vmatprep.subr.mxu0 0.0
        %2501 = vmatpush1.msra.mxu0 0.0
        %2502 = vmatprep.subr.mxu0 0.0
        %2503 = vmatpush1.msra.mxu0 0.0
        %2504 = vmatprep.subr.mxu0 0.0
        %2505 = vmatpush1.msra.mxu0 0.0
        %2506 = vmatprep.subr.mxu0 0.0
        %2507 = vmatpush1.msra.mxu0 0.0
        %2508 = vmatprep.subr.mxu0 0.0
        %2509 = vmatpush1.msra.mxu0 0.0
        %2510 = vmatprep.subr.mxu0 0.0
        %2511 = vmatpush1.msra.mxu0 0.0
        %2512 = vmatprep.subr.mxu0 0.0
        %2513 = vmatpush1.msra.mxu0 0.0
        %2514 = vmatprep.subr.mxu0 0.0
        %2515 = vmatpush1.msra.mxu0 0.0
        %2516 = vmatprep.subr.mxu0 0.0
        %2517 = vmatpush1.msra.mxu0 0.0
        %2518 = vmatprep.subr.mxu0 0.0
        %2519 = vmatpush1.msra.mxu0 0.0
        %2520 = vmatprep.subr.mxu0 0.0
        %2521 = vmatpush1.msra.mxu0 0.0
        %2522 = vmatprep.subr.mxu0 0.0
        %2523 = vmatpush1.msra.mxu0 0.0
        %2524 = vmatprep.subr.mxu0 0.0
        %2525 = vmatpush1.msra.mxu0 0.0
        %2526 = vmatprep.subr.mxu0 0.0
        %2527 = vmatpush1.msra.mxu0 0.0
        %2528 = vmatprep.subr.mxu0 0.0
        %2529 = vmatpush1.msra.mxu0 0.0
        %2530 = vmatprep.subr.mxu0 0.0
        %2531 = vmatpush1.msra.mxu0 0.0
        %2532 = vmatprep.subr.mxu0 0.0
        %2533 = vmatpush1.msra.mxu0 0.0
        %2534 = vmatprep.subr.mxu0 0.0
        %2535 = vmatpush1.msra.mxu0 0.0
        %2536 = vmatprep.subr.mxu0 0.0
        %2537 = vmatpush1.msra.mxu0 0.0
        %2538 = vmatprep.subr.mxu0 0.0
        %2539 = vmatpush1.msra.mxu0 0.0
        %2540 = vmatprep.subr.mxu0 0.0
        %2541 = vmatpush1.msra.mxu0 0.0
        %2542 = vmatprep.mubr.f32.mxu0 0.0
        %2543 = vmatmul.mubr.f32.gmra.mrb[0].mxu0 %v866
        %v2544 = vpop.f32.mrb[0].mxu0
        %v2545 = vadd.f32 0.0, %v2544
        %v2546 = vpop.f32.mrb[0].mxu0
        %2547 = vdwg.mxu0
        %2548 = vmatprep.subr.mxu0 0.0
        %2549 = vmatpush1.msra.mxu0 %v786
        %2550 = vmatprep.subr.mxu0 0.0
        %2551 = vmatpush1.msra.mxu0 %v791
        %2552 = vmatprep.subr.mxu0 0.0
        %2553 = vmatpush1.msra.mxu0 0.0
        %2554 = vmatprep.subr.mxu0 0.0
        %2555 = vmatpush1.msra.mxu0 0.0
        %2556 = vmatprep.subr.mxu0 0.0
        %2557 = vmatpush1.msra.mxu0 0.0
        %2558 = vmatprep.subr.mxu0 0.0
        %2559 = vmatpush1.msra.mxu0 0.0
        %2560 = vmatprep.subr.mxu0 0.0
        %2561 = vmatpush1.msra.mxu0 0.0
        %2562 = vmatprep.subr.mxu0 0.0
        %2563 = vmatpush1.msra.mxu0 0.0
        %2564 = vmatprep.subr.mxu0 0.0
        %2565 = vmatpush1.msra.mxu0 0.0
        %2566 = vmatprep.subr.mxu0 0.0
        %2567 = vmatpush1.msra.mxu0 0.0
        %2568 = vmatprep.subr.mxu0 0.0
        %2569 = vmatpush1.msra.mxu0 0.0
        %2570 = vmatprep.subr.mxu0 0.0
        %2571 = vmatpush1.msra.mxu0 0.0
        %2572 = vmatprep.subr.mxu0 0.0
        %2573 = vmatpush1.msra.mxu0 0.0
        %2574 = vmatprep.subr.mxu0 0.0
        %2575 = vmatpush1.msra.mxu0 0.0
        %2576 = vmatprep.subr.mxu0 0.0
        %2577 = vmatpush1.msra.mxu0 0.0
        %2578 = vmatprep.subr.mxu0 0.0
        %2579 = vmatpush1.msra.mxu0 0.0
        %2580 = vmatprep.subr.mxu0 0.0
        %2581 = vmatpush1.msra.mxu0 0.0
        %2582 = vmatprep.subr.mxu0 0.0
        %2583 = vmatpush1.msra.mxu0 0.0
        %2584 = vmatprep.subr.mxu0 0.0
        %2585 = vmatpush1.msra.mxu0 0.0
        %2586 = vmatprep.subr.mxu0 0.0
        %2587 = vmatpush1.msra.mxu0 0.0
        %2588 = vmatprep.subr.mxu0 0.0
        %2589 = vmatpush1.msra.mxu0 0.0
        %2590 = vmatprep.subr.mxu0 0.0
        %2591 = vmatpush1.msra.mxu0 0.0
        %2592 = vmatprep.subr.mxu0 0.0
        %2593 = vmatpush1.msra.mxu0 0.0
        %2594 = vmatprep.subr.mxu0 0.0
        %2595 = vmatpush1.msra.mxu0 0.0
        %2596 = vmatprep.subr.mxu0 0.0
        %2597 = vmatpush1.msra.mxu0 0.0
        %2598 = vmatprep.subr.mxu0 0.0
        %2599 = vmatpush1.msra.mxu0 0.0
        %2600 = vmatprep.subr.mxu0 0.0
        %2601 = vmatpush1.msra.mxu0 0.0
        %2602 = vmatprep.subr.mxu0 0.0
        %2603 = vmatpush1.msra.mxu0 0.0
        %2604 = vmatprep.subr.mxu0 0.0
        %2605 = vmatpush1.msra.mxu0 0.0
        %2606 = vmatprep.subr.mxu0 0.0
        %2607 = vmatpush1.msra.mxu0 0.0
        %2608 = vmatprep.subr.mxu0 0.0
        %2609 = vmatpush1.msra.mxu0 0.0
        %2610 = vmatprep.subr.mxu0 0.0
        %2611 = vmatpush1.msra.mxu0 0.0
        %2612 = vmatprep.mubr.f32.mxu0 0.0
        %2613 = vmatmul.mubr.f32.gmra.mrb[0].mxu0 %v866
        %v2614 = vpop.f32.mrb[0].mxu0
        %v2615 = vadd.f32 0.0, %v2614
        %v2616 = vpop.f32.mrb[0].mxu0
        %2617 = vdwg.mxu0
        %2618 = vmatprep.subr.mxu0 0.0
        %2619 = vmatpush1.msra.mxu0 %v796
        %2620 = vmatprep.subr.mxu0 0.0
        %2621 = vmatpush1.msra.mxu0 %v801
        %2622 = vmatprep.subr.mxu0 0.0
        %2623 = vmatpush1.msra.mxu0 0.0
        %2624 = vmatprep.subr.mxu0 0.0
        %2625 = vmatpush1.msra.mxu0 0.0
        %2626 = vmatprep.subr.mxu0 0.0
        %2627 = vmatpush1.msra.mxu0 0.0
        %2628 = vmatprep.subr.mxu0 0.0
        %2629 = vmatpush1.msra.mxu0 0.0
        %2630 = vmatprep.subr.mxu0 0.0
        %2631 = vmatpush1.msra.mxu0 0.0
        %2632 = vmatprep.subr.mxu0 0.0
        %2633 = vmatpush1.msra.mxu0 0.0
        %2634 = vmatprep.subr.mxu0 0.0
        %2635 = vmatpush1.msra.mxu0 0.0
        %2636 = vmatprep.subr.mxu0 0.0
        %2637 = vmatpush1.msra.mxu0 0.0
        %2638 = vmatprep.subr.mxu0 0.0
        %2639 = vmatpush1.msra.mxu0 0.0
        %2640 = vmatprep.subr.mxu0 0.0
        %2641 = vmatpush1.msra.mxu0 0.0
        %2642 = vmatprep.subr.mxu0 0.0
        %2643 = vmatpush1.msra.mxu0 0.0
        %2644 = vmatprep.subr.mxu0 0.0
        %2645 = vmatpush1.msra.mxu0 0.0
        %2646 = vmatprep.subr.mxu0 0.0
        %2647 = vmatpush1.msra.mxu0 0.0
        %2648 = vmatprep.subr.mxu0 0.0
        %2649 = vmatpush1.msra.mxu0 0.0
        %2650 = vmatprep.subr.mxu0 0.0
        %2651 = vmatpush1.msra.mxu0 0.0
        %2652 = vmatprep.subr.mxu0 0.0
        %2653 = vmatpush1.msra.mxu0 0.0
        %2654 = vmatprep.subr.mxu0 0.0
        %2655 = vmatpush1.msra.mxu0 0.0
        %2656 = vmatprep.subr.mxu0 0.0
        %2657 = vmatpush1.msra.mxu0 0.0
        %2658 = vmatprep.subr.mxu0 0.0
        %2659 = vmatpush1.msra.mxu0 0.0
        %2660 = vmatprep.subr.mxu0 0.0
        %2661 = vmatpush1.msra.mxu0 0.0
        %2662 = vmatprep.subr.mxu0 0.0
        %2663 = vmatpush1.msra.mxu0 0.0
        %2664 = vmatprep.subr.mxu0 0.0
        %2665 = vmatpush1.msra.mxu0 0.0
        %2666 = vmatprep.subr.mxu0 0.0
        %2667 = vmatpush1.msra.mxu0 0.0
        %2668 = vmatprep.subr.mxu0 0.0
        %2669 = vmatpush1.msra.mxu0 0.0
        %2670 = vmatprep.subr.mxu0 0.0
        %2671 = vmatpush1.msra.mxu0 0.0
        %2672 = vmatprep.subr.mxu0 0.0
        %2673 = vmatpush1.msra.mxu0 0.0
        %2674 = vmatprep.subr.mxu0 0.0
        %2675 = vmatpush1.msra.mxu0 0.0
        %2676 = vmatprep.subr.mxu0 0.0
        %2677 = vmatpush1.msra.mxu0 0.0
        %2678 = vmatprep.subr.mxu0 0.0
        %2679 = vmatpush1.msra.mxu0 0.0
        %2680 = vmatprep.subr.mxu0 0.0
        %2681 = vmatpush1.msra.mxu0 0.0
        %2682 = vmatprep.mubr.f32.mxu0 0.0
        %2683 = vmatmul.mubr.f32.gmra.mrb[0].mxu0 %v866
        %v2684 = vpop.f32.mrb[0].mxu0
        %v2685 = vadd.f32 0.0, %v2684
        %v2686 = vpop.f32.mrb[0].mxu0
        %2687 = vdwg.mxu0
        %2688 = vmatprep.subr.mxu0 0.0
        %2689 = vmatpush1.msra.mxu0 %v806
        %2690 = vmatprep.subr.mxu0 0.0
        %2691 = vmatpush1.msra.mxu0 %v811
        %2692 = vmatprep.subr.mxu0 0.0
        %2693 = vmatpush1.msra.mxu0 0.0
        %2694 = vmatprep.subr.mxu0 0.0
        %2695 = vmatpush1.msra.mxu0 0.0
        %2696 = vmatprep.subr.mxu0 0.0
        %2697 = vmatpush1.msra.mxu0 0.0
        %2698 = vmatprep.subr.mxu0 0.0
        %2699 = vmatpush1.msra.mxu0 0.0
        %2700 = vmatprep.subr.mxu0 0.0
        %2701 = vmatpush1.msra.mxu0 0.0
        %2702 = vmatprep.subr.mxu0 0.0
        %2703 = vmatpush1.msra.mxu0 0.0
        %2704 = vmatprep.subr.mxu0 0.0
        %2705 = vmatpush1.msra.mxu0 0.0
        %2706 = vmatprep.subr.mxu0 0.0
        %2707 = vmatpush1.msra.mxu0 0.0
        %2708 = vmatprep.subr.mxu0 0.0
        %2709 = vmatpush1.msra.mxu0 0.0
        %2710 = vmatprep.subr.mxu0 0.0
        %2711 = vmatpush1.msra.mxu0 0.0
        %2712 = vmatprep.subr.mxu0 0.0
        %2713 = vmatpush1.msra.mxu0 0.0
        %2714 = vmatprep.subr.mxu0 0.0
        %2715 = vmatpush1.msra.mxu0 0.0
        %2716 = vmatprep.subr.mxu0 0.0
        %2717 = vmatpush1.msra.mxu0 0.0
        %2718 = vmatprep.subr.mxu0 0.0
        %2719 = vmatpush1.msra.mxu0 0.0
        %2720 = vmatprep.subr.mxu0 0.0
        %2721 = vmatpush1.msra.mxu0 0.0
        %2722 = vmatprep.subr.mxu0 0.0
        %2723 = vmatpush1.msra.mxu0 0.0
        %2724 = vmatprep.subr.mxu0 0.0
        %2725 = vmatpush1.msra.mxu0 0.0
        %2726 = vmatprep.subr.mxu0 0.0
        %2727 = vmatpush1.msra.mxu0 0.0
        %2728 = vmatprep.subr.mxu0 0.0
        %2729 = vmatpush1.msra.mxu0 0.0
        %2730 = vmatprep.subr.mxu0 0.0
        %2731 = vmatpush1.msra.mxu0 0.0
        %2732 = vmatprep.subr.mxu0 0.0
        %2733 = vmatpush1.msra.mxu0 0.0
        %2734 = vmatprep.subr.mxu0 0.0
        %2735 = vmatpush1.msra.mxu0 0.0
        %2736 = vmatprep.subr.mxu0 0.0
        %2737 = vmatpush1.msra.mxu0 0.0
        %2738 = vmatprep.subr.mxu0 0.0
        %2739 = vmatpush1.msra.mxu0 0.0
        %2740 = vmatprep.subr.mxu0 0.0
        %2741 = vmatpush1.msra.mxu0 0.0
        %2742 = vmatprep.subr.mxu0 0.0
        %2743 = vmatpush1.msra.mxu0 0.0
        %2744 = vmatprep.subr.mxu0 0.0
        %2745 = vmatpush1.msra.mxu0 0.0
        %2746 = vmatprep.subr.mxu0 0.0
        %2747 = vmatpush1.msra.mxu0 0.0
        %2748 = vmatprep.subr.mxu0 0.0
        %2749 = vmatpush1.msra.mxu0 0.0
        %2750 = vmatprep.subr.mxu0 0.0
        %2751 = vmatpush1.msra.mxu0 0.0
        %2752 = vmatprep.mubr.f32.mxu0 0.0
        %2753 = vmatmul.mubr.f32.gmra.mrb[0].mxu0 %v866
        %v2754 = vpop.f32.mrb[0].mxu0
        %v2755 = vadd.f32 0.0, %v2754
        %v2756 = vpop.f32.mrb[0].mxu0
        %2757 = vdwg.mxu0
        %2758 = vmatprep.subr.mxu0 0.0
        %2759 = vmatpush1.msra.mxu0 %v816
        %2760 = vmatprep.subr.mxu0 0.0
        %2761 = vmatpush1.msra.mxu0 %v821
        %2762 = vmatprep.subr.mxu0 0.0
        %2763 = vmatpush1.msra.mxu0 0.0
        %2764 = vmatprep.subr.mxu0 0.0
        %2765 = vmatpush1.msra.mxu0 0.0
        %2766 = vmatprep.subr.mxu0 0.0
        %2767 = vmatpush1.msra.mxu0 0.0
        %2768 = vmatprep.subr.mxu0 0.0
        %2769 = vmatpush1.msra.mxu0 0.0
        %2770 = vmatprep.subr.mxu0 0.0
        %2771 = vmatpush1.msra.mxu0 0.0
        %2772 = vmatprep.subr.mxu0 0.0
        %2773 = vmatpush1.msra.mxu0 0.0
        %2774 = vmatprep.subr.mxu0 0.0
        %2775 = vmatpush1.msra.mxu0 0.0
        %2776 = vmatprep.subr.mxu0 0.0
        %2777 = vmatpush1.msra.mxu0 0.0
        %2778 = vmatprep.subr.mxu0 0.0
        %2779 = vmatpush1.msra.mxu0 0.0
        %2780 = vmatprep.subr.mxu0 0.0
        %2781 = vmatpush1.msra.mxu0 0.0
        %2782 = vmatprep.subr.mxu0 0.0
        %2783 = vmatpush1.msra.mxu0 0.0
        %2784 = vmatprep.subr.mxu0 0.0
        %2785 = vmatpush1.msra.mxu0 0.0
        %2786 = vmatprep.subr.mxu0 0.0
        %2787 = vmatpush1.msra.mxu0 0.0
        %2788 = vmatprep.subr.mxu0 0.0
        %2789 = vmatpush1.msra.mxu0 0.0
        %2790 = vmatprep.subr.mxu0 0.0
        %2791 = vmatpush1.msra.mxu0 0.0
        %2792 = vmatprep.subr.mxu0 0.0
        %2793 = vmatpush1.msra.mxu0 0.0
        %2794 = vmatprep.subr.mxu0 0.0
        %2795 = vmatpush1.msra.mxu0 0.0
        %2796 = vmatprep.subr.mxu0 0.0
        %2797 = vmatpush1.msra.mxu0 0.0
        %2798 = vmatprep.subr.mxu0 0.0
        %2799 = vmatpush1.msra.mxu0 0.0
        %2800 = vmatprep.subr.mxu0 0.0
        %2801 = vmatpush1.msra.mxu0 0.0
        %2802 = vmatprep.subr.mxu0 0.0
        %2803 = vmatpush1.msra.mxu0 0.0
        %2804 = vmatprep.subr.mxu0 0.0
        %2805 = vmatpush1.msra.mxu0 0.0
        %2806 = vmatprep.subr.mxu0 0.0
        %2807 = vmatpush1.msra.mxu0 0.0
        %2808 = vmatprep.subr.mxu0 0.0
        %2809 = vmatpush1.msra.mxu0 0.0
        %2810 = vmatprep.subr.mxu0 0.0
        %2811 = vmatpush1.msra.mxu0 0.0
        %2812 = vmatprep.subr.mxu0 0.0
        %2813 = vmatpush1.msra.mxu0 0.0
        %2814 = vmatprep.subr.mxu0 0.0
        %2815 = vmatpush1.msra.mxu0 0.0
        %2816 = vmatprep.subr.mxu0 0.0
        %2817 = vmatpush1.msra.mxu0 0.0
        %2818 = vmatprep.subr.mxu0 0.0
        %2819 = vmatpush1.msra.mxu0 0.0
        %2820 = vmatprep.subr.mxu0 0.0
        %2821 = vmatpush1.msra.mxu0 0.0
        %2822 = vmatprep.mubr.f32.mxu0 0.0
        %2823 = vmatmul.mubr.f32.gmra.mrb[0].mxu0 %v866
        %v2824 = vpop.f32.mrb[0].mxu0
        %v2825 = vadd.f32 0.0, %v2824
        %v2826 = vpop.f32.mrb[0].mxu0
        %2827 = vdwg.mxu0
        %2828 = vmatprep.subr.mxu0 0.0
        %2829 = vmatpush1.msra.mxu0 %v826
        %2830 = vmatprep.subr.mxu0 0.0
        %2831 = vmatpush1.msra.mxu0 %v831
        %2832 = vmatprep.subr.mxu0 0.0
        %2833 = vmatpush1.msra.mxu0 0.0
        %2834 = vmatprep.subr.mxu0 0.0
        %2835 = vmatpush1.msra.mxu0 0.0
        %2836 = vmatprep.subr.mxu0 0.0
        %2837 = vmatpush1.msra.mxu0 0.0
        %2838 = vmatprep.subr.mxu0 0.0
        %2839 = vmatpush1.msra.mxu0 0.0
        %2840 = vmatprep.subr.mxu0 0.0
        %2841 = vmatpush1.msra.mxu0 0.0
        %2842 = vmatprep.subr.mxu0 0.0
        %2843 = vmatpush1.msra.mxu0 0.0
        %2844 = vmatprep.subr.mxu0 0.0
        %2845 = vmatpush1.msra.mxu0 0.0
        %2846 = vmatprep.subr.mxu0 0.0
        %2847 = vmatpush1.msra.mxu0 0.0
        %2848 = vmatprep.subr.mxu0 0.0
        %2849 = vmatpush1.msra.mxu0 0.0
        %2850 = vmatprep.subr.mxu0 0.0
        %2851 = vmatpush1.msra.mxu0 0.0
        %2852 = vmatprep.subr.mxu0 0.0
        %2853 = vmatpush1.msra.mxu0 0.0
        %2854 = vmatprep.subr.mxu0 0.0
        %2855 = vmatpush1.msra.mxu0 0.0
        %2856 = vmatprep.subr.mxu0 0.0
        %2857 = vmatpush1.msra.mxu0 0.0
        %2858 = vmatprep.subr.mxu0 0.0
        %2859 = vmatpush1.msra.mxu0 0.0
        %2860 = vmatprep.subr.mxu0 0.0
        %2861 = vmatpush1.msra.mxu0 0.0
        %2862 = vmatprep.subr.mxu0 0.0
        %2863 = vmatpush1.msra.mxu0 0.0
        %2864 = vmatprep.subr.mxu0 0.0
        %2865 = vmatpush1.msra.mxu0 0.0
        %2866 = vmatprep.subr.mxu0 0.0
        %2867 = vmatpush1.msra.mxu0 0.0
        %2868 = vmatprep.subr.mxu0 0.0
        %2869 = vmatpush1.msra.mxu0 0.0
        %2870 = vmatprep.subr.mxu0 0.0
        %2871 = vmatpush1.msra.mxu0 0.0
        %2872 = vmatprep.subr.mxu0 0.0
        %2873 = vmatpush1.msra.mxu0 0.0
        %2874 = vmatprep.subr.mxu0 0.0
        %2875 = vmatpush1.msra.mxu0 0.0
        %2876 = vmatprep.subr.mxu0 0.0
        %2877 = vmatpush1.msra.mxu0 0.0
        %2878 = vmatprep.subr.mxu0 0.0
        %2879 = vmatpush1.msra.mxu0 0.0
        %2880 = vmatprep.subr.mxu0 0.0
        %2881 = vmatpush1.msra.mxu0 0.0
        %2882 = vmatprep.subr.mxu0 0.0
        %2883 = vmatpush1.msra.mxu0 0.0
        %2884 = vmatprep.subr.mxu0 0.0
        %2885 = vmatpush1.msra.mxu0 0.0
        %2886 = vmatprep.subr.mxu0 0.0
        %2887 = vmatpush1.msra.mxu0 0.0
        %2888 = vmatprep.subr.mxu0 0.0
        %2889 = vmatpush1.msra.mxu0 0.0
        %2890 = vmatprep.subr.mxu0 0.0
        %2891 = vmatpush1.msra.mxu0 0.0
        %2892 = vmatprep.mubr.f32.mxu0 0.0
        %2893 = vmatmul.mubr.f32.gmra.mrb[0].mxu0 %v866
        %v2894 = vpop.f32.mrb[0].mxu0
        %v2895 = vadd.f32 0.0, %v2894
        %v2896 = vpop.f32.mrb[0].mxu0
        %2897 = vdwg.mxu0
        %2898 = vmatprep.subr.mxu0 0.0
        %2899 = vmatpush1.msra.mxu0 %v836
        %2900 = vmatprep.subr.mxu0 0.0
        %2901 = vmatpush1.msra.mxu0 %v841
        %2902 = vmatprep.subr.mxu0 0.0
        %2903 = vmatpush1.msra.mxu0 0.0
        %2904 = vmatprep.subr.mxu0 0.0
        %2905 = vmatpush1.msra.mxu0 0.0
        %2906 = vmatprep.subr.mxu0 0.0
        %2907 = vmatpush1.msra.mxu0 0.0
        %2908 = vmatprep.subr.mxu0 0.0
        %2909 = vmatpush1.msra.mxu0 0.0
        %2910 = vmatprep.subr.mxu0 0.0
        %2911 = vmatpush1.msra.mxu0 0.0
        %2912 = vmatprep.subr.mxu0 0.0
        %2913 = vmatpush1.msra.mxu0 0.0
        %2914 = vmatprep.subr.mxu0 0.0
        %2915 = vmatpush1.msra.mxu0 0.0
        %2916 = vmatprep.subr.mxu0 0.0
        %2917 = vmatpush1.msra.mxu0 0.0
        %2918 = vmatprep.subr.mxu0 0.0
        %2919 = vmatpush1.msra.mxu0 0.0
        %2920 = vmatprep.subr.mxu0 0.0
        %2921 = vmatpush1.msra.mxu0 0.0
        %2922 = vmatprep.subr.mxu0 0.0
        %2923 = vmatpush1.msra.mxu0 0.0
        %2924 = vmatprep.subr.mxu0 0.0
        %2925 = vmatpush1.msra.mxu0 0.0
        %2926 = vmatprep.subr.mxu0 0.0
        %2927 = vmatpush1.msra.mxu0 0.0
        %2928 = vmatprep.subr.mxu0 0.0
        %2929 = vmatpush1.msra.mxu0 0.0
        %2930 = vmatprep.subr.mxu0 0.0
        %2931 = vmatpush1.msra.mxu0 0.0
        %2932 = vmatprep.subr.mxu0 0.0
        %2933 = vmatpush1.msra.mxu0 0.0
        %2934 = vmatprep.subr.mxu0 0.0
        %2935 = vmatpush1.msra.mxu0 0.0
        %2936 = vmatprep.subr.mxu0 0.0
        %2937 = vmatpush1.msra.mxu0 0.0
        %2938 = vmatprep.subr.mxu0 0.0
        %2939 = vmatpush1.msra.mxu0 0.0
        %2940 = vmatprep.subr.mxu0 0.0
        %2941 = vmatpush1.msra.mxu0 0.0
        %2942 = vmatprep.subr.mxu0 0.0
        %2943 = vmatpush1.msra.mxu0 0.0
        %2944 = vmatprep.subr.mxu0 0.0
        %2945 = vmatpush1.msra.mxu0 0.0
        %2946 = vmatprep.subr.mxu0 0.0
        %2947 = vmatpush1.msra.mxu0 0.0
        %2948 = vmatprep.subr.mxu0 0.0
        %2949 = vmatpush1.msra.mxu0 0.0
        %2950 = vmatprep.subr.mxu0 0.0
        %2951 = vmatpush1.msra.mxu0 0.0
        %2952 = vmatprep.subr.mxu0 0.0
        %2953 = vmatpush1.msra.mxu0 0.0
        %2954 = vmatprep.subr.mxu0 0.0
        %2955 = vmatpush1.msra.mxu0 0.0
        %2956 = vmatprep.subr.mxu0 0.0
        %2957 = vmatpush1.msra.mxu0 0.0
        %2958 = vmatprep.subr.mxu0 0.0
        %2959 = vmatpush1.msra.mxu0 0.0
        %2960 = vmatprep.subr.mxu0 0.0
        %2961 = vmatpush1.msra.mxu0 0.0
        %2962 = vmatprep.mubr.f32.mxu0 0.0
        %2963 = vmatmul.mubr.f32.gmra.mrb[0].mxu0 %v866
        %v2964 = vpop.f32.mrb[0].mxu0
        %v2965 = vadd.f32 0.0, %v2964
        %v2966 = vpop.f32.mrb[0].mxu0
        %2967 = vdwg.mxu0
        %2968 = vmatprep.subr.mxu0 0.0
        %2969 = vmatpush1.msra.mxu0 %v846
        %2970 = vmatprep.subr.mxu0 0.0
        %2971 = vmatpush1.msra.mxu0 %v851
        %2972 = vmatprep.subr.mxu0 0.0
        %2973 = vmatpush1.msra.mxu0 0.0
        %2974 = vmatprep.subr.mxu0 0.0
        %2975 = vmatpush1.msra.mxu0 0.0
        %2976 = vmatprep.subr.mxu0 0.0
        %2977 = vmatpush1.msra.mxu0 0.0
        %2978 = vmatprep.subr.mxu0 0.0
        %2979 = vmatpush1.msra.mxu0 0.0
        %2980 = vmatprep.subr.mxu0 0.0
        %2981 = vmatpush1.msra.mxu0 0.0
        %2982 = vmatprep.subr.mxu0 0.0
        %2983 = vmatpush1.msra.mxu0 0.0
        %2984 = vmatprep.subr.mxu0 0.0
        %2985 = vmatpush1.msra.mxu0 0.0
        %2986 = vmatprep.subr.mxu0 0.0
        %2987 = vmatpush1.msra.mxu0 0.0
        %2988 = vmatprep.subr.mxu0 0.0
        %2989 = vmatpush1.msra.mxu0 0.0
        %2990 = vmatprep.subr.mxu0 0.0
        %2991 = vmatpush1.msra.mxu0 0.0
        %2992 = vmatprep.subr.mxu0 0.0
        %2993 = vmatpush1.msra.mxu0 0.0
        %2994 = vmatprep.subr.mxu0 0.0
        %2995 = vmatpush1.msra.mxu0 0.0
        %2996 = vmatprep.subr.mxu0 0.0
        %2997 = vmatpush1.msra.mxu0 0.0
        %2998 = vmatprep.subr.mxu0 0.0
        %2999 = vmatpush1.msra.mxu0 0.0
        %3000 = vmatprep.subr.mxu0 0.0
        %3001 = vmatpush1.msra.mxu0 0.0
        %3002 = vmatprep.subr.mxu0 0.0
        %3003 = vmatpush1.msra.mxu0 0.0
        %3004 = vmatprep.subr.mxu0 0.0
        %3005 = vmatpush1.msra.mxu0 0.0
        %3006 = vmatprep.subr.mxu0 0.0
        %3007 = vmatpush1.msra.mxu0 0.0
        %3008 = vmatprep.subr.mxu0 0.0
        %3009 = vmatpush1.msra.mxu0 0.0
        %3010 = vmatprep.subr.mxu0 0.0
        %3011 = vmatpush1.msra.mxu0 0.0
        %3012 = vmatprep.subr.mxu0 0.0
        %3013 = vmatpush1.msra.mxu0 0.0
        %3014 = vmatprep.subr.mxu0 0.0
        %3015 = vmatpush1.msra.mxu0 0.0
        %3016 = vmatprep.subr.mxu0 0.0
        %3017 = vmatpush1.msra.mxu0 0.0
        %3018 = vmatprep.subr.mxu0 0.0
        %3019 = vmatpush1.msra.mxu0 0.0
        %3020 = vmatprep.subr.mxu0 0.0
        %3021 = vmatpush1.msra.mxu0 0.0
        %3022 = vmatprep.subr.mxu0 0.0
        %3023 = vmatpush1.msra.mxu0 0.0
        %3024 = vmatprep.subr.mxu0 0.0
        %3025 = vmatpush1.msra.mxu0 0.0
        %3026 = vmatprep.subr.mxu0 0.0
        %3027 = vmatpush1.msra.mxu0 0.0
        %3028 = vmatprep.subr.mxu0 0.0
        %3029 = vmatpush1.msra.mxu0 0.0
        %3030 = vmatprep.subr.mxu0 0.0
        %3031 = vmatpush1.msra.mxu0 0.0
        %3032 = vmatprep.mubr.f32.mxu0 0.0
        %3033 = vmatmul.mubr.f32.gmra.mrb[0].mxu0 %v866
        %v3034 = vpop.f32.mrb[0].mxu0
        %v3035 = vadd.f32 0.0, %v3034
        %v3036 = vpop.f32.mrb[0].mxu0
        %3037 = vdwg.mxu0
        %3038 = vmatprep.subr.mxu0 0.0
        %3039 = vmatpush1.msra.mxu0 %v856
        %3040 = vmatprep.subr.mxu0 0.0
        %3041 = vmatpush1.msra.mxu0 %v861
        %3042 = vmatprep.subr.mxu0 0.0
        %3043 = vmatpush1.msra.mxu0 0.0
        %3044 = vmatprep.subr.mxu0 0.0
        %3045 = vmatpush1.msra.mxu0 0.0
        %3046 = vmatprep.subr.mxu0 0.0
        %3047 = vmatpush1.msra.mxu0 0.0
        %3048 = vmatprep.subr.mxu0 0.0
        %3049 = vmatpush1.msra.mxu0 0.0
        %3050 = vmatprep.subr.mxu0 0.0
        %3051 = vmatpush1.msra.mxu0 0.0
        %3052 = vmatprep.subr.mxu0 0.0
        %3053 = vmatpush1.msra.mxu0 0.0
        %3054 = vmatprep.subr.mxu0 0.0
        %3055 = vmatpush1.msra.mxu0 0.0
        %3056 = vmatprep.subr.mxu0 0.0
        %3057 = vmatpush1.msra.mxu0 0.0
        %3058 = vmatprep.subr.mxu0 0.0
        %3059 = vmatpush1.msra.mxu0 0.0
        %3060 = vmatprep.subr.mxu0 0.0
        %3061 = vmatpush1.msra.mxu0 0.0
        %3062 = vmatprep.subr.mxu0 0.0
        %3063 = vmatpush1.msra.mxu0 0.0
        %3064 = vmatprep.subr.mxu0 0.0
        %3065 = vmatpush1.msra.mxu0 0.0
        %3066 = vmatprep.subr.mxu0 0.0
        %3067 = vmatpush1.msra.mxu0 0.0
        %3068 = vmatprep.subr.mxu0 0.0
        %3069 = vmatpush1.msra.mxu0 0.0
        %3070 = vmatprep.subr.mxu0 0.0
        %3071 = vmatpush1.msra.mxu0 0.0
        %3072 = vmatprep.subr.mxu0 0.0
        %3073 = vmatpush1.msra.mxu0 0.0
        %3074 = vmatprep.subr.mxu0 0.0
        %3075 = vmatpush1.msra.mxu0 0.0
        %3076 = vmatprep.subr.mxu0 0.0
        %3077 = vmatpush1.msra.mxu0 0.0
        %3078 = vmatprep.subr.mxu0 0.0
        %3079 = vmatpush1.msra.mxu0 0.0
        %3080 = vmatprep.subr.mxu0 0.0
        %3081 = vmatpush1.msra.mxu0 0.0
        %3082 = vmatprep.subr.mxu0 0.0
        %3083 = vmatpush1.msra.mxu0 0.0
        %3084 = vmatprep.subr.mxu0 0.0
        %3085 = vmatpush1.msra.mxu0 0.0
        %3086 = vmatprep.subr.mxu0 0.0
        %3087 = vmatpush1.msra.mxu0 0.0
        %3088 = vmatprep.subr.mxu0 0.0
        %3089 = vmatpush1.msra.mxu0 0.0
        %3090 = vmatprep.subr.mxu0 0.0
        %3091 = vmatpush1.msra.mxu0 0.0
        %3092 = vmatprep.subr.mxu0 0.0
        %3093 = vmatpush1.msra.mxu0 0.0
        %3094 = vmatprep.subr.mxu0 0.0
        %3095 = vmatpush1.msra.mxu0 0.0
        %3096 = vmatprep.subr.mxu0 0.0
        %3097 = vmatpush1.msra.mxu0 0.0
        %3098 = vmatprep.subr.mxu0 0.0
        %3099 = vmatpush1.msra.mxu0 0.0
        %3100 = vmatprep.subr.mxu0 0.0
        %3101 = vmatpush1.msra.mxu0 0.0
        %3102 = vmatprep.mubr.f32.mxu0 0.0
        %3103 = vmatmul.mubr.f32.gmra.mrb[0].mxu0 %v866
        %v3104 = vpop.f32.mrb[0].mxu0
        %v3105 = vadd.f32 0.0, %v3104
        %v3106 = vpop.f32.mrb[0].mxu0
        %3107 = vdwg.mxu0
        %vm3108 = vcmask 9216
        %3109 = vst.msk [vmem:[%s218] sm:$0x3] %vm3108, %v935
        %3110 = vst.msk [vmem:[%s218 + $0x2] sm:$0x3] %vm3108, %v1005
        %3111 = vst.msk [vmem:[%s218 + $0x4] sm:$0x3] %vm3108, %v1075
        %3112 = vst.msk [vmem:[%s218 + $0x6] sm:$0x3] %vm3108, %v1145
        %3113 = vst.msk [vmem:[%s218 + $0x8] sm:$0x3] %vm3108, %v1215
        %3114 = vst.msk [vmem:[%s218 + $0xa] sm:$0x3] %vm3108, %v1285
        %3115 = vst.msk [vmem:[%s218 + $0xc] sm:$0x3] %vm3108, %v1355
        %3116 = vst.msk [vmem:[%s218 + $0xe] sm:$0x3] %vm3108, %v1425
        %3117 = vst.msk [vmem:[%s218 + $0x10] sm:$0x3] %vm3108, %v1495
        %3118 = vst.msk [vmem:[%s218 + $0x12] sm:$0x3] %vm3108, %v1565
        %3119 = vst.msk [vmem:[%s218 + $0x14] sm:$0x3] %vm3108, %v1635
        %3120 = vst.msk [vmem:[%s218 + $0x16] sm:$0x3] %vm3108, %v1705
        %3121 = vst.msk [vmem:[%s218 + $0x18] sm:$0x3] %vm3108, %v1775
        %3122 = vst.msk [vmem:[%s218 + $0x1a] sm:$0x3] %vm3108, %v1845
        %3123 = vst.msk [vmem:[%s218 + $0x1c] sm:$0x3] %vm3108, %v1915
        %3124 = vst.msk [vmem:[%s218 + $0x1e] sm:$0x3] %vm3108, %v1985
        %3125 = vst.msk [vmem:[%s218 + $0x20] sm:$0x3] %vm3108, %v2055
        %3126 = vst.msk [vmem:[%s218 + $0x22] sm:$0x3] %vm3108, %v2125
        %3127 = vst.msk [vmem:[%s218 + $0x24] sm:$0x3] %vm3108, %v2195
        %3128 = vst.msk [vmem:[%s218 + $0x26] sm:$0x3] %vm3108, %v2265
        %3129 = vst.msk [vmem:[%s218 + $0x28] sm:$0x3] %vm3108, %v2335
        %3130 = vst.msk [vmem:[%s218 + $0x2a] sm:$0x3] %vm3108, %v2405
        %3131 = vst.msk [vmem:[%s218 + $0x2c] sm:$0x3] %vm3108, %v2475
        %3132 = vst.msk [vmem:[%s218 + $0x2e] sm:$0x3] %vm3108, %v2545
        %3133 = vst.msk [vmem:[%s218 + $0x30] sm:$0x3] %vm3108, %v2615
        %3134 = vst.msk [vmem:[%s218 + $0x32] sm:$0x3] %vm3108, %v2685
        %3135 = vst.msk [vmem:[%s218 + $0x34] sm:$0x3] %vm3108, %v2755
        %3136 = vst.msk [vmem:[%s218 + $0x36] sm:$0x3] %vm3108, %v2825
        %3137 = vst.msk [vmem:[%s218 + $0x38] sm:$0x3] %vm3108, %v2895
        %3138 = vst.msk [vmem:[%s218 + $0x3a] sm:$0x3] %vm3108, %v2965
        %3139 = vst.msk [vmem:[%s218 + $0x3c] sm:$0x3] %vm3108, %v3035
        %3140 = vst.msk [vmem:[%s218 + $0x3e] sm:$0x3] %vm3108, %v3105
        %s3141 = smul.u32 32, %s22
        %p3142 = scmp.lt.s32.totalorder %s21, 1
        %s3143 = scalar_select %p3142, %s21, 1
        %p3144 = scmp.lt.s32.totalorder %s3141, 31
        %s3145 = scalar_select %p3144, %s3141, 31
        %s3146 = smul.addr %s3143, 32
        %s3147 = sadd.s32 %s3145, %s3146
        %s3148 = smul.addr %s3147, 2
        %s3149 = scalar_lea.vmem %s3, %s3148
        // Predicated region
        $region37: #{ent_forward.2} parent=31 // pred_check
          %p3150 = pneg %p119
        $region38: #{ent_forward.2} parent=31 // pred_check_branch
          %3152 = sbr.rel (%p3150) target = $region40
        $region39: #{ent_forward.2} parent=31 // pred_region
          %s3153 = smul.u32 32, %s22
        $region40: #{ent_forward.2} parent=31 // pred_fallthru
          _
      $region32: #{ent_forward.2} parent=5 // pred_fallthru
        _
      %p3154 = scmp.le.s32.totalorder 2, %s12
      // Predicated region
      $region41: #{ent_forward.2} parent=5 // pred_check
        %p3155 = pneg %p3154
      $region42: #{ent_forward.2} parent=5 // pred_check_branch
        %3157 = sbr.rel (%p3155) target = $region44
      $region43: #{ent_forward.2} parent=5 // pred_region
        %s3158 = ssub.s32 %s12, 2
        // Predicated region
        $region45: #{ent_forward.2} parent=43 // pred_check
          %p3159 = pneg %p125
        $region46: #{ent_forward.2} parent=43 // pred_check_branch
          %3161 = sbr.rel (%p3159) target = $region48
        $region47: #{ent_forward.2} parent=43 // pred_region
          %s3162 = smul.u32 32, %s24
          %p3163 = scmp.lt.s32.totalorder %s23, 1
          %s3164 = scalar_select %p3163, %s23, 1
          %p3165 = scmp.lt.s32.totalorder %s3162, 31
          %s3166 = scalar_select %p3165, %s3162, 31
          %s3167 = smul.addr %s3164, 32
          %s3168 = sadd.s32 %s3166, %s3167
          %s3169 = smul.addr %s3168, 2
          %s3170 = scalar_lea.vmem %s3, %s3169
        $region48: #{ent_forward.2} parent=43 // pred_fallthru
          _
      $region44: #{ent_forward.2} parent=5 // pred_fallthru
        _
    $region6: #{ent_forward.2} parent=1 // loop_footer
      %s16 = sadd.s32 1, %s12
    $region7: #{ent_forward.2} parent=1 // loop_footer_branch
      %11 = sbr.rel target = $region3
    $region8: #{ent_forward.2} parent=1 // loop_exit
      _
    %3171 = vsyncpa [#allocation3], 1
    %s3172 = scalar_lea.sflag [#allocation3], 1
    %3173 = vsyncpa %s3172, 1

</llo_original>
